<compile_context>
chip_gen: v7x
topology: tpu7x:2x2x1
jax: 0.10.0
libtpu: 0.0.40
codegen_flags: <defaults>
</compile_context>

<pallas_src>
import jax
import jax.numpy as jnp
from jax import lax
from jax.experimental import pallas as pl
from jax.experimental.pallas import tpu as pltpu

EPS = 1e-5
LANE = 128


def _ceil_to(a, m):
    return (a + m - 1) // m * m


# ----------------------------- kernels ---------------------------------------
def _make_conv_kernel(H, W, bn_relu_in, project):
    """3x3 conv as a single im2col MXU matmul + per-image BN statistics.

    bn_relu_in: apply folded BN (scale/shift) + ReLU to the input first.
    project:    also compute the 1x1 projection shortcut + its statistics.
    """

    def kernel(xin_ref, w_ref, p_ref, *rest):
        if project:
            wsc_ref, out_ref, st_ref, sc_ref, stsc_ref, xpad = rest
        else:
            out_ref, st_ref, xpad = rest

        cin = xpad.shape[-1]
        cout = out_ref.shape[-1]

        # Zero only the 1-px halo (interior is fully overwritten below).
        # No program_id dependence -> safe when the grid axis is 'parallel'.
        zrow = jnp.zeros((1, W + 2, cin), xpad.dtype)
        zcol = jnp.zeros((H + 2, 1, cin), xpad.dtype)
        xpad[0:1, :, :] = zrow
        xpad[H + 1:H + 2, :, :] = zrow
        xpad[:, 0:1, :] = zcol
        xpad[:, W + 1:W + 2, :] = zcol

        h = xin_ref[0].astype(jnp.float32)                    # (H, W, cin)
        if bn_relu_in:
            # Folded BN fused with ReLU: one FMA + max pass (p rows 1/2).
            h = jnp.maximum(h * p_ref[1:2, :] + p_ref[2:3, :], 0.0)
        xpad[1:1 + H, 1:1 + W, :] = h

        # im2col: 9 shifted taps concatenated along lanes -> one MXU matmul.
        taps = [xpad[dy:dy + H, dx:dx + W, :]
                for dy in range(3) for dx in range(3)]
        patches = (jnp.concatenate(taps, axis=-1)
                   .reshape(H * W, 9 * cin).astype(jnp.bfloat16))
        acc = jnp.dot(patches, w_ref[...], preferred_element_type=jnp.float32)
        acc = acc + p_ref[0:1, :]                             # conv bias (f32)

        zpad = jnp.zeros((6, cout), jnp.float32)
        st_ref[0] = jnp.concatenate(
            [jnp.sum(acc, axis=0, keepdims=True),
             jnp.sum(acc * acc, axis=0, keepdims=True), zpad], axis=0)
        out_ref[0] = acc.reshape(H, W, cout).astype(out_ref.dtype)

        if project:
            # 1x1 projection shortcut: reuse the already-built center tap (== x).
            center = taps[4].reshape(H * W, cin).astype(jnp.bfloat16)
            sc = jnp.dot(center, wsc_ref[...],
                         preferred_element_type=jnp.float32)
            stsc_ref[0] = jnp.concatenate(
                [jnp.sum(sc, axis=0, keepdims=True),
                 jnp.sum(sc * sc, axis=0, keepdims=True), zpad], axis=0)
            sc_ref[0] = sc.reshape(H, W, cout)

    return kernel


def _finalize_kernel(y_ref, r_ref, p_ref, out_ref):
    # out = relu( BN2(y) + BN_sc(residual) ), both BNs pre-folded to scale/shift.
    y = y_ref[0] * p_ref[0:1, :] + p_ref[1:2, :]
    r = r_ref[0] * p_ref[2:3, :] + p_ref[3:4, :]
    out_ref[0] = jnp.maximum(y + r, 0.0)


# ------------------------------- wrapper --------------------------------------
def residual_block(x_nchw, params, project):
    N, Cin, H, W = x_nchw.shape
    Cout = params["w1"].shape[-1]
    Cinp = _ceil_to(Cin, LANE)
    Coutp = _ceil_to(Cout, LANE)
    f32, bf16 = jnp.float32, jnp.bfloat16

    # One layout op: NCHW -> NHWC with channels zero-padded to a lane multiple.
    x = jnp.transpose(x_nchw.astype(f32), (0, 2, 3, 1))
    x = jnp.pad(x, ((0, 0), (0, 0), (0, 0), (0, Cinp - Cin)))

    # Weights packed for im2col (rows = ky, kx, cin), bf16 MXU operands.
    w1 = jnp.pad(params["w1"],
                 ((0, 0), (0, 0), (0, Cinp - Cin), (0, Coutp - Cout)))
    w1 = w1.reshape(9 * Cinp, Coutp).astype(bf16)
    w2 = jnp.pad(params["w2"],
                 ((0, 0), (0, 0), (0, Coutp - Cout), (0, Coutp - Cout)))
    w2 = w2.reshape(9 * Coutp, Coutp).astype(bf16)

    def cpad(v):                       # (1, Cout) -> (Coutp,) f32
        return jnp.pad(v.reshape(-1).astype(f32), (0, Coutp - Cout))

    def pslab(rows):                   # consolidate per-channel vectors: (8, Coutp)
        slab = jnp.zeros((8, Coutp), f32)
        for r, v in enumerate(rows):
            slab = slab.at[r].set(v)
        return slab

    count = N * H * W

    def bn_fold(stats, gamma, beta):
        s = jnp.sum(stats[:, 0, :], axis=0)
        ss = jnp.sum(stats[:, 1, :], axis=0)
        mean = s / count
        var = jnp.maximum(ss / count - mean * mean, 0.0)   # biased (training mode)
        scale = gamma * lax.rsqrt(var + EPS)
        return scale, beta - mean * scale

    grid = (N,)
    cparams = pltpu.CompilerParams(dimension_semantics=("parallel",))

    def img_spec(c):
        return pl.BlockSpec((1, H, W, c), lambda i: (i, 0, 0, 0))

    def full_spec(shape):
        return pl.BlockSpec(shape, lambda i, nd=len(shape): (0,) * nd)

    stat_spec = pl.BlockSpec((1, 8, Coutp), lambda i: (i, 0, 0))
    stat_shape = jax.ShapeDtypeStruct((N, 8, Coutp), f32)

    # ---------------- pass 1: conv1 (+ projection conv) + batch stats ---------
    p1 = pslab([cpad(params["cb1"])])
    in1 = [x, w1, p1]
    in1_specs = [img_spec(Cinp), full_spec(w1.shape), full_spec(p1.shape)]
    out1_shape = [jax.ShapeDtypeStruct((N, H, W, Coutp), bf16), stat_shape]
    out1_specs = [img_spec(Coutp), stat_spec]
    if project:
        wsc = jnp.pad(params["wsc"],
                      ((0, Cinp - Cin), (0, Coutp - Cout))).astype(bf16)
        in1.append(wsc)
        in1_specs.append(full_spec(wsc.shape))
        out1_shape += [jax.ShapeDtypeStruct((N, H, W, Coutp), f32), stat_shape]
        out1_specs += [img_spec(Coutp), stat_spec]

    res1 = pl.pallas_call(
        _make_conv_kernel(H, W, bn_relu_in=False, project=project),
        grid=grid, in_specs=in1_specs, out_specs=out1_specs,
        out_shape=out1_shape,
        scratch_shapes=[pltpu.VMEM((H + 2, W + 2, Cinp), f32)],
        compiler_params=cparams,
    )(*in1)
    if project:
        h1, st1, sc_raw, st_sc = res1
    else:
        h1, st1 = res1

    scale1, shift1 = bn_fold(st1, cpad(params["g1"]), cpad(params["be1"]))

    # ---------------- pass 2: fused BN1+ReLU, conv2, batch stats --------------
    p2 = pslab([cpad(params["cb2"]), scale1, shift1])
    y2, st2 = pl.pallas_call(
        _make_conv_kernel(H, W, bn_relu_in=True, project=False),
        grid=grid,
        in_specs=[img_spec(Coutp), full_spec(w2.shape), full_spec(p2.shape)],
        out_specs=[img_spec(Coutp), stat_spec],
        out_shape=[jax.ShapeDtypeStruct((N, H, W, Coutp), f32), stat_shape],
        scratch_shapes=[pltpu.VMEM((H + 2, W + 2, Coutp), f32)],
        compiler_params=cparams,
    )(h1, w2, p2)

    scale2, shift2 = bn_fold(st2, cpad(params["g2"]), cpad(params["be2"]))
    if project:
        scale_sc, shift_sc = bn_fold(st_sc, cpad(params["gsc"]),
                                     cpad(params["besc"]))
        resid = sc_raw
    else:
        scale_sc = jnp.ones((Coutp,), f32)   # identity shortcut
        shift_sc = jnp.zeros((Coutp,), f32)
        resid = x                            # Cin == Cout here, so Cinp == Coutp

    # ---------------- pass 3: BN2 + shortcut + add + ReLU ---------------------
    p3 = pslab([scale2, shift2, scale_sc, shift_sc])
    out = pl.pallas_call(
        _finalize_kernel,
        grid=grid,
        in_specs=[img_spec(Coutp), img_spec(Coutp), full_spec(p3.shape)],
        out_specs=img_spec(Coutp),
        out_shape=jax.ShapeDtypeStruct((N, H, W, Coutp), f32),
        compiler_params=cparams,
    )(y2, resid, p3)

    # Drop channel padding, back to NCHW.
    return jnp.transpose(out[:, :, :, :Cout], (0, 3, 1, 2))


# -------------------------- deterministic params ------------------------------
def init_params(key, cin, cout):
    ks = jax.random.split(key, 11)
    p = {
        "w1":  jax.random.normal(ks[0], (3, 3, cin, cout), jnp.float32)
               * (2.0 / (cin * 9)) ** 0.5,
        "cb1": 0.05 * jax.random.normal(ks[1], (1, cout), jnp.float32),
        "g1":  1.0 + 0.1 * jax.random.normal(ks[2], (1, cout), jnp.float32),
        "be1": 0.1 * jax.random.normal(ks[3], (1, cout), jnp.float32),
        "w2":  jax.random.normal(ks[4], (3, 3, cout, cout), jnp.float32)
               * (2.0 / (cout * 9)) ** 0.5,
        "cb2": 0.05 * jax.random.normal(ks[5], (1, cout), jnp.float32),
        "g2":  1.0 + 0.1 * jax.random.normal(ks[6], (1, cout), jnp.float32),
        "be2": 0.1 * jax.random.normal(ks[7], (1, cout), jnp.float32),
    }
    if cin != cout:
        p["wsc"] = jax.random.normal(ks[8], (cin, cout), jnp.float32) \
                   * (2.0 / cin) ** 0.5
        p["gsc"] = 1.0 + 0.1 * jax.random.normal(ks[9], (1, cout), jnp.float32)
        p["besc"] = 0.1 * jax.random.normal(ks[10], (1, cout), jnp.float32)
    return p


# ------------------------- pure-JAX reference (check) -------------------------
def reference(x_nchw, params, project):
    x = x_nchw.astype(jnp.float32)

    def conv(v, w_hwio, bias, pad):
        y = lax.conv_general_dilated(
            v, w_hwio, (1, 1), ((pad, pad), (pad, pad)),
            dimension_numbers=("NCHW", "HWIO", "NCHW"),
            precision=lax.Precision.HIGHEST)
        if bias is not None:
            y = y + bias.reshape(1, -1, 1, 1)
        return y

    def bn(v, gamma, beta):
        mean = jnp.mean(v, axis=(0, 2, 3), keepdims=True)
        var = jnp.mean((v - mean) ** 2, axis=(0, 2, 3), keepdims=True)
        return (v - mean) * lax.rsqrt(var + EPS) * gamma.reshape(1, -1, 1, 1) \
               + beta.reshape(1, -1, 1, 1)

    h = jax.nn.relu(bn(conv(x, params["w1"], params["cb1"], 1),
                       params["g1"], params["be1"]))
    y = bn(conv(h, params["w2"], params["cb2"], 1),
           params["g2"], params["be2"])
    if project:
        sc = bn(conv(x, params["wsc"][None, None], None, 0),
                params["gsc"], params["besc"])
    else:
        sc = x
    return jax.nn.relu(y + sc)


# ----------------------------------- main -------------------------------------
if __name__ == "__main__":
    N, Cin, H, W, Cout = 2, 4, 16, 16, 8     # Cin != Cout -> projection shortcut

    key = jax.random.PRNGKey(0)
    kx, kp = jax.random.split(key)
    x = jax.random.normal(kx, (N, Cin, H, W), jnp.float32)
    params = init_params(kp, Cin, Cout)

    project = (Cin != Cout)
    out = residual_block(x, params, project)
    out = jax.block_until_ready(out)
    assert out.shape == (N, Cout, H, W)

    ref = reference(x, params, project)
    # Kernel uses bf16 MXU operands / bf16 intermediate (f32 accumulation),
    # reference is f32 HIGHEST -> allow a bf16-level tolerance.
    if not bool(jnp.allclose(out, ref, atol=5e-2, rtol=5e-2)):
        raise AssertionError(
            f"mismatch vs reference, max abs err = {jnp.max(jnp.abs(out - ref))}")

    print("KERNEL_OK")
</pallas_src>

<mosaic_0001>
module attributes {stable_mosaic.version = 11 : i64} {
  func.func @kernel(%arg0: i32, %arg1: memref<1x16x16x128xf32, #tpu.memory_space<vmem>>, %arg2: memref<1152x128xbf16, #tpu.memory_space<vmem>>, %arg3: memref<8x128xf32, #tpu.memory_space<vmem>>, %arg4: memref<128x128xbf16, #tpu.memory_space<vmem>>, %arg5: memref<1x16x16x128xbf16, #tpu.memory_space<vmem>>, %arg6: memref<1x8x128xf32, #tpu.memory_space<vmem>>, %arg7: memref<1x16x16x128xf32, #tpu.memory_space<vmem>>, %arg8: memref<1x8x128xf32, #tpu.memory_space<vmem>>, %arg9: memref<18x18x128xf32, #tpu.memory_space<vmem>>) attributes {dimension_semantics = [#tpu.dimension_semantics<parallel>], iteration_bounds = array<i64: 2>, scalar_prefetch = 0 : i64, scratch_operands = 1 : i64, tpu.core_type = #tpu.core_type<tc>, window_params = [{transform_indices = @transform_0, window_bounds = array<i64: 1, 16, 16, 128>}, {pipeline_mode = #tpu.pipeline_mode<synchronous>, transform_indices = @transform_1, window_bounds = array<i64: 1152, 128>}, {pipeline_mode = #tpu.pipeline_mode<synchronous>, transform_indices = @transform_2, window_bounds = array<i64: 8, 128>}, {pipeline_mode = #tpu.pipeline_mode<synchronous>, transform_indices = @transform_3, window_bounds = array<i64: 128, 128>}, {transform_indices = @transform_4, window_bounds = array<i64: 1, 16, 16, 128>}, {transform_indices = @transform_5, window_bounds = array<i64: 1, 8, 128>}, {transform_indices = @transform_6, window_bounds = array<i64: 1, 16, 16, 128>}, {transform_indices = @transform_7, window_bounds = array<i64: 1, 8, 128>}]} {
    %cst = arith.constant 0.000000e+00 : f32
    %0 = vector.broadcast %cst : f32 to vector<1x18x128xf32>
    %cst_0 = arith.constant 0.000000e+00 : f32
    %1 = vector.broadcast %cst_0 : f32 to vector<18x1x128xf32>
    %c0 = arith.constant 0 : index
    %c0_1 = arith.constant 0 : index
    %c0_2 = arith.constant 0 : index
    %2 = vector.load %arg9[%c0, %c0_1, %c0_2] : memref<18x18x128xf32, #tpu.memory_space<vmem>>, vector<1x18x128xf32>
    tpu.vector_store %arg9[%c0, %c0_1, %c0_2], %0 {strides = array<i32>} : memref<18x18x128xf32, #tpu.memory_space<vmem>>, vector<1x18x128xf32>,
    %c17 = arith.constant 17 : index
    %c0_3 = arith.constant 0 : index
    %c0_4 = arith.constant 0 : index
    %3 = vector.load %arg9[%c17, %c0_3, %c0_4] : memref<18x18x128xf32, #tpu.memory_space<vmem>>, vector<1x18x128xf32>
    tpu.vector_store %arg9[%c17, %c0_3, %c0_4], %0 {strides = array<i32>} : memref<18x18x128xf32, #tpu.memory_space<vmem>>, vector<1x18x128xf32>,
    %c0_5 = arith.constant 0 : index
    %c0_6 = arith.constant 0 : index
    %c0_7 = arith.constant 0 : index
    %4 = vector.load %arg9[%c0_5, %c0_6, %c0_7] : memref<18x18x128xf32, #tpu.memory_space<vmem>>, vector<18x1x128xf32>
    tpu.vector_store %arg9[%c0_5, %c0_6, %c0_7], %1 {strides = array<i32>} : memref<18x18x128xf32, #tpu.memory_space<vmem>>, vector<18x1x128xf32>,
    %c0_8 = arith.constant 0 : index
    %c17_9 = arith.constant 17 : index
    %c0_10 = arith.constant 0 : index
    %5 = vector.load %arg9[%c0_8, %c17_9, %c0_10] : memref<18x18x128xf32, #tpu.memory_space<vmem>>, vector<18x1x128xf32>
    tpu.vector_store %arg9[%c0_8, %c17_9, %c0_10], %1 {strides = array<i32>} : memref<18x18x128xf32, #tpu.memory_space<vmem>>, vector<18x1x128xf32>,
    %c0_11 = arith.constant 0 : index
    %c0_12 = arith.constant 0 : index
    %c0_13 = arith.constant 0 : index
    %c0_14 = arith.constant 0 : index
    %6 = vector.load %arg1[%c0_11, %c0_12, %c0_13, %c0_14] : memref<1x16x16x128xf32, #tpu.memory_space<vmem>>, vector<1x16x16x128xf32>
    %7 = vector.shape_cast %6 : vector<1x16x16x128xf32> to vector<16x16x128xf32>
    %c1 = arith.constant 1 : index
    %c1_15 = arith.constant 1 : index
    %c0_16 = arith.constant 0 : index
    %8 = vector.load %arg9[%c1, %c1_15, %c0_16] : memref<18x18x128xf32, #tpu.memory_space<vmem>>, vector<16x16x128xf32>
    tpu.vector_store %arg9[%c1, %c1_15, %c0_16], %7 {strides = array<i32>} : memref<18x18x128xf32, #tpu.memory_space<vmem>>, vector<16x16x128xf32>,
    %c0_17 = arith.constant 0 : index
    %c0_18 = arith.constant 0 : index
    %c0_19 = arith.constant 0 : index
    %9 = vector.load %arg9[%c0_17, %c0_18, %c0_19] : memref<18x18x128xf32, #tpu.memory_space<vmem>>, vector<16x16x128xf32>
    %c0_20 = arith.constant 0 : index
    %c1_21 = arith.constant 1 : index
    %c0_22 = arith.constant 0 : index
    %10 = vector.load %arg9[%c0_20, %c1_21, %c0_22] : memref<18x18x128xf32, #tpu.memory_space<vmem>>, vector<16x16x128xf32>
    %c0_23 = arith.constant 0 : index
    %c2 = arith.constant 2 : index
    %c0_24 = arith.constant 0 : index
    %11 = vector.load %arg9[%c0_23, %c2, %c0_24] : memref<18x18x128xf32, #tpu.memory_space<vmem>>, vector<16x16x128xf32>
    %c1_25 = arith.constant 1 : index
    %c0_26 = arith.constant 0 : index
    %c0_27 = arith.constant 0 : index
    %12 = vector.load %arg9[%c1_25, %c0_26, %c0_27] : memref<18x18x128xf32, #tpu.memory_space<vmem>>, vector<16x16x128xf32>
    %c1_28 = arith.constant 1 : index
    %c1_29 = arith.constant 1 : index
    %c0_30 = arith.constant 0 : index
    %13 = vector.load %arg9[%c1_28, %c1_29, %c0_30] : memref<18x18x128xf32, #tpu.memory_space<vmem>>, vector<16x16x128xf32>
    %c1_31 = arith.constant 1 : index
    %c2_32 = arith.constant 2 : index
    %c0_33 = arith.constant 0 : index
    %14 = vector.load %arg9[%c1_31, %c2_32, %c0_33] : memref<18x18x128xf32, #tpu.memory_space<vmem>>, vector<16x16x128xf32>
    %c2_34 = arith.constant 2 : index
    %c0_35 = arith.constant 0 : index
    %c0_36 = arith.constant 0 : index
    %15 = vector.load %arg9[%c2_34, %c0_35, %c0_36] : memref<18x18x128xf32, #tpu.memory_space<vmem>>, vector<16x16x128xf32>
    %c2_37 = arith.constant 2 : index
    %c1_38 = arith.constant 1 : index
    %c0_39 = arith.constant 0 : index
    %16 = vector.load %arg9[%c2_37, %c1_38, %c0_39] : memref<18x18x128xf32, #tpu.memory_space<vmem>>, vector<16x16x128xf32>
    %c2_40 = arith.constant 2 : index
    %c2_41 = arith.constant 2 : index
    %c0_42 = arith.constant 0 : index
    %17 = vector.load %arg9[%c2_40, %c2_41, %c0_42] : memref<18x18x128xf32, #tpu.memory_space<vmem>>, vector<16x16x128xf32>
    %18 = tpu.concatenate %9, %10, %11, %12, %13, %14, %15, %16, %17 in 2 : vector<16x16x128xf32>, vector<16x16x128xf32>, vector<16x16x128xf32>, vector<16x16x128xf32>, vector<16x16x128xf32>, vector<16x16x128xf32>, vector<16x16x128xf32>, vector<16x16x128xf32>, vector<16x16x128xf32> -> vector<16x16x1152xf32>
    %19 = vector.shape_cast %18 : vector<16x16x1152xf32> to vector<256x1152xf32>
    %20 = arith.truncf %19 : vector<256x1152xf32> to vector<256x1152xbf16>
    %c0_43 = arith.constant 0 : index
    %c0_44 = arith.constant 0 : index
    %21 = vector.load %arg2[%c0_43, %c0_44] : memref<1152x128xbf16, #tpu.memory_space<vmem>>, vector<1152x128xbf16>
    %cst_45 = arith.constant dense<0.000000e+00> : vector<256x128xf32>
    %22 = tpu.matmul %20, %21, %cst_45 {dimension_numbers = #tpu.dot_dimension_numbers<[1], [0], [0], [1], [0, 0, 1, 1], [], []>} : vector<256x1152xbf16>, vector<1152x128xbf16>, vector<256x128xf32> -> vector<256x128xf32>
    %c0_46 = arith.constant 0 : index
    %c0_47 = arith.constant 0 : index
    %23 = vector.load %arg3[%c0_46, %c0_47] : memref<8x128xf32, #tpu.memory_space<vmem>>, vector<1x128xf32>
    %24 = vector.broadcast %23 : vector<1x128xf32> to vector<256x128xf32>
    %25 = arith.addf %22, %24 : vector<256x128xf32>
    %cst_48 = arith.constant 0.000000e+00 : f32
    %26 = vector.broadcast %cst_48 : f32 to vector<6x128xf32>
    %cst_49 = arith.constant dense<0.000000e+00> : vector<128xf32>
    %27 = vector.multi_reduction <add>, %25, %cst_49 [0] : vector<256x128xf32> to vector<128xf32>
    %28 = vector.shape_cast %27 : vector<128xf32> to vector<1x128xf32>
    %29 = arith.mulf %25, %25 : vector<256x128xf32>
    %cst_50 = arith.constant dense<0.000000e+00> : vector<128xf32>
    %30 = vector.multi_reduction <add>, %29, %cst_50 [0] : vector<256x128xf32> to vector<128xf32>
    %31 = vector.shape_cast %30 : vector<128xf32> to vector<1x128xf32>
    %32 = tpu.concatenate %28, %31, %26 in 0 : vector<1x128xf32>, vector<1x128xf32>, vector<6x128xf32> -> vector<8x128xf32>
    %c0_51 = arith.constant 0 : index
    %c0_52 = arith.constant 0 : index
    %c0_53 = arith.constant 0 : index
    %33 = vector.load %arg6[%c0_51, %c0_52, %c0_53] : memref<1x8x128xf32, #tpu.memory_space<vmem>>, vector<1x8x128xf32>
    %34 = vector.shape_cast %33 : vector<1x8x128xf32> to vector<8x128xf32>
    %35 = vector.shape_cast %32 : vector<8x128xf32> to vector<1x8x128xf32>
    tpu.vector_store %arg6[%c0_51, %c0_52, %c0_53], %35 {strides = array<i32>} : memref<1x8x128xf32, #tpu.memory_space<vmem>>, vector<1x8x128xf32>,
    %36 = vector.shape_cast %25 : vector<256x128xf32> to vector<16x16x128xf32>
    %37 = arith.truncf %36 : vector<16x16x128xf32> to vector<16x16x128xbf16>
    %c0_54 = arith.constant 0 : index
    %c0_55 = arith.constant 0 : index
    %c0_56 = arith.constant 0 : index
    %c0_57 = arith.constant 0 : index
    %38 = vector.load %arg5[%c0_54, %c0_55, %c0_56, %c0_57] : memref<1x16x16x128xbf16, #tpu.memory_space<vmem>>, vector<1x16x16x128xbf16>
    %39 = vector.shape_cast %38 : vector<1x16x16x128xbf16> to vector<16x16x128xbf16>
    %40 = vector.shape_cast %37 : vector<16x16x128xbf16> to vector<1x16x16x128xbf16>
    tpu.vector_store %arg5[%c0_54, %c0_55, %c0_56, %c0_57], %40 {strides = array<i32>} : memref<1x16x16x128xbf16, #tpu.memory_space<vmem>>, vector<1x16x16x128xbf16>,
    %41 = vector.shape_cast %13 : vector<16x16x128xf32> to vector<256x128xf32>
    %42 = arith.truncf %41 : vector<256x128xf32> to vector<256x128xbf16>
    %c0_58 = arith.constant 0 : index
    %c0_59 = arith.constant 0 : index
    %43 = vector.load %arg4[%c0_58, %c0_59] : memref<128x128xbf16, #tpu.memory_space<vmem>>, vector<128x128xbf16>
    %cst_60 = arith.constant dense<0.000000e+00> : vector<256x128xf32>
    %44 = tpu.matmul %42, %43, %cst_60 {dimension_numbers = #tpu.dot_dimension_numbers<[1], [0], [0], [1], [0, 0, 1, 1], [], []>} : vector<256x128xbf16>, vector<128x128xbf16>, vector<256x128xf32> -> vector<256x128xf32>
    %cst_61 = arith.constant dense<0.000000e+00> : vector<128xf32>
    %45 = vector.multi_reduction <add>, %44, %cst_61 [0] : vector<256x128xf32> to vector<128xf32>
    %46 = vector.shape_cast %45 : vector<128xf32> to vector<1x128xf32>
    %47 = arith.mulf %44, %44 : vector<256x128xf32>
    %cst_62 = arith.constant dense<0.000000e+00> : vector<128xf32>
    %48 = vector.multi_reduction <add>, %47, %cst_62 [0] : vector<256x128xf32> to vector<128xf32>
    %49 = vector.shape_cast %48 : vector<128xf32> to vector<1x128xf32>
    %50 = tpu.concatenate %46, %49, %26 in 0 : vector<1x128xf32>, vector<1x128xf32>, vector<6x128xf32> -> vector<8x128xf32>
    %c0_63 = arith.constant 0 : index
    %c0_64 = arith.constant 0 : index
    %c0_65 = arith.constant 0 : index
    %51 = vector.load %arg8[%c0_63, %c0_64, %c0_65] : memref<1x8x128xf32, #tpu.memory_space<vmem>>, vector<1x8x128xf32>
    %52 = vector.shape_cast %51 : vector<1x8x128xf32> to vector<8x128xf32>
    %53 = vector.shape_cast %50 : vector<8x128xf32> to vector<1x8x128xf32>
    tpu.vector_store %arg8[%c0_63, %c0_64, %c0_65], %53 {strides = array<i32>} : memref<1x8x128xf32, #tpu.memory_space<vmem>>, vector<1x8x128xf32>,
    %54 = vector.shape_cast %44 : vector<256x128xf32> to vector<16x16x128xf32>
    %c0_66 = arith.constant 0 : index
    %c0_67 = arith.constant 0 : index
    %c0_68 = arith.constant 0 : index
    %c0_69 = arith.constant 0 : index
    %55 = vector.load %arg7[%c0_66, %c0_67, %c0_68, %c0_69] : memref<1x16x16x128xf32, #tpu.memory_space<vmem>>, vector<1x16x16x128xf32>
    %56 = vector.shape_cast %55 : vector<1x16x16x128xf32> to vector<16x16x128xf32>
    %57 = vector.shape_cast %54 : vector<16x16x128xf32> to vector<1x16x16x128xf32>
    tpu.vector_store %arg7[%c0_66, %c0_67, %c0_68, %c0_69], %57 {strides = array<i32>} : memref<1x16x16x128xf32, #tpu.memory_space<vmem>>, vector<1x16x16x128xf32>,
    return
  }
  func.func @transform_0(%arg0: i32) -> (i32, i32, i32, i32) {
    %c0_i32 = arith.constant 0 : i32
    %c0_i32_0 = arith.constant 0 : i32
    %c0_i32_1 = arith.constant 0 : i32
    %c0_i32_2 = arith.constant 0 : i32
    return %arg0, %c0_i32, %c0_i32_0, %c0_i32_1 : i32, i32, i32, i32
  }
  func.func @transform_1(%arg0: i32) -> (i32, i32) {
    %c0_i32 = arith.constant 0 : i32
    %c0_i32_0 = arith.constant 0 : i32
    %c0_i32_1 = arith.constant 0 : i32
    return %c0_i32, %c0_i32_0 : i32, i32
  }
  func.func @transform_2(%arg0: i32) -> (i32, i32) {
    %c0_i32 = arith.constant 0 : i32
    %c0_i32_0 = arith.constant 0 : i32
    %c0_i32_1 = arith.constant 0 : i32
    return %c0_i32, %c0_i32_0 : i32, i32
  }
  func.func @transform_3(%arg0: i32) -> (i32, i32) {
    %c0_i32 = arith.constant 0 : i32
    %c0_i32_0 = arith.constant 0 : i32
    %c0_i32_1 = arith.constant 0 : i32
    return %c0_i32, %c0_i32_0 : i32, i32
  }
  func.func @transform_4(%arg0: i32) -> (i32, i32, i32, i32) {
    %c0_i32 = arith.constant 0 : i32
    %c0_i32_0 = arith.constant 0 : i32
    %c0_i32_1 = arith.constant 0 : i32
    %c0_i32_2 = arith.constant 0 : i32
    return %arg0, %c0_i32, %c0_i32_0, %c0_i32_1 : i32, i32, i32, i32
  }
  func.func @transform_5(%arg0: i32) -> (i32, i32, i32) {
    %c0_i32 = arith.constant 0 : i32
    %c0_i32_0 = arith.constant 0 : i32
    %c0_i32_1 = arith.constant 0 : i32
    return %arg0, %c0_i32, %c0_i32_0 : i32, i32, i32
  }
  func.func @transform_6(%arg0: i32) -> (i32, i32, i32, i32) {
    %c0_i32 = arith.constant 0 : i32
    %c0_i32_0 = arith.constant 0 : i32
    %c0_i32_1 = arith.constant 0 : i32
    %c0_i32_2 = arith.constant 0 : i32
    return %arg0, %c0_i32, %c0_i32_0, %c0_i32_1 : i32, i32, i32, i32
  }
  func.func @transform_7(%arg0: i32) -> (i32, i32, i32) {
    %c0_i32 = arith.constant 0 : i32
    %c0_i32_0 = arith.constant 0 : i32
    %c0_i32_1 = arith.constant 0 : i32
    return %arg0, %c0_i32, %c0_i32_0 : i32, i32, i32
  }
}

</mosaic_0001>

<llo_original>
// kernel: tpu_custom_call.1
$region0: #{tpu_custom_call.1}
  #allocation0 [shape = 'u32[]', space=smem, size = 0x4, offset = 0x4, fixed_abs, tag = 'smem constant byte address 0x4 - core index']
  #allocation1 [shape = 'u32[144,128]{1,0:T(1,128)}', space=vmem, size = 0x12000, scoped, tag = 'internal scratch']
  #allocation2 [shape = 'f32[18,18,128]{2,1,0:T(8,128)}', space=vmem, size = 0x36000, scoped, tag = 'scratch operand']
  %s0 = inlined_call_operand.hbm [shape: f32[2,16,16,128], index: 0, kind: input, shape index: {}]
  %s1 = inlined_call_operand.hbm [shape: bf16[1152,128], index: 1, kind: input, shape index: {}]
  %s2 = inlined_call_operand.hbm [shape: f32[8,128], index: 2, kind: input, shape index: {}]
  %s3 = inlined_call_operand.hbm [shape: bf16[128,128], index: 3, kind: input, shape index: {}]
  %s4 = inlined_call_operand.hbm [shape: bf16[2,16,16,128], index: 4, kind: output, shape index: {0}]
  %s5 = inlined_call_operand.hbm [shape: f32[2,8,128], index: 5, kind: output, shape index: {1}]
  %s6 = inlined_call_operand.hbm [shape: f32[2,16,16,128], index: 6, kind: output, shape index: {2}]
  %s7 = inlined_call_operand.hbm [shape: f32[2,8,128], index: 7, kind: output, shape index: {3}]
  %8 = xla_tuple %s4, %s5, %s6, %s7
  %s9 = sld [smem:[#allocation0]]
  $region89: #{tpu_custom_call.1} parent=0
    _
  %s11 = ssub.s32 1, %s9
  %s12 = scalar_select 0, %s11, %s9
  $region1: #{tpu_custom_call.1} parent=0
    #allocation3 [shape = 'u8[262144]{0}', space=vmem, size = 0x40000, scoped, tag = 'input window, operand 0']
    #allocation4 [shape = 's32[2]{0}', space=sflag, size = 0x8, scoped, tag = 'scoped memory for tpu_custom_call.1']
    #allocation5 [shape = 's32[2]{0}', space=sflag, size = 0x8, scoped, tag = 'scoped memory for tpu_custom_call.1']
    #allocation6 [shape = 'u8[294912]{0}', space=vmem, size = 0x48000, scoped, tag = 'input window, operand 1, single buffered']
    #allocation7 [shape = 's32[1]{0}', space=sflag, size = 0x4, scoped, tag = 'scoped memory for tpu_custom_call.1']
    #allocation8 [shape = 'u8[4096]{0}', space=vmem, size = 0x1000, scoped, tag = 'input window, operand 2, single buffered']
    #allocation9 [shape = 'u8[32768]{0}', space=vmem, size = 0x8000, scoped, tag = 'input window, operand 3, single buffered']
    #allocation10 [shape = 's32[1]{0}', space=sflag, size = 0x4, scoped, tag = 'scoped memory for tpu_custom_call.1']
    #allocation11 [shape = 'u8[131072]{0}', space=vmem, size = 0x20000, scoped, tag = 'output window, operand 0']
    #allocation12 [shape = 'u8[8192]{0}', space=vmem, size = 0x2000, scoped, tag = 'output window, operand 1']
    #allocation13 [shape = 's32[2]{0}', space=sflag, size = 0x8, scoped, tag = 'scoped memory for tpu_custom_call.1']
    #allocation14 [shape = 'u8[262144]{0}', space=vmem, size = 0x40000, scoped, tag = 'output window, operand 2']
    #allocation15 [shape = 'u8[8192]{0}', space=vmem, size = 0x2000, scoped, tag = 'output window, operand 3']
    #allocation16 [shape = 's32[2]{0}', space=sflag, size = 0x8, scoped, tag = 'scoped memory for tpu_custom_call.1']
    %13 = vsyncpa [#allocation4], 0
    %s14 = scalar_lea.sflag [#allocation4], 1
    %15 = vsyncpa %s14, 0
    %16 = vsyncpa [#allocation7], 0
    %17 = vsyncpa [#allocation10], 0
    %18 = vsyncpa [#allocation5], 0
    %s19 = scalar_lea.sflag [#allocation5], 1
    %20 = vsyncpa %s19, 0
    %21 = vsyncpa [#allocation13], 0
    %s22 = scalar_lea.sflag [#allocation13], 1
    %23 = vsyncpa %s22, 0
    %24 = vsyncpa [#allocation16], 0
    %s25 = scalar_lea.sflag [#allocation16], 1
    %26 = vsyncpa %s25, 0
    loop: start=0, step=1, limit=4
    $region2: #{tpu_custom_call.1} parent=1 // loop_pre_header
      _
    $region3: #{tpu_custom_call.1} parent=1 // loop_header
      %s28 = sphi 0, %s32
      %p29 = scmp.ge.s32.totalorder %s28, 4
      %s38 = sphi 0, %s40
      %s41 = sphi 0, %s38
      %s42 = sphi 0, %s41
      %s58 = sphi 0, %s42
      %s62 = sphi 0, %s62
      %s64 = sphi 0, %s62
      %s65 = sphi 0, %s64
      %s79 = sphi 0, %s65
      %s83 = sphi 0, %s83
      %s85 = sphi 0, %s83
      %s86 = sphi 0, %s85
      %s100 = sphi 0, %s86
      %s104 = sphi 0, %s104
      %s106 = sphi 0, %s104
      %s107 = sphi 0, %s106
      %s121 = sphi 0, %s107
      %s127 = sphi 0, %s129
      %s130 = sphi 0, %s127
      %s131 = sphi 0, %s130
      %s147 = sphi 0, %s131
      %s153 = sphi 0, %s155
      %s156 = sphi 0, %s153
      %s157 = sphi 0, %s156
      %s173 = sphi 0, %s157
      %s179 = sphi 0, %s181
      %s182 = sphi 0, %s179
      %s183 = sphi 0, %s182
      %s199 = sphi 0, %s183
      %s205 = sphi 0, %s207
      %s208 = sphi 0, %s205
      %s209 = sphi 0, %s208
      %s225 = sphi 0, %s209
    $region4: #{tpu_custom_call.1} parent=1 // loop_header_branch
      %31 = sbr.rel (%p29) target = $region8
    $region5: #{tpu_custom_call.1} parent=1 // loop_body
      %s33 = ssub.s32 %s28, 1
      %s34 = ssub.s32 %s28, 2
      %s35 = sadd.s32 %s28, 1
      %s36 = ssub.s32 %s28, %s35
      %p37 = scmp.eq.s32.totalorder %s36, 0
      %s39 = sadd.s32 %s38, 1
      %s40 = scalar_select %p37, %s38, %s39
      %p43 = pneg %p37
      %p44 = scmp.eq.s32.totalorder %s28, 1
      %p45 = por %p43, %p44
      %p46 = scmp.ne.s32.totalorder %s38, %s41
      %p47 = scmp.eq.s32.totalorder %s28, 0
      %p48 = por %p46, %p47
      %p49 = scmp.ne.s32.totalorder %s38, %s41
      %p50 = scmp.eq.s32.totalorder %s33, 1
      %p51 = por %p49, %p50
      %p52 = scmp.ne.s32.totalorder %s41, %s42
      %p53 = scmp.eq.s32.totalorder %s33, 0
      %p54 = por %p52, %p53
      %p55 = scmp.ne.s32.totalorder %s41, %s42
      %p56 = scmp.eq.s32.totalorder %s34, 1
      %p57 = por %p55, %p56
      %p59 = scmp.ne.s32.totalorder %s42, %s58
      %p60 = scmp.eq.s32.totalorder %s34, 0
      %p61 = por %p59, %p60
      %s63 = sadd.s32 %s62, 1
      %p66 = scmp.eq.s32.totalorder %s28, 1
      %p67 = scmp.ne.s32.totalorder %s62, %s64
      %p68 = scmp.eq.s32.totalorder %s28, 0
      %p69 = por %p67, %p68
      %p70 = scmp.ne.s32.totalorder %s62, %s64
      %p71 = scmp.eq.s32.totalorder %s33, 1
      %p72 = por %p70, %p71
      %p73 = scmp.ne.s32.totalorder %s64, %s65
      %p74 = scmp.eq.s32.totalorder %s33, 0
      %p75 = por %p73, %p74
      %p76 = scmp.ne.s32.totalorder %s64, %s65
      %p77 = scmp.eq.s32.totalorder %s34, 1
      %p78 = por %p76, %p77
      %p80 = scmp.ne.s32.totalorder %s65, %s79
      %p81 = scmp.eq.s32.totalorder %s34, 0
      %p82 = por %p80, %p81
      %s84 = sadd.s32 %s83, 1
      %p87 = scmp.eq.s32.totalorder %s28, 1
      %p88 = scmp.ne.s32.totalorder %s83, %s85
      %p89 = scmp.eq.s32.totalorder %s28, 0
      %p90 = por %p88, %p89
      %p91 = scmp.ne.s32.totalorder %s83, %s85
      %p92 = scmp.eq.s32.totalorder %s33, 1
      %p93 = por %p91, %p92
      %p94 = scmp.ne.s32.totalorder %s85, %s86
      %p95 = scmp.eq.s32.totalorder %s33, 0
      %p96 = por %p94, %p95
      %p97 = scmp.ne.s32.totalorder %s85, %s86
      %p98 = scmp.eq.s32.totalorder %s34, 1
      %p99 = por %p97, %p98
      %p101 = scmp.ne.s32.totalorder %s86, %s100
      %p102 = scmp.eq.s32.totalorder %s34, 0
      %p103 = por %p101, %p102
      %s105 = sadd.s32 %s104, 1
      %p108 = scmp.eq.s32.totalorder %s28, 1
      %p109 = scmp.ne.s32.totalorder %s104, %s106
      %p110 = scmp.eq.s32.totalorder %s28, 0
      %p111 = por %p109, %p110
      %p112 = scmp.ne.s32.totalorder %s104, %s106
      %p113 = scmp.eq.s32.totalorder %s33, 1
      %p114 = por %p112, %p113
      %p115 = scmp.ne.s32.totalorder %s106, %s107
      %p116 = scmp.eq.s32.totalorder %s33, 0
      %p117 = por %p115, %p116
      %p118 = scmp.ne.s32.totalorder %s106, %s107
      %p119 = scmp.eq.s32.totalorder %s34, 1
      %p120 = por %p118, %p119
      %p122 = scmp.ne.s32.totalorder %s107, %s121
      %p123 = scmp.eq.s32.totalorder %s34, 0
      %p124 = por %p122, %p123
      %s125 = ssub.s32 %s28, %s35
      %p126 = scmp.eq.s32.totalorder %s125, 0
      %s128 = sadd.s32 %s127, 1
      %s129 = scalar_select %p126, %s127, %s128
      %p132 = pneg %p126
      %p133 = scmp.eq.s32.totalorder %s28, 1
      %p134 = por %p132, %p133
      %p135 = scmp.ne.s32.totalorder %s127, %s130
      %p136 = scmp.eq.s32.totalorder %s28, 0
      %p137 = por %p135, %p136
      %p138 = scmp.ne.s32.totalorder %s127, %s130
      %p139 = scmp.eq.s32.totalorder %s33, 1
      %p140 = por %p138, %p139
      %p141 = scmp.ne.s32.totalorder %s130, %s131
      %p142 = scmp.eq.s32.totalorder %s33, 0
      %p143 = por %p141, %p142
      %p144 = scmp.ne.s32.totalorder %s130, %s131
      %p145 = scmp.eq.s32.totalorder %s34, 1
      %p146 = por %p144, %p145
      %p148 = scmp.ne.s32.totalorder %s131, %s147
      %p149 = scmp.eq.s32.totalorder %s34, 0
      %p150 = por %p148, %p149
      %s151 = ssub.s32 %s28, %s35
      %p152 = scmp.eq.s32.totalorder %s151, 0
      %s154 = sadd.s32 %s153, 1
      %s155 = scalar_select %p152, %s153, %s154
      %p158 = pneg %p152
      %p159 = scmp.eq.s32.totalorder %s28, 1
      %p160 = por %p158, %p159
      %p161 = scmp.ne.s32.totalorder %s153, %s156
      %p162 = scmp.eq.s32.totalorder %s28, 0
      %p163 = por %p161, %p162
      %p164 = scmp.ne.s32.totalorder %s153, %s156
      %p165 = scmp.eq.s32.totalorder %s33, 1
      %p166 = por %p164, %p165
      %p167 = scmp.ne.s32.totalorder %s156, %s157
      %p168 = scmp.eq.s32.totalorder %s33, 0
      %p169 = por %p167, %p168
      %p170 = scmp.ne.s32.totalorder %s156, %s157
      %p171 = scmp.eq.s32.totalorder %s34, 1
      %p172 = por %p170, %p171
      %p174 = scmp.ne.s32.totalorder %s157, %s173
      %p175 = scmp.eq.s32.totalorder %s34, 0
      %p176 = por %p174, %p175
      %s177 = ssub.s32 %s28, %s35
      %p178 = scmp.eq.s32.totalorder %s177, 0
      %s180 = sadd.s32 %s179, 1
      %s181 = scalar_select %p178, %s179, %s180
      %p184 = pneg %p178
      %p185 = scmp.eq.s32.totalorder %s28, 1
      %p186 = por %p184, %p185
      %p187 = scmp.ne.s32.totalorder %s179, %s182
      %p188 = scmp.eq.s32.totalorder %s28, 0
      %p189 = por %p187, %p188
      %p190 = scmp.ne.s32.totalorder %s179, %s182
      %p191 = scmp.eq.s32.totalorder %s33, 1
      %p192 = por %p190, %p191
      %p193 = scmp.ne.s32.totalorder %s182, %s183
      %p194 = scmp.eq.s32.totalorder %s33, 0
      %p195 = por %p193, %p194
      %p196 = scmp.ne.s32.totalorder %s182, %s183
      %p197 = scmp.eq.s32.totalorder %s34, 1
      %p198 = por %p196, %p197
      %p200 = scmp.ne.s32.totalorder %s183, %s199
      %p201 = scmp.eq.s32.totalorder %s34, 0
      %p202 = por %p200, %p201
      %s203 = ssub.s32 %s28, %s35
      %p204 = scmp.eq.s32.totalorder %s203, 0
      %s206 = sadd.s32 %s205, 1
      %s207 = scalar_select %p204, %s205, %s206
      %p210 = pneg %p204
      %p211 = scmp.eq.s32.totalorder %s28, 1
      %p212 = por %p210, %p211
      %p213 = scmp.ne.s32.totalorder %s205, %s208
      %p214 = scmp.eq.s32.totalorder %s28, 0
      %p215 = por %p213, %p214
      %p216 = scmp.ne.s32.totalorder %s205, %s208
      %p217 = scmp.eq.s32.totalorder %s33, 1
      %p218 = por %p216, %p217
      %p219 = scmp.ne.s32.totalorder %s208, %s209
      %p220 = scmp.eq.s32.totalorder %s33, 0
      %p221 = por %p219, %p220
      %p222 = scmp.ne.s32.totalorder %s208, %s209
      %p223 = scmp.eq.s32.totalorder %s34, 1
      %p224 = por %p222, %p223
      %p226 = scmp.ne.s32.totalorder %s209, %s225
      %p227 = scmp.eq.s32.totalorder %s34, 0
      %p228 = por %p226, %p227
      %p229 = scmp.le.s32.totalorder 1, %s28
      %p230 = scmp.lt.s32.totalorder %s28, 3
      %p231 = pnand %p229, %p230
      %p232 = pneg %p231
      // Predicated region
      $region9: #{tpu_custom_call.1} parent=5 // pred_check
        _
      $region10: #{tpu_custom_call.1} parent=5 // pred_check_branch
        %234 = sbr.rel (%p231) target = $region12
      $region11: #{tpu_custom_call.1} parent=5 // pred_region
        %s235 = ssub.s32 %s28, 1
        // Predicated region
        $region13: #{tpu_custom_call.1} parent=11 // pred_check
          %p236 = pneg %p75
        $region14: #{tpu_custom_call.1} parent=11 // pred_check_branch
          %238 = sbr.rel (%p236) target = $region16
        $region15: #{tpu_custom_call.1} parent=11 // pred_region
          %s240 = ssub.s32 9216, 9216
          %241 = vsyncadd [#allocation7], %s240
          %s242 = sshll.u32 [#allocation6], 4
          %s243 = int_to_ptr.vmem [resolvable:$true] %s242
          %248 = dma.hbm_to_vmem [thread:$0]  %s1, 9216, %s243, [#allocation7], 64, 64, 4
        $region16: #{tpu_custom_call.1} parent=11 // pred_fallthru
          _
        // Predicated region
        $region17: #{tpu_custom_call.1} parent=11 // pred_check
          %p249 = pneg %p96
        $region18: #{tpu_custom_call.1} parent=11 // pred_check_branch
          %251 = sbr.rel (%p249) target = $region20
        $region19: #{tpu_custom_call.1} parent=11 // pred_region
          %s253 = ssub.s32 128, 128
          %254 = vsyncadd [#allocation7], %s253
          %s256 = sshll.u32 [#allocation8], 4
          %s257 = int_to_ptr.vmem [resolvable:$true] %s256
          %259 = dma.hbm_to_vmem [thread:$0]  %s2, 128, %s257, [#allocation7]
        $region20: #{tpu_custom_call.1} parent=11 // pred_fallthru
          _
        // Predicated region
        $region21: #{tpu_custom_call.1} parent=11 // pred_check
          %p260 = pneg %p117
        $region22: #{tpu_custom_call.1} parent=11 // pred_check_branch
          %262 = sbr.rel (%p260) target = $region24
        $region23: #{tpu_custom_call.1} parent=11 // pred_region
          %s264 = ssub.s32 1024, 1024
          %265 = vsyncadd [#allocation10], %s264
          %s266 = sshll.u32 [#allocation9], 4
          %s267 = int_to_ptr.vmem [resolvable:$true] %s266
          %272 = dma.hbm_to_vmem [thread:$0]  %s3, 1024, %s267, [#allocation10], 64, 64, 4
        $region24: #{tpu_custom_call.1} parent=11 // pred_fallthru
          _
      $region12: #{tpu_custom_call.1} parent=5 // pred_fallthru
        _
      %p273 = scmp.lt.s32.totalorder %s28, 2
      // Predicated region
      $region25: #{tpu_custom_call.1} parent=5 // pred_check
        %p274 = pneg %p273
      $region26: #{tpu_custom_call.1} parent=5 // pred_check_branch
        %276 = sbr.rel (%p274) target = $region28
      $region27: #{tpu_custom_call.1} parent=5 // pred_region
        // Predicated region
        $region29: #{tpu_custom_call.1} parent=27 // pred_check
          %p277 = pneg %p48
        $region30: #{tpu_custom_call.1} parent=27 // pred_check_branch
          %279 = sbr.rel (%p277) target = $region32
        $region31: #{tpu_custom_call.1} parent=27 // pred_region
          %s280 = sand.u32 %s38, 1
          %s281 = scalar_lea.sflag [#allocation4], %s280
          %s282 = sand.u32 %s38, 1
          %s283 = smul.addr %s282, 256
          %s284 = scalar_lea.vmem [#allocation3], %s283
          %s286 = ssub.s32 4096, 4096
          %287 = vsyncadd %s281, %s286
          %s288 = smul.addr %s28, 32
          %s289 = smul.addr %s288, 128
          %s290 = scalar_lea.hbm %s0, %s289
          %s291 = sshll.u32 %s284, 4
          %s292 = int_to_ptr.vmem [resolvable:$true] %s291
          %297 = dma.hbm_to_vmem [thread:$0]  %s290, 4096, %s292, %s281, 128, 128, 8
        $region32: #{tpu_custom_call.1} parent=27 // pred_fallthru
          _
      $region28: #{tpu_custom_call.1} parent=5 // pred_fallthru
        _
      %p298 = scmp.le.s32.totalorder 1, %s28
      %p299 = scmp.lt.s32.totalorder %s28, 3
      %p300 = pnand %p298, %p299
      %p301 = pneg %p300
      // Predicated region
      $region33: #{tpu_custom_call.1} parent=5 // pred_check
        _
      $region34: #{tpu_custom_call.1} parent=5 // pred_check_branch
        %303 = sbr.rel (%p300) target = $region36
      $region35: #{tpu_custom_call.1} parent=5 // pred_region
        %s304 = ssub.s32 %s28, 1
        %s305 = sand.u32 %s41, 1
        %s306 = scalar_lea.sflag [#allocation4], %s305
        %s307 = sand.u32 %s41, 1
        %s308 = smul.addr %s307, 256
        %s309 = scalar_lea.vmem [#allocation3], %s308
        // Predicated region
        $region37: #{tpu_custom_call.1} parent=35 // pred_check
          %p310 = pneg %p54
        $region38: #{tpu_custom_call.1} parent=35 // pred_check_branch
          %312 = sbr.rel (%p310) target = $region40
        $region39: #{tpu_custom_call.1} parent=35 // pred_region
          %313 = dma.done %s306, 4096
        $region40: #{tpu_custom_call.1} parent=35 // pred_fallthru
          _
        // Predicated region
        $region41: #{tpu_custom_call.1} parent=35 // pred_check
          %p314 = pneg %p75
        $region42: #{tpu_custom_call.1} parent=35 // pred_check_branch
          %316 = sbr.rel (%p314) target = $region44
        $region43: #{tpu_custom_call.1} parent=35 // pred_region
          %317 = dma.done [#allocation7], 9216
        $region44: #{tpu_custom_call.1} parent=35 // pred_fallthru
          _
        // Predicated region
        $region45: #{tpu_custom_call.1} parent=35 // pred_check
          %p318 = pneg %p96
        $region46: #{tpu_custom_call.1} parent=35 // pred_check_branch
          %320 = sbr.rel (%p318) target = $region48
        $region47: #{tpu_custom_call.1} parent=35 // pred_region
          %321 = dma.done [#allocation7], 128
        $region48: #{tpu_custom_call.1} parent=35 // pred_fallthru
          _
        // Predicated region
        $region49: #{tpu_custom_call.1} parent=35 // pred_check
          %p322 = pneg %p117
        $region50: #{tpu_custom_call.1} parent=35 // pred_check_branch
          %324 = sbr.rel (%p322) target = $region52
        $region51: #{tpu_custom_call.1} parent=35 // pred_region
          %325 = dma.done [#allocation10], 1024
        $region52: #{tpu_custom_call.1} parent=35 // pred_fallthru
          _
        %s326 = sand.u32 %s41, 1
        %s327 = scalar_lea.sflag [#allocation4], %s326
        %s328 = sand.u32 %s41, 1
        %s329 = smul.addr %s328, 256
        %s330 = scalar_lea.vmem [#allocation3], %s329
        %p331 = pneg %p54
        %p332 = pneg %p51
        %p333 = pneg %p75
        %p334 = pneg %p72
        %p335 = pneg %p96
        %p336 = pneg %p93
        %p337 = pneg %p117
        %p338 = pneg %p114
        %p339 = pneg %p143
        %p340 = pneg %p140
        %s341 = sand.u32 %s130, 1
        %s342 = scalar_lea.sflag [#allocation5], %s341
        %s343 = sand.u32 %s130, 1
        %s344 = smul.addr %s343, 128
        %s345 = scalar_lea.vmem [#allocation11], %s344
        %p346 = pneg %p169
        %p347 = pneg %p166
        %s348 = sand.u32 %s33, 1
        %s349 = scalar_lea.sflag [#allocation13], %s348
        %s350 = sand.u32 %s156, 1
        %s351 = smul.addr %s350, 8
        %s352 = scalar_lea.vmem [#allocation12], %s351
        %p353 = pneg %p195
        %p354 = pneg %p192
        %s355 = sand.u32 %s33, 1
        %s356 = scalar_lea.sflag [#allocation13], %s355
        %s357 = sand.u32 %s182, 1
        %s358 = smul.addr %s357, 256
        %s359 = scalar_lea.vmem [#allocation14], %s358
        %p360 = pneg %p221
        %p361 = pneg %p218
        %s362 = sand.u32 %s208, 1
        %s363 = scalar_lea.sflag [#allocation16], %s362
        %s364 = sand.u32 %s208, 1
        %s365 = smul.addr %s364, 8
        %s366 = scalar_lea.vmem [#allocation15], %s365
        %368 = vst [vmem:[#allocation2] sm:$0xff] 0.0
        %369 = vst [vmem:[#allocation2 + $0x8] sm:$0xff] 0.0
        %370 = vst [vmem:[#allocation2 + $0x10] sm:$0x3] 0.0
        %s371 = scalar_lea.vmem [#allocation2], 408
        %372 = vst [vmem:[%s371] sm:$0xff] 0.0
        %373 = vst [vmem:[%s371 + $0x8] sm:$0xff] 0.0
        %374 = vst [vmem:[%s371 + $0x10] sm:$0x3] 0.0
        %375 = vst [vmem:[#allocation2] sm:$0x1] 0.0
        %376 = vst [vmem:[#allocation2 + $0x18] sm:$0x1] 0.0
        %377 = vst [vmem:[#allocation2 + $0x30] sm:$0x1] 0.0
        %378 = vst [vmem:[#allocation2 + $0x48] sm:$0x1] 0.0
        %379 = vst [vmem:[#allocation2 + $0x60] sm:$0x1] 0.0
        %380 = vst [vmem:[#allocation2 + $0x78] sm:$0x1] 0.0
        %381 = vst [vmem:[#allocation2 + $0x90] sm:$0x1] 0.0
        %382 = vst [vmem:[#allocation2 + $0xa8] sm:$0x1] 0.0
        %383 = vst [vmem:[#allocation2 + $0xc0] sm:$0x1] 0.0
        %384 = vst [vmem:[#allocation2 + $0xd8] sm:$0x1] 0.0
        %385 = vst [vmem:[#allocation2 + $0xf0] sm:$0x1] 0.0
        %386 = vst [vmem:[#allocation2 + $0x108] sm:$0x1] 0.0
        %387 = vst [vmem:[#allocation2 + $0x120] sm:$0x1] 0.0
        %388 = vst [vmem:[#allocation2 + $0x138] sm:$0x1] 0.0
        %389 = vst [vmem:[#allocation2 + $0x150] sm:$0x1] 0.0
        %390 = vst [vmem:[#allocation2 + $0x168] sm:$0x1] 0.0
        %391 = vst [vmem:[#allocation2 + $0x180] sm:$0x1] 0.0
        %392 = vst [vmem:[#allocation2 + $0x198] sm:$0x1] 0.0
        %393 = vst [vmem:[#allocation2 + $0x11] sm:$0x1] 0.0
        %394 = vst [vmem:[#allocation2 + $0x29] sm:$0x1] 0.0
        %395 = vst [vmem:[#allocation2 + $0x41] sm:$0x1] 0.0
        %396 = vst [vmem:[#allocation2 + $0x59] sm:$0x1] 0.0
        %397 = vst [vmem:[#allocation2 + $0x71] sm:$0x1] 0.0
        %398 = vst [vmem:[#allocation2 + $0x89] sm:$0x1] 0.0
        %399 = vst [vmem:[#allocation2 + $0xa1] sm:$0x1] 0.0
        %400 = vst [vmem:[#allocation2 + $0xb9] sm:$0x1] 0.0
        %401 = vst [vmem:[#allocation2 + $0xd1] sm:$0x1] 0.0
        %402 = vst [vmem:[#allocation2 + $0xe9] sm:$0x1] 0.0
        %403 = vst [vmem:[#allocation2 + $0x101] sm:$0x1] 0.0
        %404 = vst [vmem:[#allocation2 + $0x119] sm:$0x1] 0.0
        %405 = vst [vmem:[#allocation2 + $0x131] sm:$0x1] 0.0
        %406 = vst [vmem:[#allocation2 + $0x149] sm:$0x1] 0.0
        %407 = vst [vmem:[#allocation2 + $0x161] sm:$0x1] 0.0
        %408 = vst [vmem:[#allocation2 + $0x179] sm:$0x1] 0.0
        %409 = vst [vmem:[#allocation2 + $0x191] sm:$0x1] 0.0
        %410 = vst [vmem:[#allocation2 + $0x1a9] sm:$0x1] 0.0
        %v411 = vld [vmem:[%s309] sm:$0xff]
        %v412 = vld [vmem:[%s309 + $0x8] sm:$0xff]
        %v413 = vld [vmem:[%s309 + $0x10] sm:$0xff]
        %v414 = vld [vmem:[%s309 + $0x18] sm:$0xff]
        %v415 = vld [vmem:[%s309 + $0x20] sm:$0xff]
        %v416 = vld [vmem:[%s309 + $0x28] sm:$0xff]
        %v417 = vld [vmem:[%s309 + $0x30] sm:$0xff]
        %v418 = vld [vmem:[%s309 + $0x38] sm:$0xff]
        %v419 = vld [vmem:[%s309 + $0x40] sm:$0xff]
        %v420 = vld [vmem:[%s309 + $0x48] sm:$0xff]
        %v421 = vld [vmem:[%s309 + $0x50] sm:$0xff]
        %v422 = vld [vmem:[%s309 + $0x58] sm:$0xff]
        %v423 = vld [vmem:[%s309 + $0x60] sm:$0xff]
        %v424 = vld [vmem:[%s309 + $0x68] sm:$0xff]
        %v425 = vld [vmem:[%s309 + $0x70] sm:$0xff]
        %v426 = vld [vmem:[%s309 + $0x78] sm:$0xff]
        %v427 = vld [vmem:[%s309 + $0x80] sm:$0xff]
        %v428 = vld [vmem:[%s309 + $0x88] sm:$0xff]
        %v429 = vld [vmem:[%s309 + $0x90] sm:$0xff]
        %v430 = vld [vmem:[%s309 + $0x98] sm:$0xff]
        %v431 = vld [vmem:[%s309 + $0xa0] sm:$0xff]
        %v432 = vld [vmem:[%s309 + $0xa8] sm:$0xff]
        %v433 = vld [vmem:[%s309 + $0xb0] sm:$0xff]
        %v434 = vld [vmem:[%s309 + $0xb8] sm:$0xff]
        %v435 = vld [vmem:[%s309 + $0xc0] sm:$0xff]
        %v436 = vld [vmem:[%s309 + $0xc8] sm:$0xff]
        %v437 = vld [vmem:[%s309 + $0xd0] sm:$0xff]
        %v438 = vld [vmem:[%s309 + $0xd8] sm:$0xff]
        %v439 = vld [vmem:[%s309 + $0xe0] sm:$0xff]
        %v440 = vld [vmem:[%s309 + $0xe8] sm:$0xff]
        %v441 = vld [vmem:[%s309 + $0xf0] sm:$0xff]
        %v442 = vld [vmem:[%s309 + $0xf8] sm:$0xff]
        %s443 = scalar_lea.vmem [#allocation2], 24
        %444 = vst [vmem:[%s443 + $0x1] sm:$0xff] %v411
        %445 = vst [vmem:[%s443 + $0x9] sm:$0xff] %v412
        %446 = vst [vmem:[%s443 + $0x19] sm:$0xff] %v413
        %447 = vst [vmem:[%s443 + $0x21] sm:$0xff] %v414
        %448 = vst [vmem:[%s443 + $0x31] sm:$0xff] %v415
        %449 = vst [vmem:[%s443 + $0x39] sm:$0xff] %v416
        %450 = vst [vmem:[%s443 + $0x49] sm:$0xff] %v417
        %451 = vst [vmem:[%s443 + $0x51] sm:$0xff] %v418
        %452 = vst [vmem:[%s443 + $0x61] sm:$0xff] %v419
        %453 = vst [vmem:[%s443 + $0x69] sm:$0xff] %v420
        %454 = vst [vmem:[%s443 + $0x79] sm:$0xff] %v421
        %455 = vst [vmem:[%s443 + $0x81] sm:$0xff] %v422
        %456 = vst [vmem:[%s443 + $0x91] sm:$0xff] %v423
        %457 = vst [vmem:[%s443 + $0x99] sm:$0xff] %v424
        %458 = vst [vmem:[%s443 + $0xa9] sm:$0xff] %v425
        %459 = vst [vmem:[%s443 + $0xb1] sm:$0xff] %v426
        %460 = vst [vmem:[%s443 + $0xc1] sm:$0xff] %v427
        %461 = vst [vmem:[%s443 + $0xc9] sm:$0xff] %v428
        %462 = vst [vmem:[%s443 + $0xd9] sm:$0xff] %v429
        %463 = vst [vmem:[%s443 + $0xe1] sm:$0xff] %v430
        %464 = vst [vmem:[%s443 + $0xf1] sm:$0xff] %v431
        %465 = vst [vmem:[%s443 + $0xf9] sm:$0xff] %v432
        %466 = vst [vmem:[%s443 + $0x109] sm:$0xff] %v433
        %467 = vst [vmem:[%s443 + $0x111] sm:$0xff] %v434
        %468 = vst [vmem:[%s443 + $0x121] sm:$0xff] %v435
        %469 = vst [vmem:[%s443 + $0x129] sm:$0xff] %v436
        %470 = vst [vmem:[%s443 + $0x139] sm:$0xff] %v437
        %471 = vst [vmem:[%s443 + $0x141] sm:$0xff] %v438
        %472 = vst [vmem:[%s443 + $0x151] sm:$0xff] %v439
        %473 = vst [vmem:[%s443 + $0x159] sm:$0xff] %v440
        %474 = vst [vmem:[%s443 + $0x169] sm:$0xff] %v441
        %475 = vst [vmem:[%s443 + $0x171] sm:$0xff] %v442
        %v476 = vld [vmem:[#allocation2] sm:$0xff]
        %v477 = vld [vmem:[#allocation2 + $0x8] sm:$0xff]
        %v478 = vld [vmem:[#allocation2 + $0x18] sm:$0xff]
        %v479 = vld [vmem:[#allocation2 + $0x20] sm:$0xff]
        %v480 = vld [vmem:[#allocation2 + $0x30] sm:$0xff]
        %v481 = vld [vmem:[#allocation2 + $0x38] sm:$0xff]
        %v482 = vld [vmem:[#allocation2 + $0x48] sm:$0xff]
        %v483 = vld [vmem:[#allocation2 + $0x50] sm:$0xff]
        %v484 = vld [vmem:[#allocation2 + $0x60] sm:$0xff]
        %v485 = vld [vmem:[#allocation2 + $0x68] sm:$0xff]
        %v486 = vld [vmem:[#allocation2 + $0x78] sm:$0xff]
        %v487 = vld [vmem:[#allocation2 + $0x80] sm:$0xff]
        %v488 = vld [vmem:[#allocation2 + $0x90] sm:$0xff]
        %v489 = vld [vmem:[#allocation2 + $0x98] sm:$0xff]
        %v490 = vld [vmem:[#allocation2 + $0xa8] sm:$0xff]
        %v491 = vld [vmem:[#allocation2 + $0xb0] sm:$0xff]
        %v492 = vld [vmem:[#allocation2 + $0xc0] sm:$0xff]
        %v493 = vld [vmem:[#allocation2 + $0xc8] sm:$0xff]
        %v494 = vld [vmem:[#allocation2 + $0xd8] sm:$0xff]
        %v495 = vld [vmem:[#allocation2 + $0xe0] sm:$0xff]
        %v496 = vld [vmem:[#allocation2 + $0xf0] sm:$0xff]
        %v497 = vld [vmem:[#allocation2 + $0xf8] sm:$0xff]
        %v498 = vld [vmem:[#allocation2 + $0x108] sm:$0xff]
        %v499 = vld [vmem:[#allocation2 + $0x110] sm:$0xff]
        %v500 = vld [vmem:[#allocation2 + $0x120] sm:$0xff]
        %v501 = vld [vmem:[#allocation2 + $0x128] sm:$0xff]
        %v502 = vld [vmem:[#allocation2 + $0x138] sm:$0xff]
        %v503 = vld [vmem:[#allocation2 + $0x140] sm:$0xff]
        %v504 = vld [vmem:[#allocation2 + $0x150] sm:$0xff]
        %v505 = vld [vmem:[#allocation2 + $0x158] sm:$0xff]
        %v506 = vld [vmem:[#allocation2 + $0x168] sm:$0xff]
        %v507 = vld [vmem:[#allocation2 + $0x170] sm:$0xff]
        %v508 = vld [vmem:[#allocation2 + $0x1] sm:$0xff]
        %v509 = vld [vmem:[#allocation2 + $0x9] sm:$0xff]
        %v510 = vld [vmem:[#allocation2 + $0x19] sm:$0xff]
        %v511 = vld [vmem:[#allocation2 + $0x21] sm:$0xff]
        %v512 = vld [vmem:[#allocation2 + $0x31] sm:$0xff]
        %v513 = vld [vmem:[#allocation2 + $0x39] sm:$0xff]
        %v514 = vld [vmem:[#allocation2 + $0x49] sm:$0xff]
        %v515 = vld [vmem:[#allocation2 + $0x51] sm:$0xff]
        %v516 = vld [vmem:[#allocation2 + $0x61] sm:$0xff]
        %v517 = vld [vmem:[#allocation2 + $0x69] sm:$0xff]
        %v518 = vld [vmem:[#allocation2 + $0x79] sm:$0xff]
        %v519 = vld [vmem:[#allocation2 + $0x81] sm:$0xff]
        %v520 = vld [vmem:[#allocation2 + $0x91] sm:$0xff]
        %v521 = vld [vmem:[#allocation2 + $0x99] sm:$0xff]
        %v522 = vld [vmem:[#allocation2 + $0xa9] sm:$0xff]
        %v523 = vld [vmem:[#allocation2 + $0xb1] sm:$0xff]
        %v524 = vld [vmem:[#allocation2 + $0xc1] sm:$0xff]
        %v525 = vld [vmem:[#allocation2 + $0xc9] sm:$0xff]
        %v526 = vld [vmem:[#allocation2 + $0xd9] sm:$0xff]
        %v527 = vld [vmem:[#allocation2 + $0xe1] sm:$0xff]
        %v528 = vld [vmem:[#allocation2 + $0xf1] sm:$0xff]
        %v529 = vld [vmem:[#allocation2 + $0xf9] sm:$0xff]
        %v530 = vld [vmem:[#allocation2 + $0x109] sm:$0xff]
        %v531 = vld [vmem:[#allocation2 + $0x111] sm:$0xff]
        %v532 = vld [vmem:[#allocation2 + $0x121] sm:$0xff]
        %v533 = vld [vmem:[#allocation2 + $0x129] sm:$0xff]
        %v534 = vld [vmem:[#allocation2 + $0x139] sm:$0xff]
        %v535 = vld [vmem:[#allocation2 + $0x141] sm:$0xff]
        %v536 = vld [vmem:[#allocation2 + $0x151] sm:$0xff]
        %v537 = vld [vmem:[#allocation2 + $0x159] sm:$0xff]
        %v538 = vld [vmem:[#allocation2 + $0x169] sm:$0xff]
        %v539 = vld [vmem:[#allocation2 + $0x171] sm:$0xff]
        %v540 = vld [vmem:[#allocation2 + $0x2] sm:$0xff]
        %v541 = vld [vmem:[#allocation2 + $0xa] sm:$0xff]
        %v542 = vld [vmem:[#allocation2 + $0x1a] sm:$0xff]
        %v543 = vld [vmem:[#allocation2 + $0x22] sm:$0xff]
        %v544 = vld [vmem:[#allocation2 + $0x32] sm:$0xff]
        %v545 = vld [vmem:[#allocation2 + $0x3a] sm:$0xff]
        %v546 = vld [vmem:[#allocation2 + $0x4a] sm:$0xff]
        %v547 = vld [vmem:[#allocation2 + $0x52] sm:$0xff]
        %v548 = vld [vmem:[#allocation2 + $0x62] sm:$0xff]
        %v549 = vld [vmem:[#allocation2 + $0x6a] sm:$0xff]
        %v550 = vld [vmem:[#allocation2 + $0x7a] sm:$0xff]
        %v551 = vld [vmem:[#allocation2 + $0x82] sm:$0xff]
        %v552 = vld [vmem:[#allocation2 + $0x92] sm:$0xff]
        %v553 = vld [vmem:[#allocation2 + $0x9a] sm:$0xff]
        %v554 = vld [vmem:[#allocation2 + $0xaa] sm:$0xff]
        %v555 = vld [vmem:[#allocation2 + $0xb2] sm:$0xff]
        %v556 = vld [vmem:[#allocation2 + $0xc2] sm:$0xff]
        %v557 = vld [vmem:[#allocation2 + $0xca] sm:$0xff]
        %v558 = vld [vmem:[#allocation2 + $0xda] sm:$0xff]
        %v559 = vld [vmem:[#allocation2 + $0xe2] sm:$0xff]
        %v560 = vld [vmem:[#allocation2 + $0xf2] sm:$0xff]
        %v561 = vld [vmem:[#allocation2 + $0xfa] sm:$0xff]
        %v562 = vld [vmem:[#allocation2 + $0x10a] sm:$0xff]
        %v563 = vld [vmem:[#allocation2 + $0x112] sm:$0xff]
        %v564 = vld [vmem:[#allocation2 + $0x122] sm:$0xff]
        %v565 = vld [vmem:[#allocation2 + $0x12a] sm:$0xff]
        %v566 = vld [vmem:[#allocation2 + $0x13a] sm:$0xff]
        %v567 = vld [vmem:[#allocation2 + $0x142] sm:$0xff]
        %v568 = vld [vmem:[#allocation2 + $0x152] sm:$0xff]
        %v569 = vld [vmem:[#allocation2 + $0x15a] sm:$0xff]
        %v570 = vld [vmem:[#allocation2 + $0x16a] sm:$0xff]
        %v571 = vld [vmem:[#allocation2 + $0x172] sm:$0xff]
        %v572 = vld [vmem:[%s443] sm:$0xff]
        %v573 = vld [vmem:[%s443 + $0x8] sm:$0xff]
        %v574 = vld [vmem:[%s443 + $0x18] sm:$0xff]
        %v575 = vld [vmem:[%s443 + $0x20] sm:$0xff]
        %v576 = vld [vmem:[%s443 + $0x30] sm:$0xff]
        %v577 = vld [vmem:[%s443 + $0x38] sm:$0xff]
        %v578 = vld [vmem:[%s443 + $0x48] sm:$0xff]
        %v579 = vld [vmem:[%s443 + $0x50] sm:$0xff]
        %v580 = vld [vmem:[%s443 + $0x60] sm:$0xff]
        %v581 = vld [vmem:[%s443 + $0x68] sm:$0xff]
        %v582 = vld [vmem:[%s443 + $0x78] sm:$0xff]
        %v583 = vld [vmem:[%s443 + $0x80] sm:$0xff]
        %v584 = vld [vmem:[%s443 + $0x90] sm:$0xff]
        %v585 = vld [vmem:[%s443 + $0x98] sm:$0xff]
        %v586 = vld [vmem:[%s443 + $0xa8] sm:$0xff]
        %v587 = vld [vmem:[%s443 + $0xb0] sm:$0xff]
        %v588 = vld [vmem:[%s443 + $0xc0] sm:$0xff]
        %v589 = vld [vmem:[%s443 + $0xc8] sm:$0xff]
        %v590 = vld [vmem:[%s443 + $0xd8] sm:$0xff]
        %v591 = vld [vmem:[%s443 + $0xe0] sm:$0xff]
        %v592 = vld [vmem:[%s443 + $0xf0] sm:$0xff]
        %v593 = vld [vmem:[%s443 + $0xf8] sm:$0xff]
        %v594 = vld [vmem:[%s443 + $0x108] sm:$0xff]
        %v595 = vld [vmem:[%s443 + $0x110] sm:$0xff]
        %v596 = vld [vmem:[%s443 + $0x120] sm:$0xff]
        %v597 = vld [vmem:[%s443 + $0x128] sm:$0xff]
        %v598 = vld [vmem:[%s443 + $0x138] sm:$0xff]
        %v599 = vld [vmem:[%s443 + $0x140] sm:$0xff]
        %v600 = vld [vmem:[%s443 + $0x150] sm:$0xff]
        %v601 = vld [vmem:[%s443 + $0x158] sm:$0xff]
        %v602 = vld [vmem:[%s443 + $0x168] sm:$0xff]
        %v603 = vld [vmem:[%s443 + $0x170] sm:$0xff]
        %v604 = vld [vmem:[%s443 + $0x1] sm:$0xff]
        %v605 = vld [vmem:[%s443 + $0x9] sm:$0xff]
        %v606 = vld [vmem:[%s443 + $0x19] sm:$0xff]
        %v607 = vld [vmem:[%s443 + $0x21] sm:$0xff]
        %v608 = vld [vmem:[%s443 + $0x31] sm:$0xff]
        %v609 = vld [vmem:[%s443 + $0x39] sm:$0xff]
        %v610 = vld [vmem:[%s443 + $0x49] sm:$0xff]
        %v611 = vld [vmem:[%s443 + $0x51] sm:$0xff]
        %v612 = vld [vmem:[%s443 + $0x61] sm:$0xff]
        %v613 = vld [vmem:[%s443 + $0x69] sm:$0xff]
        %v614 = vld [vmem:[%s443 + $0x79] sm:$0xff]
        %v615 = vld [vmem:[%s443 + $0x81] sm:$0xff]
        %v616 = vld [vmem:[%s443 + $0x91] sm:$0xff]
        %v617 = vld [vmem:[%s443 + $0x99] sm:$0xff]
        %v618 = vld [vmem:[%s443 + $0xa9] sm:$0xff]
        %v619 = vld [vmem:[%s443 + $0xb1] sm:$0xff]
        %v620 = vld [vmem:[%s443 + $0xc1] sm:$0xff]
        %v621 = vld [vmem:[%s443 + $0xc9] sm:$0xff]
        %v622 = vld [vmem:[%s443 + $0xd9] sm:$0xff]
        %v623 = vld [vmem:[%s443 + $0xe1] sm:$0xff]
        %v624 = vld [vmem:[%s443 + $0xf1] sm:$0xff]
        %v625 = vld [vmem:[%s443 + $0xf9] sm:$0xff]
        %v626 = vld [vmem:[%s443 + $0x109] sm:$0xff]
        %v627 = vld [vmem:[%s443 + $0x111] sm:$0xff]
        %v628 = vld [vmem:[%s443 + $0x121] sm:$0xff]
        %v629 = vld [vmem:[%s443 + $0x129] sm:$0xff]
        %v630 = vld [vmem:[%s443 + $0x139] sm:$0xff]
        %v631 = vld [vmem:[%s443 + $0x141] sm:$0xff]
        %v632 = vld [vmem:[%s443 + $0x151] sm:$0xff]
        %v633 = vld [vmem:[%s443 + $0x159] sm:$0xff]
        %v634 = vld [vmem:[%s443 + $0x169] sm:$0xff]
        %v635 = vld [vmem:[%s443 + $0x171] sm:$0xff]
        %v636 = vld [vmem:[%s443 + $0x2] sm:$0xff]
        %v637 = vld [vmem:[%s443 + $0xa] sm:$0xff]
        %v638 = vld [vmem:[%s443 + $0x1a] sm:$0xff]
        %v639 = vld [vmem:[%s443 + $0x22] sm:$0xff]
        %v640 = vld [vmem:[%s443 + $0x32] sm:$0xff]
        %v641 = vld [vmem:[%s443 + $0x3a] sm:$0xff]
        %v642 = vld [vmem:[%s443 + $0x4a] sm:$0xff]
        %v643 = vld [vmem:[%s443 + $0x52] sm:$0xff]
        %v644 = vld [vmem:[%s443 + $0x62] sm:$0xff]
        %v645 = vld [vmem:[%s443 + $0x6a] sm:$0xff]
        %v646 = vld [vmem:[%s443 + $0x7a] sm:$0xff]
        %v647 = vld [vmem:[%s443 + $0x82] sm:$0xff]
        %v648 = vld [vmem:[%s443 + $0x92] sm:$0xff]
        %v649 = vld [vmem:[%s443 + $0x9a] sm:$0xff]
        %v650 = vld [vmem:[%s443 + $0xaa] sm:$0xff]
        %v651 = vld [vmem:[%s443 + $0xb2] sm:$0xff]
        %v652 = vld [vmem:[%s443 + $0xc2] sm:$0xff]
        %v653 = vld [vmem:[%s443 + $0xca] sm:$0xff]
        %v654 = vld [vmem:[%s443 + $0xda] sm:$0xff]
        %v655 = vld [vmem:[%s443 + $0xe2] sm:$0xff]
        %v656 = vld [vmem:[%s443 + $0xf2] sm:$0xff]
        %v657 = vld [vmem:[%s443 + $0xfa] sm:$0xff]
        %v658 = vld [vmem:[%s443 + $0x10a] sm:$0xff]
        %v659 = vld [vmem:[%s443 + $0x112] sm:$0xff]
        %v660 = vld [vmem:[%s443 + $0x122] sm:$0xff]
        %v661 = vld [vmem:[%s443 + $0x12a] sm:$0xff]
        %v662 = vld [vmem:[%s443 + $0x13a] sm:$0xff]
        %v663 = vld [vmem:[%s443 + $0x142] sm:$0xff]
        %v664 = vld [vmem:[%s443 + $0x152] sm:$0xff]
        %v665 = vld [vmem:[%s443 + $0x15a] sm:$0xff]
        %v666 = vld [vmem:[%s443 + $0x16a] sm:$0xff]
        %v667 = vld [vmem:[%s443 + $0x172] sm:$0xff]
        %s668 = scalar_lea.vmem [#allocation2], 48
        %v669 = vld [vmem:[%s668] sm:$0xff]
        %v670 = vld [vmem:[%s668 + $0x8] sm:$0xff]
        %v671 = vld [vmem:[%s668 + $0x18] sm:$0xff]
        %v672 = vld [vmem:[%s668 + $0x20] sm:$0xff]
        %v673 = vld [vmem:[%s668 + $0x30] sm:$0xff]
        %v674 = vld [vmem:[%s668 + $0x38] sm:$0xff]
        %v675 = vld [vmem:[%s668 + $0x48] sm:$0xff]
        %v676 = vld [vmem:[%s668 + $0x50] sm:$0xff]
        %v677 = vld [vmem:[%s668 + $0x60] sm:$0xff]
        %v678 = vld [vmem:[%s668 + $0x68] sm:$0xff]
        %v679 = vld [vmem:[%s668 + $0x78] sm:$0xff]
        %v680 = vld [vmem:[%s668 + $0x80] sm:$0xff]
        %v681 = vld [vmem:[%s668 + $0x90] sm:$0xff]
        %v682 = vld [vmem:[%s668 + $0x98] sm:$0xff]
        %v683 = vld [vmem:[%s668 + $0xa8] sm:$0xff]
        %v684 = vld [vmem:[%s668 + $0xb0] sm:$0xff]
        %v685 = vld [vmem:[%s668 + $0xc0] sm:$0xff]
        %v686 = vld [vmem:[%s668 + $0xc8] sm:$0xff]
        %v687 = vld [vmem:[%s668 + $0xd8] sm:$0xff]
        %v688 = vld [vmem:[%s668 + $0xe0] sm:$0xff]
        %v689 = vld [vmem:[%s668 + $0xf0] sm:$0xff]
        %v690 = vld [vmem:[%s668 + $0xf8] sm:$0xff]
        %v691 = vld [vmem:[%s668 + $0x108] sm:$0xff]
        %v692 = vld [vmem:[%s668 + $0x110] sm:$0xff]
        %v693 = vld [vmem:[%s668 + $0x120] sm:$0xff]
        %v694 = vld [vmem:[%s668 + $0x128] sm:$0xff]
        %v695 = vld [vmem:[%s668 + $0x138] sm:$0xff]
        %v696 = vld [vmem:[%s668 + $0x140] sm:$0xff]
        %v697 = vld [vmem:[%s668 + $0x150] sm:$0xff]
        %v698 = vld [vmem:[%s668 + $0x158] sm:$0xff]
        %v699 = vld [vmem:[%s668 + $0x168] sm:$0xff]
        %v700 = vld [vmem:[%s668 + $0x170] sm:$0xff]
        %v701 = vld [vmem:[%s668 + $0x1] sm:$0xff]
        %v702 = vld [vmem:[%s668 + $0x9] sm:$0xff]
        %v703 = vld [vmem:[%s668 + $0x19] sm:$0xff]
        %v704 = vld [vmem:[%s668 + $0x21] sm:$0xff]
        %v705 = vld [vmem:[%s668 + $0x31] sm:$0xff]
        %v706 = vld [vmem:[%s668 + $0x39] sm:$0xff]
        %v707 = vld [vmem:[%s668 + $0x49] sm:$0xff]
        %v708 = vld [vmem:[%s668 + $0x51] sm:$0xff]
        %v709 = vld [vmem:[%s668 + $0x61] sm:$0xff]
        %v710 = vld [vmem:[%s668 + $0x69] sm:$0xff]
        %v711 = vld [vmem:[%s668 + $0x79] sm:$0xff]
        %v712 = vld [vmem:[%s668 + $0x81] sm:$0xff]
        %v713 = vld [vmem:[%s668 + $0x91] sm:$0xff]
        %v714 = vld [vmem:[%s668 + $0x99] sm:$0xff]
        %v715 = vld [vmem:[%s668 + $0xa9] sm:$0xff]
        %v716 = vld [vmem:[%s668 + $0xb1] sm:$0xff]
        %v717 = vld [vmem:[%s668 + $0xc1] sm:$0xff]
        %v718 = vld [vmem:[%s668 + $0xc9] sm:$0xff]
        %v719 = vld [vmem:[%s668 + $0xd9] sm:$0xff]
        %v720 = vld [vmem:[%s668 + $0xe1] sm:$0xff]
        %v721 = vld [vmem:[%s668 + $0xf1] sm:$0xff]
        %v722 = vld [vmem:[%s668 + $0xf9] sm:$0xff]
        %v723 = vld [vmem:[%s668 + $0x109] sm:$0xff]
        %v724 = vld [vmem:[%s668 + $0x111] sm:$0xff]
        %v725 = vld [vmem:[%s668 + $0x121] sm:$0xff]
        %v726 = vld [vmem:[%s668 + $0x129] sm:$0xff]
        %v727 = vld [vmem:[%s668 + $0x139] sm:$0xff]
        %v728 = vld [vmem:[%s668 + $0x141] sm:$0xff]
        %v729 = vld [vmem:[%s668 + $0x151] sm:$0xff]
        %v730 = vld [vmem:[%s668 + $0x159] sm:$0xff]
        %v731 = vld [vmem:[%s668 + $0x169] sm:$0xff]
        %v732 = vld [vmem:[%s668 + $0x171] sm:$0xff]
        %v733 = vld [vmem:[%s668 + $0x2] sm:$0xff]
        %v734 = vld [vmem:[%s668 + $0xa] sm:$0xff]
        %v735 = vld [vmem:[%s668 + $0x1a] sm:$0xff]
        %v736 = vld [vmem:[%s668 + $0x22] sm:$0xff]
        %v737 = vld [vmem:[%s668 + $0x32] sm:$0xff]
        %v738 = vld [vmem:[%s668 + $0x3a] sm:$0xff]
        %v739 = vld [vmem:[%s668 + $0x4a] sm:$0xff]
        %v740 = vld [vmem:[%s668 + $0x52] sm:$0xff]
        %v741 = vld [vmem:[%s668 + $0x62] sm:$0xff]
        %v742 = vld [vmem:[%s668 + $0x6a] sm:$0xff]
        %v743 = vld [vmem:[%s668 + $0x7a] sm:$0xff]
        %v744 = vld [vmem:[%s668 + $0x82] sm:$0xff]
        %v745 = vld [vmem:[%s668 + $0x92] sm:$0xff]
        %v746 = vld [vmem:[%s668 + $0x9a] sm:$0xff]
        %v747 = vld [vmem:[%s668 + $0xaa] sm:$0xff]
        %v748 = vld [vmem:[%s668 + $0xb2] sm:$0xff]
        %v749 = vld [vmem:[%s668 + $0xc2] sm:$0xff]
        %v750 = vld [vmem:[%s668 + $0xca] sm:$0xff]
        %v751 = vld [vmem:[%s668 + $0xda] sm:$0xff]
        %v752 = vld [vmem:[%s668 + $0xe2] sm:$0xff]
        %v753 = vld [vmem:[%s668 + $0xf2] sm:$0xff]
        %v754 = vld [vmem:[%s668 + $0xfa] sm:$0xff]
        %v755 = vld [vmem:[%s668 + $0x10a] sm:$0xff]
        %v756 = vld [vmem:[%s668 + $0x112] sm:$0xff]
        %v757 = vld [vmem:[%s668 + $0x122] sm:$0xff]
        %v758 = vld [vmem:[%s668 + $0x12a] sm:$0xff]
        %v759 = vld [vmem:[%s668 + $0x13a] sm:$0xff]
        %v760 = vld [vmem:[%s668 + $0x142] sm:$0xff]
        %v761 = vld [vmem:[%s668 + $0x152] sm:$0xff]
        %v762 = vld [vmem:[%s668 + $0x15a] sm:$0xff]
        %v763 = vld [vmem:[%s668 + $0x16a] sm:$0xff]
        %v764 = vld [vmem:[%s668 + $0x172] sm:$0xff]
        %v765 = vpack.c.bf16 %v477, %v476
        %v766 = vpack.c.bf16 %v509, %v508
        %v767 = vpack.c.bf16 %v541, %v540
        %v768 = vpack.c.bf16 %v573, %v572
        %v769 = vpack.c.bf16 %v605, %v604
        %v770 = vpack.c.bf16 %v637, %v636
        %v771 = vpack.c.bf16 %v670, %v669
        %v772 = vpack.c.bf16 %v702, %v701
        %v773 = vpack.c.bf16 %v734, %v733
        %v774 = vpack.c.bf16 %v479, %v478
        %v775 = vpack.c.bf16 %v511, %v510
        %v776 = vpack.c.bf16 %v543, %v542
        %v777 = vpack.c.bf16 %v575, %v574
        %v778 = vpack.c.bf16 %v607, %v606
        %v779 = vpack.c.bf16 %v639, %v638
        %v780 = vpack.c.bf16 %v672, %v671
        %v781 = vpack.c.bf16 %v704, %v703
        %v782 = vpack.c.bf16 %v736, %v735
        %v783 = vpack.c.bf16 %v481, %v480
        %v784 = vpack.c.bf16 %v513, %v512
        %v785 = vpack.c.bf16 %v545, %v544
        %v786 = vpack.c.bf16 %v577, %v576
        %v787 = vpack.c.bf16 %v609, %v608
        %v788 = vpack.c.bf16 %v641, %v640
        %v789 = vpack.c.bf16 %v674, %v673
        %v790 = vpack.c.bf16 %v706, %v705
        %v791 = vpack.c.bf16 %v738, %v737
        %v792 = vpack.c.bf16 %v483, %v482
        %v793 = vpack.c.bf16 %v515, %v514
        %v794 = vpack.c.bf16 %v547, %v546
        %v795 = vpack.c.bf16 %v579, %v578
        %v796 = vpack.c.bf16 %v611, %v610
        %v797 = vpack.c.bf16 %v643, %v642
        %v798 = vpack.c.bf16 %v676, %v675
        %v799 = vpack.c.bf16 %v708, %v707
        %v800 = vpack.c.bf16 %v740, %v739
        %v801 = vpack.c.bf16 %v485, %v484
        %v802 = vpack.c.bf16 %v517, %v516
        %v803 = vpack.c.bf16 %v549, %v548
        %v804 = vpack.c.bf16 %v581, %v580
        %v805 = vpack.c.bf16 %v613, %v612
        %v806 = vpack.c.bf16 %v645, %v644
        %v807 = vpack.c.bf16 %v678, %v677
        %v808 = vpack.c.bf16 %v710, %v709
        %v809 = vpack.c.bf16 %v742, %v741
        %v810 = vpack.c.bf16 %v487, %v486
        %v811 = vpack.c.bf16 %v519, %v518
        %v812 = vpack.c.bf16 %v551, %v550
        %v813 = vpack.c.bf16 %v583, %v582
        %v814 = vpack.c.bf16 %v615, %v614
        %v815 = vpack.c.bf16 %v647, %v646
        %v816 = vpack.c.bf16 %v680, %v679
        %v817 = vpack.c.bf16 %v712, %v711
        %v818 = vpack.c.bf16 %v744, %v743
        %v819 = vpack.c.bf16 %v489, %v488
        %v820 = vpack.c.bf16 %v521, %v520
        %v821 = vpack.c.bf16 %v553, %v552
        %v822 = vpack.c.bf16 %v585, %v584
        %v823 = vpack.c.bf16 %v617, %v616
        %v824 = vpack.c.bf16 %v649, %v648
        %v825 = vpack.c.bf16 %v682, %v681
        %v826 = vpack.c.bf16 %v714, %v713
        %v827 = vpack.c.bf16 %v746, %v745
        %v828 = vpack.c.bf16 %v491, %v490
        %v829 = vpack.c.bf16 %v523, %v522
        %v830 = vpack.c.bf16 %v555, %v554
        %v831 = vpack.c.bf16 %v587, %v586
        %v832 = vpack.c.bf16 %v619, %v618
        %v833 = vpack.c.bf16 %v651, %v650
        %v834 = vpack.c.bf16 %v684, %v683
        %v835 = vpack.c.bf16 %v716, %v715
        %v836 = vpack.c.bf16 %v748, %v747
        %v837 = vpack.c.bf16 %v493, %v492
        %v838 = vpack.c.bf16 %v525, %v524
        %v839 = vpack.c.bf16 %v557, %v556
        %v840 = vpack.c.bf16 %v589, %v588
        %v841 = vpack.c.bf16 %v621, %v620
        %v842 = vpack.c.bf16 %v653, %v652
        %v843 = vpack.c.bf16 %v686, %v685
        %v844 = vpack.c.bf16 %v718, %v717
        %v845 = vpack.c.bf16 %v750, %v749
        %v846 = vpack.c.bf16 %v495, %v494
        %v847 = vpack.c.bf16 %v527, %v526
        %v848 = vpack.c.bf16 %v559, %v558
        %v849 = vpack.c.bf16 %v591, %v590
        %v850 = vpack.c.bf16 %v623, %v622
        %v851 = vpack.c.bf16 %v655, %v654
        %v852 = vpack.c.bf16 %v688, %v687
        %v853 = vpack.c.bf16 %v720, %v719
        %v854 = vpack.c.bf16 %v752, %v751
        %v855 = vpack.c.bf16 %v497, %v496
        %v856 = vpack.c.bf16 %v529, %v528
        %v857 = vpack.c.bf16 %v561, %v560
        %v858 = vpack.c.bf16 %v593, %v592
        %v859 = vpack.c.bf16 %v625, %v624
        %v860 = vpack.c.bf16 %v657, %v656
        %v861 = vpack.c.bf16 %v690, %v689
        %v862 = vpack.c.bf16 %v722, %v721
        %v863 = vpack.c.bf16 %v754, %v753
        %v864 = vpack.c.bf16 %v499, %v498
        %v865 = vpack.c.bf16 %v531, %v530
        %v866 = vpack.c.bf16 %v563, %v562
        %v867 = vpack.c.bf16 %v595, %v594
        %v868 = vpack.c.bf16 %v627, %v626
        %v869 = vpack.c.bf16 %v659, %v658
        %v870 = vpack.c.bf16 %v692, %v691
        %v871 = vpack.c.bf16 %v724, %v723
        %v872 = vpack.c.bf16 %v756, %v755
        %v873 = vpack.c.bf16 %v501, %v500
        %v874 = vpack.c.bf16 %v533, %v532
        %v875 = vpack.c.bf16 %v565, %v564
        %v876 = vpack.c.bf16 %v597, %v596
        %v877 = vpack.c.bf16 %v629, %v628
        %v878 = vpack.c.bf16 %v661, %v660
        %v879 = vpack.c.bf16 %v694, %v693
        %v880 = vpack.c.bf16 %v726, %v725
        %v881 = vpack.c.bf16 %v758, %v757
        %v882 = vpack.c.bf16 %v503, %v502
        %v883 = vpack.c.bf16 %v535, %v534
        %v884 = vpack.c.bf16 %v567, %v566
        %v885 = vpack.c.bf16 %v599, %v598
        %v886 = vpack.c.bf16 %v631, %v630
        %v887 = vpack.c.bf16 %v663, %v662
        %v888 = vpack.c.bf16 %v696, %v695
        %v889 = vpack.c.bf16 %v728, %v727
        %v890 = vpack.c.bf16 %v760, %v759
        %v891 = vpack.c.bf16 %v505, %v504
        %v892 = vpack.c.bf16 %v537, %v536
        %v893 = vpack.c.bf16 %v569, %v568
        %v894 = vpack.c.bf16 %v601, %v600
        %v895 = vpack.c.bf16 %v633, %v632
        %v896 = vpack.c.bf16 %v665, %v664
        %v897 = vpack.c.bf16 %v698, %v697
        %v898 = vpack.c.bf16 %v730, %v729
        %v899 = vpack.c.bf16 %v762, %v761
        %v900 = vpack.c.bf16 %v507, %v506
        %v901 = vpack.c.bf16 %v539, %v538
        %v902 = vpack.c.bf16 %v571, %v570
        %v903 = vpack.c.bf16 %v603, %v602
        %v904 = vpack.c.bf16 %v635, %v634
        %v905 = vpack.c.bf16 %v667, %v666
        %v906 = vpack.c.bf16 %v700, %v699
        %v907 = vpack.c.bf16 %v732, %v731
        %v908 = vpack.c.bf16 %v764, %v763
        %v909 = vld [vmem:[#allocation6] sm:$0xf]
        %v910 = vld [vmem:[#allocation6 + $0x4] sm:$0xf]
        %v911 = vld [vmem:[#allocation6 + $0x8] sm:$0xf]
        %v912 = vld [vmem:[#allocation6 + $0xc] sm:$0xf]
        %v913 = vld [vmem:[#allocation6 + $0x10] sm:$0xf]
        %v914 = vld [vmem:[#allocation6 + $0x14] sm:$0xf]
        %v915 = vld [vmem:[#allocation6 + $0x18] sm:$0xf]
        %v916 = vld [vmem:[#allocation6 + $0x1c] sm:$0xf]
        %v917 = vld [vmem:[#allocation6 + $0x20] sm:$0xf]
        %v918 = vld [vmem:[#allocation6 + $0x24] sm:$0xf]
        %v919 = vld [vmem:[#allocation6 + $0x28] sm:$0xf]
        %v920 = vld [vmem:[#allocation6 + $0x2c] sm:$0xf]
        %v921 = vld [vmem:[#allocation6 + $0x30] sm:$0xf]
        %v922 = vld [vmem:[#allocation6 + $0x34] sm:$0xf]
        %v923 = vld [vmem:[#allocation6 + $0x38] sm:$0xf]
        %v924 = vld [vmem:[#allocation6 + $0x3c] sm:$0xf]
        %v925 = vld [vmem:[#allocation6 + $0x40] sm:$0xf]
        %v926 = vld [vmem:[#allocation6 + $0x44] sm:$0xf]
        %v927 = vld [vmem:[#allocation6 + $0x48] sm:$0xf]
        %v928 = vld [vmem:[#allocation6 + $0x4c] sm:$0xf]
        %v929 = vld [vmem:[#allocation6 + $0x50] sm:$0xf]
        %v930 = vld [vmem:[#allocation6 + $0x54] sm:$0xf]
        %v931 = vld [vmem:[#allocation6 + $0x58] sm:$0xf]
        %v932 = vld [vmem:[#allocation6 + $0x5c] sm:$0xf]
        %v933 = vld [vmem:[#allocation6 + $0x60] sm:$0xf]
        %v934 = vld [vmem:[#allocation6 + $0x64] sm:$0xf]
        %v935 = vld [vmem:[#allocation6 + $0x68] sm:$0xf]
        %v936 = vld [vmem:[#allocation6 + $0x6c] sm:$0xf]
        %v937 = vld [vmem:[#allocation6 + $0x70] sm:$0xf]
        %v938 = vld [vmem:[#allocation6 + $0x74] sm:$0xf]
        %v939 = vld [vmem:[#allocation6 + $0x78] sm:$0xf]
        %v940 = vld [vmem:[#allocation6 + $0x7c] sm:$0xf]
        %v941 = vld [vmem:[#allocation6 + $0x80] sm:$0xf]
        %v942 = vld [vmem:[#allocation6 + $0x84] sm:$0xf]
        %v943 = vld [vmem:[#allocation6 + $0x88] sm:$0xf]
        %v944 = vld [vmem:[#allocation6 + $0x8c] sm:$0xf]
        %v945 = vld [vmem:[#allocation6 + $0x90] sm:$0xf]
        %v946 = vld [vmem:[#allocation6 + $0x94] sm:$0xf]
        %v947 = vld [vmem:[#allocation6 + $0x98] sm:$0xf]
        %v948 = vld [vmem:[#allocation6 + $0x9c] sm:$0xf]
        %v949 = vld [vmem:[#allocation6 + $0xa0] sm:$0xf]
        %v950 = vld [vmem:[#allocation6 + $0xa4] sm:$0xf]
        %v951 = vld [vmem:[#allocation6 + $0xa8] sm:$0xf]
        %v952 = vld [vmem:[#allocation6 + $0xac] sm:$0xf]
        %v953 = vld [vmem:[#allocation6 + $0xb0] sm:$0xf]
        %v954 = vld [vmem:[#allocation6 + $0xb4] sm:$0xf]
        %v955 = vld [vmem:[#allocation6 + $0xb8] sm:$0xf]
        %v956 = vld [vmem:[#allocation6 + $0xbc] sm:$0xf]
        %v957 = vld [vmem:[#allocation6 + $0xc0] sm:$0xf]
        %v958 = vld [vmem:[#allocation6 + $0xc4] sm:$0xf]
        %v959 = vld [vmem:[#allocation6 + $0xc8] sm:$0xf]
        %v960 = vld [vmem:[#allocation6 + $0xcc] sm:$0xf]
        %v961 = vld [vmem:[#allocation6 + $0xd0] sm:$0xf]
        %v962 = vld [vmem:[#allocation6 + $0xd4] sm:$0xf]
        %v963 = vld [vmem:[#allocation6 + $0xd8] sm:$0xf]
        %v964 = vld [vmem:[#allocation6 + $0xdc] sm:$0xf]
        %v965 = vld [vmem:[#allocation6 + $0xe0] sm:$0xf]
        %v966 = vld [vmem:[#allocation6 + $0xe4] sm:$0xf]
        %v967 = vld [vmem:[#allocation6 + $0xe8] sm:$0xf]
        %v968 = vld [vmem:[#allocation6 + $0xec] sm:$0xf]
        %v969 = vld [vmem:[#allocation6 + $0xf0] sm:$0xf]
        %v970 = vld [vmem:[#allocation6 + $0xf4] sm:$0xf]
        %v971 = vld [vmem:[#allocation6 + $0xf8] sm:$0xf]
        %v972 = vld [vmem:[#allocation6 + $0xfc] sm:$0xf]
        %v973 = vld [vmem:[#allocation6 + $0x100] sm:$0xf]
        %v974 = vld [vmem:[#allocation6 + $0x104] sm:$0xf]
        %v975 = vld [vmem:[#allocation6 + $0x108] sm:$0xf]
        %v976 = vld [vmem:[#allocation6 + $0x10c] sm:$0xf]
        %v977 = vld [vmem:[#allocation6 + $0x110] sm:$0xf]
        %v978 = vld [vmem:[#allocation6 + $0x114] sm:$0xf]
        %v979 = vld [vmem:[#allocation6 + $0x118] sm:$0xf]
        %v980 = vld [vmem:[#allocation6 + $0x11c] sm:$0xf]
        %v981 = vld [vmem:[#allocation6 + $0x120] sm:$0xf]
        %v982 = vld [vmem:[#allocation6 + $0x124] sm:$0xf]
        %v983 = vld [vmem:[#allocation6 + $0x128] sm:$0xf]
        %v984 = vld [vmem:[#allocation6 + $0x12c] sm:$0xf]
        %v985 = vld [vmem:[#allocation6 + $0x130] sm:$0xf]
        %v986 = vld [vmem:[#allocation6 + $0x134] sm:$0xf]
        %v987 = vld [vmem:[#allocation6 + $0x138] sm:$0xf]
        %v988 = vld [vmem:[#allocation6 + $0x13c] sm:$0xf]
        %v989 = vld [vmem:[#allocation6 + $0x140] sm:$0xf]
        %v990 = vld [vmem:[#allocation6 + $0x144] sm:$0xf]
        %v991 = vld [vmem:[#allocation6 + $0x148] sm:$0xf]
        %v992 = vld [vmem:[#allocation6 + $0x14c] sm:$0xf]
        %v993 = vld [vmem:[#allocation6 + $0x150] sm:$0xf]
        %v994 = vld [vmem:[#allocation6 + $0x154] sm:$0xf]
        %v995 = vld [vmem:[#allocation6 + $0x158] sm:$0xf]
        %v996 = vld [vmem:[#allocation6 + $0x15c] sm:$0xf]
        %v997 = vld [vmem:[#allocation6 + $0x160] sm:$0xf]
        %v998 = vld [vmem:[#allocation6 + $0x164] sm:$0xf]
        %v999 = vld [vmem:[#allocation6 + $0x168] sm:$0xf]
        %v1000 = vld [vmem:[#allocation6 + $0x16c] sm:$0xf]
        %v1001 = vld [vmem:[#allocation6 + $0x170] sm:$0xf]
        %v1002 = vld [vmem:[#allocation6 + $0x174] sm:$0xf]
        %v1003 = vld [vmem:[#allocation6 + $0x178] sm:$0xf]
        %v1004 = vld [vmem:[#allocation6 + $0x17c] sm:$0xf]
        %v1005 = vld [vmem:[#allocation6 + $0x180] sm:$0xf]
        %v1006 = vld [vmem:[#allocation6 + $0x184] sm:$0xf]
        %v1007 = vld [vmem:[#allocation6 + $0x188] sm:$0xf]
        %v1008 = vld [vmem:[#allocation6 + $0x18c] sm:$0xf]
        %v1009 = vld [vmem:[#allocation6 + $0x190] sm:$0xf]
        %v1010 = vld [vmem:[#allocation6 + $0x194] sm:$0xf]
        %v1011 = vld [vmem:[#allocation6 + $0x198] sm:$0xf]
        %v1012 = vld [vmem:[#allocation6 + $0x19c] sm:$0xf]
        %v1013 = vld [vmem:[#allocation6 + $0x1a0] sm:$0xf]
        %v1014 = vld [vmem:[#allocation6 + $0x1a4] sm:$0xf]
        %v1015 = vld [vmem:[#allocation6 + $0x1a8] sm:$0xf]
        %v1016 = vld [vmem:[#allocation6 + $0x1ac] sm:$0xf]
        %v1017 = vld [vmem:[#allocation6 + $0x1b0] sm:$0xf]
        %v1018 = vld [vmem:[#allocation6 + $0x1b4] sm:$0xf]
        %v1019 = vld [vmem:[#allocation6 + $0x1b8] sm:$0xf]
        %v1020 = vld [vmem:[#allocation6 + $0x1bc] sm:$0xf]
        %v1021 = vld [vmem:[#allocation6 + $0x1c0] sm:$0xf]
        %v1022 = vld [vmem:[#allocation6 + $0x1c4] sm:$0xf]
        %v1023 = vld [vmem:[#allocation6 + $0x1c8] sm:$0xf]
        %v1024 = vld [vmem:[#allocation6 + $0x1cc] sm:$0xf]
        %v1025 = vld [vmem:[#allocation6 + $0x1d0] sm:$0xf]
        %v1026 = vld [vmem:[#allocation6 + $0x1d4] sm:$0xf]
        %v1027 = vld [vmem:[#allocation6 + $0x1d8] sm:$0xf]
        %v1028 = vld [vmem:[#allocation6 + $0x1dc] sm:$0xf]
        %v1029 = vld [vmem:[#allocation6 + $0x1e0] sm:$0xf]
        %v1030 = vld [vmem:[#allocation6 + $0x1e4] sm:$0xf]
        %v1031 = vld [vmem:[#allocation6 + $0x1e8] sm:$0xf]
        %v1032 = vld [vmem:[#allocation6 + $0x1ec] sm:$0xf]
        %v1033 = vld [vmem:[#allocation6 + $0x1f0] sm:$0xf]
        %v1034 = vld [vmem:[#allocation6 + $0x1f4] sm:$0xf]
        %v1035 = vld [vmem:[#allocation6 + $0x1f8] sm:$0xf]
        %v1036 = vld [vmem:[#allocation6 + $0x1fc] sm:$0xf]
        %v1037 = vld [vmem:[#allocation6 + $0x200] sm:$0xf]
        %v1038 = vld [vmem:[#allocation6 + $0x204] sm:$0xf]
        %v1039 = vld [vmem:[#allocation6 + $0x208] sm:$0xf]
        %v1040 = vld [vmem:[#allocation6 + $0x20c] sm:$0xf]
        %v1041 = vld [vmem:[#allocation6 + $0x210] sm:$0xf]
        %v1042 = vld [vmem:[#allocation6 + $0x214] sm:$0xf]
        %v1043 = vld [vmem:[#allocation6 + $0x218] sm:$0xf]
        %v1044 = vld [vmem:[#allocation6 + $0x21c] sm:$0xf]
        %v1045 = vld [vmem:[#allocation6 + $0x220] sm:$0xf]
        %v1046 = vld [vmem:[#allocation6 + $0x224] sm:$0xf]
        %v1047 = vld [vmem:[#allocation6 + $0x228] sm:$0xf]
        %v1048 = vld [vmem:[#allocation6 + $0x22c] sm:$0xf]
        %v1049 = vld [vmem:[#allocation6 + $0x230] sm:$0xf]
        %v1050 = vld [vmem:[#allocation6 + $0x234] sm:$0xf]
        %v1051 = vld [vmem:[#allocation6 + $0x238] sm:$0xf]
        %v1052 = vld [vmem:[#allocation6 + $0x23c] sm:$0xf]
        %v1053 = vld [vmem:[#allocation8] sm:$0x1]
        %v1054 = vlaneseq
        %v1055 = vshrl.u32 %v1054, 7
        %v1056 = vsub.s32 0, %v1055
        %v1057 = vrot.slane %v1053, %v1056
        %v1202 = vunpack.c.l.b16 %v909
        %v1203 = vunpack.c.l.b16 %v910
        %v1204 = vunpack.c.l.b16 %v911
        %v1205 = vunpack.c.l.b16 %v912
        %v1206 = vunpack.c.l.b16 %v913
        %v1207 = vunpack.c.l.b16 %v914
        %v1208 = vunpack.c.l.b16 %v915
        %v1209 = vunpack.c.l.b16 %v916
        %v1210 = vunpack.c.l.b16 %v917
        %v1211 = vunpack.c.l.b16 %v918
        %v1212 = vunpack.c.l.b16 %v919
        %v1213 = vunpack.c.l.b16 %v920
        %v1214 = vunpack.c.l.b16 %v921
        %v1215 = vunpack.c.l.b16 %v922
        %v1216 = vunpack.c.l.b16 %v923
        %v1217 = vunpack.c.l.b16 %v924
        %v1218 = vunpack.c.l.b16 %v925
        %v1219 = vunpack.c.l.b16 %v926
        %v1220 = vunpack.c.l.b16 %v927
        %v1221 = vunpack.c.l.b16 %v928
        %v1222 = vunpack.c.l.b16 %v929
        %v1223 = vunpack.c.l.b16 %v930
        %v1224 = vunpack.c.l.b16 %v931
        %v1225 = vunpack.c.l.b16 %v932
        %v1226 = vunpack.c.l.b16 %v933
        %v1227 = vunpack.c.l.b16 %v934
        %v1228 = vunpack.c.l.b16 %v935
        %v1229 = vunpack.c.l.b16 %v936
        %v1230 = vunpack.c.l.b16 %v937
        %v1231 = vunpack.c.l.b16 %v938
        %v1232 = vunpack.c.l.b16 %v939
        %v1233 = vunpack.c.l.b16 %v940
        %v1234 = vunpack.c.l.b16 %v941
        %v1235 = vunpack.c.l.b16 %v942
        %v1236 = vunpack.c.l.b16 %v943
        %v1237 = vunpack.c.l.b16 %v944
        %v1238 = vunpack.c.l.b16 %v945
        %v1239 = vunpack.c.l.b16 %v946
        %v1240 = vunpack.c.l.b16 %v947
        %v1241 = vunpack.c.l.b16 %v948
        %v1242 = vunpack.c.l.b16 %v949
        %v1243 = vunpack.c.l.b16 %v950
        %v1244 = vunpack.c.l.b16 %v951
        %v1245 = vunpack.c.l.b16 %v952
        %v1246 = vunpack.c.l.b16 %v953
        %v1247 = vunpack.c.l.b16 %v954
        %v1248 = vunpack.c.l.b16 %v955
        %v1249 = vunpack.c.l.b16 %v956
        %v1250 = vunpack.c.l.b16 %v957
        %v1251 = vunpack.c.l.b16 %v958
        %v1252 = vunpack.c.l.b16 %v959
        %v1253 = vunpack.c.l.b16 %v960
        %v1254 = vunpack.c.l.b16 %v961
        %v1255 = vunpack.c.l.b16 %v962
        %v1256 = vunpack.c.l.b16 %v963
        %v1257 = vunpack.c.l.b16 %v964
        %v1258 = vunpack.c.l.b16 %v965
        %v1259 = vunpack.c.l.b16 %v966
        %v1260 = vunpack.c.l.b16 %v967
        %v1261 = vunpack.c.l.b16 %v968
        %v1262 = vunpack.c.l.b16 %v969
        %v1263 = vunpack.c.l.b16 %v970
        %v1264 = vunpack.c.l.b16 %v971
        %v1265 = vunpack.c.l.b16 %v972
        %v1266 = vunpack.c.l.b16 %v973
        %v1267 = vunpack.c.l.b16 %v974
        %v1268 = vunpack.c.l.b16 %v975
        %v1269 = vunpack.c.l.b16 %v976
        %v1270 = vunpack.c.l.b16 %v977
        %v1271 = vunpack.c.l.b16 %v978
        %v1272 = vunpack.c.l.b16 %v979
        %v1273 = vunpack.c.l.b16 %v980
        %v1274 = vunpack.c.l.b16 %v981
        %v1275 = vunpack.c.l.b16 %v982
        %v1276 = vunpack.c.l.b16 %v983
        %v1277 = vunpack.c.l.b16 %v984
        %v1278 = vunpack.c.l.b16 %v985
        %v1279 = vunpack.c.l.b16 %v986
        %v1280 = vunpack.c.l.b16 %v987
        %v1281 = vunpack.c.l.b16 %v988
        %v1282 = vunpack.c.l.b16 %v989
        %v1283 = vunpack.c.l.b16 %v990
        %v1284 = vunpack.c.l.b16 %v991
        %v1285 = vunpack.c.l.b16 %v992
        %v1286 = vunpack.c.l.b16 %v993
        %v1287 = vunpack.c.l.b16 %v994
        %v1288 = vunpack.c.l.b16 %v995
        %v1289 = vunpack.c.l.b16 %v996
        %v1290 = vunpack.c.l.b16 %v997
        %v1291 = vunpack.c.l.b16 %v998
        %v1292 = vunpack.c.l.b16 %v999
        %v1293 = vunpack.c.l.b16 %v1000
        %v1294 = vunpack.c.l.b16 %v1001
        %v1295 = vunpack.c.l.b16 %v1002
        %v1296 = vunpack.c.l.b16 %v1003
        %v1297 = vunpack.c.l.b16 %v1004
        %v1298 = vunpack.c.l.b16 %v1005
        %v1299 = vunpack.c.l.b16 %v1006
        %v1300 = vunpack.c.l.b16 %v1007
        %v1301 = vunpack.c.l.b16 %v1008
        %v1302 = vunpack.c.l.b16 %v1009
        %v1303 = vunpack.c.l.b16 %v1010
        %v1304 = vunpack.c.l.b16 %v1011
        %v1305 = vunpack.c.l.b16 %v1012
        %v1306 = vunpack.c.l.b16 %v1013
        %v1307 = vunpack.c.l.b16 %v1014
        %v1308 = vunpack.c.l.b16 %v1015
        %v1309 = vunpack.c.l.b16 %v1016
        %v1310 = vunpack.c.l.b16 %v1017
        %v1311 = vunpack.c.l.b16 %v1018
        %v1312 = vunpack.c.l.b16 %v1019
        %v1313 = vunpack.c.l.b16 %v1020
        %v1314 = vunpack.c.l.b16 %v1021
        %v1315 = vunpack.c.l.b16 %v1022
        %v1316 = vunpack.c.l.b16 %v1023
        %v1317 = vunpack.c.l.b16 %v1024
        %v1318 = vunpack.c.l.b16 %v1025
        %v1319 = vunpack.c.l.b16 %v1026
        %v1320 = vunpack.c.l.b16 %v1027
        %v1321 = vunpack.c.l.b16 %v1028
        %v1322 = vunpack.c.l.b16 %v1029
        %v1323 = vunpack.c.l.b16 %v1030
        %v1324 = vunpack.c.l.b16 %v1031
        %v1325 = vunpack.c.l.b16 %v1032
        %v1326 = vunpack.c.l.b16 %v1033
        %v1327 = vunpack.c.l.b16 %v1034
        %v1328 = vunpack.c.l.b16 %v1035
        %v1329 = vunpack.c.l.b16 %v1036
        %v1330 = vunpack.c.l.b16 %v1037
        %v1331 = vunpack.c.l.b16 %v1038
        %v1332 = vunpack.c.l.b16 %v1039
        %v1333 = vunpack.c.l.b16 %v1040
        %v1334 = vunpack.c.l.b16 %v1041
        %v1335 = vunpack.c.l.b16 %v1042
        %v1336 = vunpack.c.l.b16 %v1043
        %v1337 = vunpack.c.l.b16 %v1044
        %v1338 = vunpack.c.l.b16 %v1045
        %v1339 = vunpack.c.l.b16 %v1046
        %v1340 = vunpack.c.l.b16 %v1047
        %v1341 = vunpack.c.l.b16 %v1048
        %v1342 = vunpack.c.l.b16 %v1049
        %v1343 = vunpack.c.l.b16 %v1050
        %v1344 = vunpack.c.l.b16 %v1051
        %v1345 = vunpack.c.l.b16 %v1052
        %v1346 = vpack.c.b16 %v1203, %v1202
        %v1347 = vpack.c.b16 %v1205, %v1204
        %v1348 = vpack.c.b16 %v1207, %v1206
        %v1349 = vpack.c.b16 %v1209, %v1208
        %v1350 = vpack.c.b16 %v1211, %v1210
        %v1351 = vpack.c.b16 %v1213, %v1212
        %v1352 = vpack.c.b16 %v1215, %v1214
        %v1353 = vpack.c.b16 %v1217, %v1216
        %v1354 = vpack.c.b16 %v1219, %v1218
        %v1355 = vpack.c.b16 %v1221, %v1220
        %v1356 = vpack.c.b16 %v1223, %v1222
        %v1357 = vpack.c.b16 %v1225, %v1224
        %v1358 = vpack.c.b16 %v1227, %v1226
        %v1359 = vpack.c.b16 %v1229, %v1228
        %v1360 = vpack.c.b16 %v1231, %v1230
        %v1361 = vpack.c.b16 %v1233, %v1232
        %v1362 = vpack.c.b16 %v1235, %v1234
        %v1363 = vpack.c.b16 %v1237, %v1236
        %v1364 = vpack.c.b16 %v1239, %v1238
        %v1365 = vpack.c.b16 %v1241, %v1240
        %v1366 = vpack.c.b16 %v1243, %v1242
        %v1367 = vpack.c.b16 %v1245, %v1244
        %v1368 = vpack.c.b16 %v1247, %v1246
        %v1369 = vpack.c.b16 %v1249, %v1248
        %v1370 = vpack.c.b16 %v1251, %v1250
        %v1371 = vpack.c.b16 %v1253, %v1252
        %v1372 = vpack.c.b16 %v1255, %v1254
        %v1373 = vpack.c.b16 %v1257, %v1256
        %v1374 = vpack.c.b16 %v1259, %v1258
        %v1375 = vpack.c.b16 %v1261, %v1260
        %v1376 = vpack.c.b16 %v1263, %v1262
        %v1377 = vpack.c.b16 %v1265, %v1264
        %v1378 = vpack.c.b16 %v1267, %v1266
        %v1379 = vpack.c.b16 %v1269, %v1268
        %v1380 = vpack.c.b16 %v1271, %v1270
        %v1381 = vpack.c.b16 %v1273, %v1272
        %v1382 = vpack.c.b16 %v1275, %v1274
        %v1383 = vpack.c.b16 %v1277, %v1276
        %v1384 = vpack.c.b16 %v1279, %v1278
        %v1385 = vpack.c.b16 %v1281, %v1280
        %v1386 = vpack.c.b16 %v1283, %v1282
        %v1387 = vpack.c.b16 %v1285, %v1284
        %v1388 = vpack.c.b16 %v1287, %v1286
        %v1389 = vpack.c.b16 %v1289, %v1288
        %v1390 = vpack.c.b16 %v1291, %v1290
        %v1391 = vpack.c.b16 %v1293, %v1292
        %v1392 = vpack.c.b16 %v1295, %v1294
        %v1393 = vpack.c.b16 %v1297, %v1296
        %v1394 = vpack.c.b16 %v1299, %v1298
        %v1395 = vpack.c.b16 %v1301, %v1300
        %v1396 = vpack.c.b16 %v1303, %v1302
        %v1397 = vpack.c.b16 %v1305, %v1304
        %v1398 = vpack.c.b16 %v1307, %v1306
        %v1399 = vpack.c.b16 %v1309, %v1308
        %v1400 = vpack.c.b16 %v1311, %v1310
        %v1401 = vpack.c.b16 %v1313, %v1312
        %v1402 = vpack.c.b16 %v1315, %v1314
        %v1403 = vpack.c.b16 %v1317, %v1316
        %v1404 = vpack.c.b16 %v1319, %v1318
        %v1405 = vpack.c.b16 %v1321, %v1320
        %v1406 = vpack.c.b16 %v1323, %v1322
        %v1407 = vpack.c.b16 %v1325, %v1324
        %v1408 = vpack.c.b16 %v1327, %v1326
        %v1409 = vpack.c.b16 %v1329, %v1328
        %v1410 = vpack.c.b16 %v1331, %v1330
        %v1411 = vpack.c.b16 %v1333, %v1332
        %v1412 = vpack.c.b16 %v1335, %v1334
        %v1413 = vpack.c.b16 %v1337, %v1336
        %v1414 = vpack.c.b16 %v1339, %v1338
        %v1415 = vpack.c.b16 %v1341, %v1340
        %v1416 = vpack.c.b16 %v1343, %v1342
        %v1417 = vpack.c.b16 %v1345, %v1344
        %1490 = vmatprep.subr.bf16.mxu0 0
        %1491 = vmatpush1.bf16.msra.mxu0 %v1346
        %1492 = vmatprep.subr.bf16.mxu0 0
        %1493 = vmatpush1.bf16.msra.mxu0 %v1347
        %1494 = vmatprep.subr.bf16.mxu0 0
        %1495 = vmatpush1.bf16.msra.mxu0 %v1348
        %1496 = vmatprep.subr.bf16.mxu0 0
        %1497 = vmatpush1.bf16.msra.mxu0 %v1349
        %1498 = vmatprep.subr.bf16.mxu0 0
        %1499 = vmatpush1.bf16.msra.mxu0 %v1350
        %1500 = vmatprep.subr.bf16.mxu0 0
        %1501 = vmatpush1.bf16.msra.mxu0 %v1351
        %1502 = vmatprep.subr.bf16.mxu0 0
        %1503 = vmatpush1.bf16.msra.mxu0 %v1352
        %1504 = vmatprep.subr.bf16.mxu0 0
        %1505 = vmatpush1.bf16.msra.mxu0 %v1353
        %1506 = vmatprep.subr.bf16.mxu0 0
        %1507 = vmatpush1.bf16.msra.mxu0 %v1354
        %1508 = vmatprep.subr.bf16.mxu0 0
        %1509 = vmatpush1.bf16.msra.mxu0 %v1355
        %1510 = vmatprep.subr.bf16.mxu0 0
        %1511 = vmatpush1.bf16.msra.mxu0 %v1356
        %1512 = vmatprep.subr.bf16.mxu0 0
        %1513 = vmatpush1.bf16.msra.mxu0 %v1357
        %1514 = vmatprep.subr.bf16.mxu0 0
        %1515 = vmatpush1.bf16.msra.mxu0 %v1358
        %1516 = vmatprep.subr.bf16.mxu0 0
        %1517 = vmatpush1.bf16.msra.mxu0 %v1359
        %1518 = vmatprep.subr.bf16.mxu0 0
        %1519 = vmatpush1.bf16.msra.mxu0 %v1360
        %1520 = vmatprep.subr.bf16.mxu0 0
        %1521 = vmatpush1.bf16.msra.mxu0 %v1361
        %1522 = vmatprep.mubr.bf16.mxu0 %v766
        %1523 = vmatmul.mubr.bf16.gmra.mrb[0].mxu0 %v765
        %v1524 = vpop.f32.mrb[0].mxu0
        %v1525 = vadd.f32 %v1057, %v1524
        %v1526 = vpop.f32.mrb[0].mxu0
        %v1527 = vpop.f32.mrb[0].mxu0
        %v1528 = vadd.f32 %v1057, %v1527
        %v1529 = vpop.f32.mrb[0].mxu0
        %1530 = vmatprep.mubr.bf16.mxu0 %v775
        %1531 = vmatmul.mubr.bf16.gmra.mrb[0].mxu0 %v774
        %v1532 = vpop.f32.mrb[0].mxu0
        %v1533 = vadd.f32 %v1057, %v1532
        %v1534 = vpop.f32.mrb[0].mxu0
        %v1535 = vpop.f32.mrb[0].mxu0
        %v1536 = vadd.f32 %v1057, %v1535
        %v1537 = vpop.f32.mrb[0].mxu0
        %1538 = vmatprep.mubr.bf16.mxu0 %v784
        %1539 = vmatmul.mubr.bf16.gmra.mrb[0].mxu0 %v783
        %v1540 = vpop.f32.mrb[0].mxu0
        %v1541 = vadd.f32 %v1057, %v1540
        %v1542 = vpop.f32.mrb[0].mxu0
        %v1543 = vpop.f32.mrb[0].mxu0
        %v1544 = vadd.f32 %v1057, %v1543
        %v1545 = vpop.f32.mrb[0].mxu0
        %1546 = vmatprep.mubr.bf16.mxu0 %v793
        %1547 = vmatmul.mubr.bf16.gmra.mrb[0].mxu0 %v792
        %v1548 = vpop.f32.mrb[0].mxu0
        %v1549 = vadd.f32 %v1057, %v1548
        %v1550 = vpop.f32.mrb[0].mxu0
        %v1551 = vpop.f32.mrb[0].mxu0
        %v1552 = vadd.f32 %v1057, %v1551
        %v1553 = vpop.f32.mrb[0].mxu0
        %1554 = vmatprep.mubr.bf16.mxu0 %v802
        %1555 = vmatmul.mubr.bf16.gmra.mrb[0].mxu0 %v801
        %v1556 = vpop.f32.mrb[0].mxu0
        %v1557 = vadd.f32 %v1057, %v1556
        %v1558 = vpop.f32.mrb[0].mxu0
        %v1559 = vpop.f32.mrb[0].mxu0
        %v1560 = vadd.f32 %v1057, %v1559
        %v1561 = vpop.f32.mrb[0].mxu0
        %1562 = vmatprep.mubr.bf16.mxu0 %v811
        %1563 = vmatmul.mubr.bf16.gmra.mrb[0].mxu0 %v810
        %v1564 = vpop.f32.mrb[0].mxu0
        %v1565 = vadd.f32 %v1057, %v1564
        %v1566 = vpop.f32.mrb[0].mxu0
        %v1567 = vpop.f32.mrb[0].mxu0
        %v1568 = vadd.f32 %v1057, %v1567
        %v1569 = vpop.f32.mrb[0].mxu0
        %1570 = vmatprep.mubr.bf16.mxu0 %v820
        %1571 = vmatmul.mubr.bf16.gmra.mrb[0].mxu0 %v819
        %v1572 = vpop.f32.mrb[0].mxu0
        %v1573 = vadd.f32 %v1057, %v1572
        %v1574 = vpop.f32.mrb[0].mxu0
        %v1575 = vpop.f32.mrb[0].mxu0
        %v1576 = vadd.f32 %v1057, %v1575
        %v1577 = vpop.f32.mrb[0].mxu0
        %1578 = vmatprep.mubr.bf16.mxu0 %v829
        %1579 = vmatmul.mubr.bf16.gmra.mrb[0].mxu0 %v828
        %v1580 = vpop.f32.mrb[0].mxu0
        %v1581 = vadd.f32 %v1057, %v1580
        %v1582 = vpop.f32.mrb[0].mxu0
        %v1583 = vpop.f32.mrb[0].mxu0
        %v1584 = vadd.f32 %v1057, %v1583
        %v1585 = vpop.f32.mrb[0].mxu0
        %1586 = vmatprep.mubr.bf16.mxu0 %v838
        %1587 = vmatmul.mubr.bf16.gmra.mrb[0].mxu0 %v837
        %v1588 = vpop.f32.mrb[0].mxu0
        %v1589 = vadd.f32 %v1057, %v1588
        %v1590 = vpop.f32.mrb[0].mxu0
        %v1591 = vpop.f32.mrb[0].mxu0
        %v1592 = vadd.f32 %v1057, %v1591
        %v1593 = vpop.f32.mrb[0].mxu0
        %1594 = vmatprep.mubr.bf16.mxu0 %v847
        %1595 = vmatmul.mubr.bf16.gmra.mrb[0].mxu0 %v846
        %v1596 = vpop.f32.mrb[0].mxu0
        %v1597 = vadd.f32 %v1057, %v1596
        %v1598 = vpop.f32.mrb[0].mxu0
        %v1599 = vpop.f32.mrb[0].mxu0
        %v1600 = vadd.f32 %v1057, %v1599
        %v1601 = vpop.f32.mrb[0].mxu0
        %1602 = vmatprep.mubr.bf16.mxu0 %v856
        %1603 = vmatmul.mubr.bf16.gmra.mrb[0].mxu0 %v855
        %v1604 = vpop.f32.mrb[0].mxu0
        %v1605 = vadd.f32 %v1057, %v1604
        %v1606 = vpop.f32.mrb[0].mxu0
        %v1607 = vpop.f32.mrb[0].mxu0
        %v1608 = vadd.f32 %v1057, %v1607
        %v1609 = vpop.f32.mrb[0].mxu0
        %1610 = vmatprep.mubr.bf16.mxu0 %v865
        %1611 = vmatmul.mubr.bf16.gmra.mrb[0].mxu0 %v864
        %v1612 = vpop.f32.mrb[0].mxu0
        %v1613 = vadd.f32 %v1057, %v1612
        %v1614 = vpop.f32.mrb[0].mxu0
        %v1615 = vpop.f32.mrb[0].mxu0
        %v1616 = vadd.f32 %v1057, %v1615
        %v1617 = vpop.f32.mrb[0].mxu0
        %1618 = vmatprep.mubr.bf16.mxu0 %v874
        %1619 = vmatmul.mubr.bf16.gmra.mrb[0].mxu0 %v873
        %v1620 = vpop.f32.mrb[0].mxu0
        %v1621 = vadd.f32 %v1057, %v1620
        %v1622 = vpop.f32.mrb[0].mxu0
        %v1623 = vpop.f32.mrb[0].mxu0
        %v1624 = vadd.f32 %v1057, %v1623
        %v1625 = vpop.f32.mrb[0].mxu0
        %1626 = vmatprep.mubr.bf16.mxu0 %v883
        %1627 = vmatmul.mubr.bf16.gmra.mrb[0].mxu0 %v882
        %v1628 = vpop.f32.mrb[0].mxu0
        %v1629 = vadd.f32 %v1057, %v1628
        %v1630 = vpop.f32.mrb[0].mxu0
        %v1631 = vpop.f32.mrb[0].mxu0
        %v1632 = vadd.f32 %v1057, %v1631
        %v1633 = vpop.f32.mrb[0].mxu0
        %1634 = vmatprep.mubr.bf16.mxu0 %v892
        %1635 = vmatmul.mubr.bf16.gmra.mrb[0].mxu0 %v891
        %v1636 = vpop.f32.mrb[0].mxu0
        %v1637 = vadd.f32 %v1057, %v1636
        %v1638 = vpop.f32.mrb[0].mxu0
        %v1639 = vpop.f32.mrb[0].mxu0
        %v1640 = vadd.f32 %v1057, %v1639
        %v1641 = vpop.f32.mrb[0].mxu0
        %1642 = vmatprep.mubr.bf16.mxu0 %v901
        %1643 = vmatmul.mubr.bf16.gmra.mrb[0].mxu0 %v900
        %v1644 = vpop.f32.mrb[0].mxu0
        %v1645 = vadd.f32 %v1057, %v1644
        %v1646 = vpop.f32.mrb[0].mxu0
        %v1647 = vpop.f32.mrb[0].mxu0
        %v1648 = vadd.f32 %v1057, %v1647
        %v1649 = vpop.f32.mrb[0].mxu0
        %1650 = vdwg.mxu0
        %1651 = vmatprep.subr.bf16.mxu0 0
        %1652 = vmatpush1.bf16.msra.mxu0 %v1362
        %1653 = vmatprep.subr.bf16.mxu0 0
        %1654 = vmatpush1.bf16.msra.mxu0 %v1363
        %1655 = vmatprep.subr.bf16.mxu0 0
        %1656 = vmatpush1.bf16.msra.mxu0 %v1364
        %1657 = vmatprep.subr.bf16.mxu0 0
        %1658 = vmatpush1.bf16.msra.mxu0 %v1365
        %1659 = vmatprep.subr.bf16.mxu0 0
        %1660 = vmatpush1.bf16.msra.mxu0 %v1366
        %1661 = vmatprep.subr.bf16.mxu0 0
        %1662 = vmatpush1.bf16.msra.mxu0 %v1367
        %1663 = vmatprep.subr.bf16.mxu0 0
        %1664 = vmatpush1.bf16.msra.mxu0 %v1368
        %1665 = vmatprep.subr.bf16.mxu0 0
        %1666 = vmatpush1.bf16.msra.mxu0 %v1369
        %1667 = vmatprep.subr.bf16.mxu0 0
        %1668 = vmatpush1.bf16.msra.mxu0 %v1370
        %1669 = vmatprep.subr.bf16.mxu0 0
        %1670 = vmatpush1.bf16.msra.mxu0 %v1371
        %1671 = vmatprep.subr.bf16.mxu0 0
        %1672 = vmatpush1.bf16.msra.mxu0 %v1372
        %1673 = vmatprep.subr.bf16.mxu0 0
        %1674 = vmatpush1.bf16.msra.mxu0 %v1373
        %1675 = vmatprep.subr.bf16.mxu0 0
        %1676 = vmatpush1.bf16.msra.mxu0 %v1374
        %1677 = vmatprep.subr.bf16.mxu0 0
        %1678 = vmatpush1.bf16.msra.mxu0 %v1375
        %1679 = vmatprep.subr.bf16.mxu0 0
        %1680 = vmatpush1.bf16.msra.mxu0 %v1376
        %1681 = vmatprep.subr.bf16.mxu0 0
        %1682 = vmatpush1.bf16.msra.mxu0 %v1377
        %1683 = vmatprep.mubr.bf16.mxu0 %v768
        %1684 = vmatmul.mubr.bf16.gmra.mrb[0].mxu0 %v767
        %v1685 = vpop.f32.mrb[0].mxu0
        %v1686 = vadd.f32 %v1525, %v1685
        %v1687 = vpop.f32.mrb[0].mxu0
        %v1688 = vpop.f32.mrb[0].mxu0
        %v1689 = vadd.f32 %v1528, %v1688
        %v1690 = vpop.f32.mrb[0].mxu0
        %1691 = vmatprep.mubr.bf16.mxu0 %v777
        %1692 = vmatmul.mubr.bf16.gmra.mrb[0].mxu0 %v776
        %v1693 = vpop.f32.mrb[0].mxu0
        %v1694 = vadd.f32 %v1533, %v1693
        %v1695 = vpop.f32.mrb[0].mxu0
        %v1696 = vpop.f32.mrb[0].mxu0
        %v1697 = vadd.f32 %v1536, %v1696
        %v1698 = vpop.f32.mrb[0].mxu0
        %1699 = vmatprep.mubr.bf16.mxu0 %v786
        %1700 = vmatmul.mubr.bf16.gmra.mrb[0].mxu0 %v785
        %v1701 = vpop.f32.mrb[0].mxu0
        %v1702 = vadd.f32 %v1541, %v1701
        %v1703 = vpop.f32.mrb[0].mxu0
        %v1704 = vpop.f32.mrb[0].mxu0
        %v1705 = vadd.f32 %v1544, %v1704
        %v1706 = vpop.f32.mrb[0].mxu0
        %1707 = vmatprep.mubr.bf16.mxu0 %v795
        %1708 = vmatmul.mubr.bf16.gmra.mrb[0].mxu0 %v794
        %v1709 = vpop.f32.mrb[0].mxu0
        %v1710 = vadd.f32 %v1549, %v1709
        %v1711 = vpop.f32.mrb[0].mxu0
        %v1712 = vpop.f32.mrb[0].mxu0
        %v1713 = vadd.f32 %v1552, %v1712
        %v1714 = vpop.f32.mrb[0].mxu0
        %1715 = vmatprep.mubr.bf16.mxu0 %v804
        %1716 = vmatmul.mubr.bf16.gmra.mrb[0].mxu0 %v803
        %v1717 = vpop.f32.mrb[0].mxu0
        %v1718 = vadd.f32 %v1557, %v1717
        %v1719 = vpop.f32.mrb[0].mxu0
        %v1720 = vpop.f32.mrb[0].mxu0
        %v1721 = vadd.f32 %v1560, %v1720
        %v1722 = vpop.f32.mrb[0].mxu0
        %1723 = vmatprep.mubr.bf16.mxu0 %v813
        %1724 = vmatmul.mubr.bf16.gmra.mrb[0].mxu0 %v812
        %v1725 = vpop.f32.mrb[0].mxu0
        %v1726 = vadd.f32 %v1565, %v1725
        %v1727 = vpop.f32.mrb[0].mxu0
        %v1728 = vpop.f32.mrb[0].mxu0
        %v1729 = vadd.f32 %v1568, %v1728
        %v1730 = vpop.f32.mrb[0].mxu0
        %1731 = vmatprep.mubr.bf16.mxu0 %v822
        %1732 = vmatmul.mubr.bf16.gmra.mrb[0].mxu0 %v821
        %v1733 = vpop.f32.mrb[0].mxu0
        %v1734 = vadd.f32 %v1573, %v1733
        %v1735 = vpop.f32.mrb[0].mxu0
        %v1736 = vpop.f32.mrb[0].mxu0
        %v1737 = vadd.f32 %v1576, %v1736
        %v1738 = vpop.f32.mrb[0].mxu0
        %1739 = vmatprep.mubr.bf16.mxu0 %v831
        %1740 = vmatmul.mubr.bf16.gmra.mrb[0].mxu0 %v830
        %v1741 = vpop.f32.mrb[0].mxu0
        %v1742 = vadd.f32 %v1581, %v1741
        %v1743 = vpop.f32.mrb[0].mxu0
        %v1744 = vpop.f32.mrb[0].mxu0
        %v1745 = vadd.f32 %v1584, %v1744
        %v1746 = vpop.f32.mrb[0].mxu0
        %1747 = vmatprep.mubr.bf16.mxu0 %v840
        %1748 = vmatmul.mubr.bf16.gmra.mrb[0].mxu0 %v839
        %v1749 = vpop.f32.mrb[0].mxu0
        %v1750 = vadd.f32 %v1589, %v1749
        %v1751 = vpop.f32.mrb[0].mxu0
        %v1752 = vpop.f32.mrb[0].mxu0
        %v1753 = vadd.f32 %v1592, %v1752
        %v1754 = vpop.f32.mrb[0].mxu0
        %1755 = vmatprep.mubr.bf16.mxu0 %v849
        %1756 = vmatmul.mubr.bf16.gmra.mrb[0].mxu0 %v848
        %v1757 = vpop.f32.mrb[0].mxu0
        %v1758 = vadd.f32 %v1597, %v1757
        %v1759 = vpop.f32.mrb[0].mxu0
        %v1760 = vpop.f32.mrb[0].mxu0
        %v1761 = vadd.f32 %v1600, %v1760
        %v1762 = vpop.f32.mrb[0].mxu0
        %1763 = vmatprep.mubr.bf16.mxu0 %v858
        %1764 = vmatmul.mubr.bf16.gmra.mrb[0].mxu0 %v857
        %v1765 = vpop.f32.mrb[0].mxu0
        %v1766 = vadd.f32 %v1605, %v1765
        %v1767 = vpop.f32.mrb[0].mxu0
        %v1768 = vpop.f32.mrb[0].mxu0
        %v1769 = vadd.f32 %v1608, %v1768
        %v1770 = vpop.f32.mrb[0].mxu0
        %1771 = vmatprep.mubr.bf16.mxu0 %v867
        %1772 = vmatmul.mubr.bf16.gmra.mrb[0].mxu0 %v866
        %v1773 = vpop.f32.mrb[0].mxu0
        %v1774 = vadd.f32 %v1613, %v1773
        %v1775 = vpop.f32.mrb[0].mxu0
        %v1776 = vpop.f32.mrb[0].mxu0
        %v1777 = vadd.f32 %v1616, %v1776
        %v1778 = vpop.f32.mrb[0].mxu0
        %1779 = vmatprep.mubr.bf16.mxu0 %v876
        %1780 = vmatmul.mubr.bf16.gmra.mrb[0].mxu0 %v875
        %v1781 = vpop.f32.mrb[0].mxu0
        %v1782 = vadd.f32 %v1621, %v1781
        %v1783 = vpop.f32.mrb[0].mxu0
        %v1784 = vpop.f32.mrb[0].mxu0
        %v1785 = vadd.f32 %v1624, %v1784
        %v1786 = vpop.f32.mrb[0].mxu0
        %1787 = vmatprep.mubr.bf16.mxu0 %v885
        %1788 = vmatmul.mubr.bf16.gmra.mrb[0].mxu0 %v884
        %v1789 = vpop.f32.mrb[0].mxu0
        %v1790 = vadd.f32 %v1629, %v1789
        %v1791 = vpop.f32.mrb[0].mxu0
        %v1792 = vpop.f32.mrb[0].mxu0
        %v1793 = vadd.f32 %v1632, %v1792
        %v1794 = vpop.f32.mrb[0].mxu0
        %1795 = vmatprep.mubr.bf16.mxu0 %v894
        %1796 = vmatmul.mubr.bf16.gmra.mrb[0].mxu0 %v893
        %v1797 = vpop.f32.mrb[0].mxu0
        %v1798 = vadd.f32 %v1637, %v1797
        %v1799 = vpop.f32.mrb[0].mxu0
        %v1800 = vpop.f32.mrb[0].mxu0
        %v1801 = vadd.f32 %v1640, %v1800
        %v1802 = vpop.f32.mrb[0].mxu0
        %1803 = vmatprep.mubr.bf16.mxu0 %v903
        %1804 = vmatmul.mubr.bf16.gmra.mrb[0].mxu0 %v902
        %v1805 = vpop.f32.mrb[0].mxu0
        %v1806 = vadd.f32 %v1645, %v1805
        %v1807 = vpop.f32.mrb[0].mxu0
        %v1808 = vpop.f32.mrb[0].mxu0
        %v1809 = vadd.f32 %v1648, %v1808
        %v1810 = vpop.f32.mrb[0].mxu0
        %1811 = vdwg.mxu0
        %1812 = vmatprep.subr.bf16.mxu0 0
        %1813 = vmatpush1.bf16.msra.mxu0 %v1378
        %1814 = vmatprep.subr.bf16.mxu0 0
        %1815 = vmatpush1.bf16.msra.mxu0 %v1379
        %1816 = vmatprep.subr.bf16.mxu0 0
        %1817 = vmatpush1.bf16.msra.mxu0 %v1380
        %1818 = vmatprep.subr.bf16.mxu0 0
        %1819 = vmatpush1.bf16.msra.mxu0 %v1381
        %1820 = vmatprep.subr.bf16.mxu0 0
        %1821 = vmatpush1.bf16.msra.mxu0 %v1382
        %1822 = vmatprep.subr.bf16.mxu0 0
        %1823 = vmatpush1.bf16.msra.mxu0 %v1383
        %1824 = vmatprep.subr.bf16.mxu0 0
        %1825 = vmatpush1.bf16.msra.mxu0 %v1384
        %1826 = vmatprep.subr.bf16.mxu0 0
        %1827 = vmatpush1.bf16.msra.mxu0 %v1385
        %1828 = vmatprep.subr.bf16.mxu0 0
        %1829 = vmatpush1.bf16.msra.mxu0 %v1386
        %1830 = vmatprep.subr.bf16.mxu0 0
        %1831 = vmatpush1.bf16.msra.mxu0 %v1387
        %1832 = vmatprep.subr.bf16.mxu0 0
        %1833 = vmatpush1.bf16.msra.mxu0 %v1388
        %1834 = vmatprep.subr.bf16.mxu0 0
        %1835 = vmatpush1.bf16.msra.mxu0 %v1389
        %1836 = vmatprep.subr.bf16.mxu0 0
        %1837 = vmatpush1.bf16.msra.mxu0 %v1390
        %1838 = vmatprep.subr.bf16.mxu0 0
        %1839 = vmatpush1.bf16.msra.mxu0 %v1391
        %1840 = vmatprep.subr.bf16.mxu0 0
        %1841 = vmatpush1.bf16.msra.mxu0 %v1392
        %1842 = vmatprep.subr.bf16.mxu0 0
        %1843 = vmatpush1.bf16.msra.mxu0 %v1393
        %1844 = vmatprep.mubr.bf16.mxu0 %v770
        %1845 = vmatmul.mubr.bf16.gmra.mrb[0].mxu0 %v769
        %v1846 = vpop.f32.mrb[0].mxu0
        %v1847 = vadd.f32 %v1686, %v1846
        %v1848 = vpop.f32.mrb[0].mxu0
        %v1849 = vpop.f32.mrb[0].mxu0
        %v1850 = vadd.f32 %v1689, %v1849
        %v1851 = vpop.f32.mrb[0].mxu0
        %1852 = vmatprep.mubr.bf16.mxu0 %v779
        %1853 = vmatmul.mubr.bf16.gmra.mrb[0].mxu0 %v778
        %v1854 = vpop.f32.mrb[0].mxu0
        %v1855 = vadd.f32 %v1694, %v1854
        %v1856 = vpop.f32.mrb[0].mxu0
        %v1857 = vpop.f32.mrb[0].mxu0
        %v1858 = vadd.f32 %v1697, %v1857
        %v1859 = vpop.f32.mrb[0].mxu0
        %1860 = vmatprep.mubr.bf16.mxu0 %v788
        %1861 = vmatmul.mubr.bf16.gmra.mrb[0].mxu0 %v787
        %v1862 = vpop.f32.mrb[0].mxu0
        %v1863 = vadd.f32 %v1702, %v1862
        %v1864 = vpop.f32.mrb[0].mxu0
        %v1865 = vpop.f32.mrb[0].mxu0
        %v1866 = vadd.f32 %v1705, %v1865
        %v1867 = vpop.f32.mrb[0].mxu0
        %1868 = vmatprep.mubr.bf16.mxu0 %v797
        %1869 = vmatmul.mubr.bf16.gmra.mrb[0].mxu0 %v796
        %v1870 = vpop.f32.mrb[0].mxu0
        %v1871 = vadd.f32 %v1710, %v1870
        %v1872 = vpop.f32.mrb[0].mxu0
        %v1873 = vpop.f32.mrb[0].mxu0
        %v1874 = vadd.f32 %v1713, %v1873
        %v1875 = vpop.f32.mrb[0].mxu0
        %1876 = vmatprep.mubr.bf16.mxu0 %v806
        %1877 = vmatmul.mubr.bf16.gmra.mrb[0].mxu0 %v805
        %v1878 = vpop.f32.mrb[0].mxu0
        %v1879 = vadd.f32 %v1718, %v1878
        %v1880 = vpop.f32.mrb[0].mxu0
        %v1881 = vpop.f32.mrb[0].mxu0
        %v1882 = vadd.f32 %v1721, %v1881
        %v1883 = vpop.f32.mrb[0].mxu0
        %1884 = vmatprep.mubr.bf16.mxu0 %v815
        %1885 = vmatmul.mubr.bf16.gmra.mrb[0].mxu0 %v814
        %v1886 = vpop.f32.mrb[0].mxu0
        %v1887 = vadd.f32 %v1726, %v1886
        %v1888 = vpop.f32.mrb[0].mxu0
        %v1889 = vpop.f32.mrb[0].mxu0
        %v1890 = vadd.f32 %v1729, %v1889
        %v1891 = vpop.f32.mrb[0].mxu0
        %1892 = vmatprep.mubr.bf16.mxu0 %v824
        %1893 = vmatmul.mubr.bf16.gmra.mrb[0].mxu0 %v823
        %v1894 = vpop.f32.mrb[0].mxu0
        %v1895 = vadd.f32 %v1734, %v1894
        %v1896 = vpop.f32.mrb[0].mxu0
        %v1897 = vpop.f32.mrb[0].mxu0
        %v1898 = vadd.f32 %v1737, %v1897
        %v1899 = vpop.f32.mrb[0].mxu0
        %1900 = vmatprep.mubr.bf16.mxu0 %v833
        %1901 = vmatmul.mubr.bf16.gmra.mrb[0].mxu0 %v832
        %v1902 = vpop.f32.mrb[0].mxu0
        %v1903 = vadd.f32 %v1742, %v1902
        %v1904 = vpop.f32.mrb[0].mxu0
        %v1905 = vpop.f32.mrb[0].mxu0
        %v1906 = vadd.f32 %v1745, %v1905
        %v1907 = vpop.f32.mrb[0].mxu0
        %1908 = vmatprep.mubr.bf16.mxu0 %v842
        %1909 = vmatmul.mubr.bf16.gmra.mrb[0].mxu0 %v841
        %v1910 = vpop.f32.mrb[0].mxu0
        %v1911 = vadd.f32 %v1750, %v1910
        %v1912 = vpop.f32.mrb[0].mxu0
        %v1913 = vpop.f32.mrb[0].mxu0
        %v1914 = vadd.f32 %v1753, %v1913
        %v1915 = vpop.f32.mrb[0].mxu0
        %1916 = vmatprep.mubr.bf16.mxu0 %v851
        %1917 = vmatmul.mubr.bf16.gmra.mrb[0].mxu0 %v850
        %v1918 = vpop.f32.mrb[0].mxu0
        %v1919 = vadd.f32 %v1758, %v1918
        %v1920 = vpop.f32.mrb[0].mxu0
        %v1921 = vpop.f32.mrb[0].mxu0
        %v1922 = vadd.f32 %v1761, %v1921
        %v1923 = vpop.f32.mrb[0].mxu0
        %1924 = vmatprep.mubr.bf16.mxu0 %v860
        %1925 = vmatmul.mubr.bf16.gmra.mrb[0].mxu0 %v859
        %v1926 = vpop.f32.mrb[0].mxu0
        %v1927 = vadd.f32 %v1766, %v1926
        %v1928 = vpop.f32.mrb[0].mxu0
        %v1929 = vpop.f32.mrb[0].mxu0
        %v1930 = vadd.f32 %v1769, %v1929
        %v1931 = vpop.f32.mrb[0].mxu0
        %1932 = vmatprep.mubr.bf16.mxu0 %v869
        %1933 = vmatmul.mubr.bf16.gmra.mrb[0].mxu0 %v868
        %v1934 = vpop.f32.mrb[0].mxu0
        %v1935 = vadd.f32 %v1774, %v1934
        %v1936 = vpop.f32.mrb[0].mxu0
        %v1937 = vpop.f32.mrb[0].mxu0
        %v1938 = vadd.f32 %v1777, %v1937
        %v1939 = vpop.f32.mrb[0].mxu0
        %1940 = vmatprep.mubr.bf16.mxu0 %v878
        %1941 = vmatmul.mubr.bf16.gmra.mrb[0].mxu0 %v877
        %v1942 = vpop.f32.mrb[0].mxu0
        %v1943 = vadd.f32 %v1782, %v1942
        %v1944 = vpop.f32.mrb[0].mxu0
        %v1945 = vpop.f32.mrb[0].mxu0
        %v1946 = vadd.f32 %v1785, %v1945
        %v1947 = vpop.f32.mrb[0].mxu0
        %1948 = vmatprep.mubr.bf16.mxu0 %v887
        %1949 = vmatmul.mubr.bf16.gmra.mrb[0].mxu0 %v886
        %v1950 = vpop.f32.mrb[0].mxu0
        %v1951 = vadd.f32 %v1790, %v1950
        %v1952 = vpop.f32.mrb[0].mxu0
        %v1953 = vpop.f32.mrb[0].mxu0
        %v1954 = vadd.f32 %v1793, %v1953
        %v1955 = vpop.f32.mrb[0].mxu0
        %1956 = vmatprep.mubr.bf16.mxu0 %v896
        %1957 = vmatmul.mubr.bf16.gmra.mrb[0].mxu0 %v895
        %v1958 = vpop.f32.mrb[0].mxu0
        %v1959 = vadd.f32 %v1798, %v1958
        %v1960 = vpop.f32.mrb[0].mxu0
        %v1961 = vpop.f32.mrb[0].mxu0
        %v1962 = vadd.f32 %v1801, %v1961
        %v1963 = vpop.f32.mrb[0].mxu0
        %1964 = vmatprep.mubr.bf16.mxu0 %v905
        %1965 = vmatmul.mubr.bf16.gmra.mrb[0].mxu0 %v904
        %v1966 = vpop.f32.mrb[0].mxu0
        %v1967 = vadd.f32 %v1806, %v1966
        %v1968 = vpop.f32.mrb[0].mxu0
        %v1969 = vpop.f32.mrb[0].mxu0
        %v1970 = vadd.f32 %v1809, %v1969
        %v1971 = vpop.f32.mrb[0].mxu0
        %1972 = vdwg.mxu0
        %1973 = vmatprep.subr.bf16.mxu0 0
        %1974 = vmatpush1.bf16.msra.mxu0 %v1394
        %1975 = vmatprep.subr.bf16.mxu0 0
        %1976 = vmatpush1.bf16.msra.mxu0 %v1395
        %1977 = vmatprep.subr.bf16.mxu0 0
        %1978 = vmatpush1.bf16.msra.mxu0 %v1396
        %1979 = vmatprep.subr.bf16.mxu0 0
        %1980 = vmatpush1.bf16.msra.mxu0 %v1397
        %1981 = vmatprep.subr.bf16.mxu0 0
        %1982 = vmatpush1.bf16.msra.mxu0 %v1398
        %1983 = vmatprep.subr.bf16.mxu0 0
        %1984 = vmatpush1.bf16.msra.mxu0 %v1399
        %1985 = vmatprep.subr.bf16.mxu0 0
        %1986 = vmatpush1.bf16.msra.mxu0 %v1400
        %1987 = vmatprep.subr.bf16.mxu0 0
        %1988 = vmatpush1.bf16.msra.mxu0 %v1401
        %1989 = vmatprep.subr.bf16.mxu0 0
        %1990 = vmatpush1.bf16.msra.mxu0 %v1402
        %1991 = vmatprep.subr.bf16.mxu0 0
        %1992 = vmatpush1.bf16.msra.mxu0 %v1403
        %1993 = vmatprep.subr.bf16.mxu0 0
        %1994 = vmatpush1.bf16.msra.mxu0 %v1404
        %1995 = vmatprep.subr.bf16.mxu0 0
        %1996 = vmatpush1.bf16.msra.mxu0 %v1405
        %1997 = vmatprep.subr.bf16.mxu0 0
        %1998 = vmatpush1.bf16.msra.mxu0 %v1406
        %1999 = vmatprep.subr.bf16.mxu0 0
        %2000 = vmatpush1.bf16.msra.mxu0 %v1407
        %2001 = vmatprep.subr.bf16.mxu0 0
        %2002 = vmatpush1.bf16.msra.mxu0 %v1408
        %2003 = vmatprep.subr.bf16.mxu0 0
        %2004 = vmatpush1.bf16.msra.mxu0 %v1409
        %2005 = vmatprep.mubr.bf16.mxu0 %v772
        %2006 = vmatmul.mubr.bf16.gmra.mrb[0].mxu0 %v771
        %v2007 = vpop.f32.mrb[0].mxu0
        %v2008 = vadd.f32 %v1847, %v2007
        %v2009 = vpop.f32.mrb[0].mxu0
        %v2010 = vpop.f32.mrb[0].mxu0
        %v2011 = vadd.f32 %v1850, %v2010
        %v2012 = vpop.f32.mrb[0].mxu0
        %2013 = vmatprep.mubr.bf16.mxu0 %v781
        %2014 = vmatmul.mubr.bf16.gmra.mrb[0].mxu0 %v780
        %v2015 = vpop.f32.mrb[0].mxu0
        %v2016 = vadd.f32 %v1855, %v2015
        %v2017 = vpop.f32.mrb[0].mxu0
        %v2018 = vpop.f32.mrb[0].mxu0
        %v2019 = vadd.f32 %v1858, %v2018
        %v2020 = vpop.f32.mrb[0].mxu0
        %2021 = vmatprep.mubr.bf16.mxu0 %v790
        %2022 = vmatmul.mubr.bf16.gmra.mrb[0].mxu0 %v789
        %v2023 = vpop.f32.mrb[0].mxu0
        %v2024 = vadd.f32 %v1863, %v2023
        %v2025 = vpop.f32.mrb[0].mxu0
        %v2026 = vpop.f32.mrb[0].mxu0
        %v2027 = vadd.f32 %v1866, %v2026
        %v2028 = vpop.f32.mrb[0].mxu0
        %2029 = vmatprep.mubr.bf16.mxu0 %v799
        %2030 = vmatmul.mubr.bf16.gmra.mrb[0].mxu0 %v798
        %v2031 = vpop.f32.mrb[0].mxu0
        %v2032 = vadd.f32 %v1871, %v2031
        %v2033 = vpop.f32.mrb[0].mxu0
        %v2034 = vpop.f32.mrb[0].mxu0
        %v2035 = vadd.f32 %v1874, %v2034
        %v2036 = vpop.f32.mrb[0].mxu0
        %2037 = vmatprep.mubr.bf16.mxu0 %v808
        %2038 = vmatmul.mubr.bf16.gmra.mrb[0].mxu0 %v807
        %v2039 = vpop.f32.mrb[0].mxu0
        %v2040 = vadd.f32 %v1879, %v2039
        %v2041 = vpop.f32.mrb[0].mxu0
        %v2042 = vpop.f32.mrb[0].mxu0
        %v2043 = vadd.f32 %v1882, %v2042
        %v2044 = vpop.f32.mrb[0].mxu0
        %2045 = vmatprep.mubr.bf16.mxu0 %v817
        %2046 = vmatmul.mubr.bf16.gmra.mrb[0].mxu0 %v816
        %v2047 = vpop.f32.mrb[0].mxu0
        %v2048 = vadd.f32 %v1887, %v2047
        %v2049 = vpop.f32.mrb[0].mxu0
        %v2050 = vpop.f32.mrb[0].mxu0
        %v2051 = vadd.f32 %v1890, %v2050
        %v2052 = vpop.f32.mrb[0].mxu0
        %2053 = vmatprep.mubr.bf16.mxu0 %v826
        %2054 = vmatmul.mubr.bf16.gmra.mrb[0].mxu0 %v825
        %v2055 = vpop.f32.mrb[0].mxu0
        %v2056 = vadd.f32 %v1895, %v2055
        %v2057 = vpop.f32.mrb[0].mxu0
        %v2058 = vpop.f32.mrb[0].mxu0
        %v2059 = vadd.f32 %v1898, %v2058
        %v2060 = vpop.f32.mrb[0].mxu0
        %2061 = vmatprep.mubr.bf16.mxu0 %v835
        %2062 = vmatmul.mubr.bf16.gmra.mrb[0].mxu0 %v834
        %v2063 = vpop.f32.mrb[0].mxu0
        %v2064 = vadd.f32 %v1903, %v2063
        %v2065 = vpop.f32.mrb[0].mxu0
        %v2066 = vpop.f32.mrb[0].mxu0
        %v2067 = vadd.f32 %v1906, %v2066
        %v2068 = vpop.f32.mrb[0].mxu0
        %2069 = vmatprep.mubr.bf16.mxu0 %v844
        %2070 = vmatmul.mubr.bf16.gmra.mrb[0].mxu0 %v843
        %v2071 = vpop.f32.mrb[0].mxu0
        %v2072 = vadd.f32 %v1911, %v2071
        %v2073 = vpop.f32.mrb[0].mxu0
        %v2074 = vpop.f32.mrb[0].mxu0
        %v2075 = vadd.f32 %v1914, %v2074
        %v2076 = vpop.f32.mrb[0].mxu0
        %2077 = vmatprep.mubr.bf16.mxu0 %v853
        %2078 = vmatmul.mubr.bf16.gmra.mrb[0].mxu0 %v852
        %v2079 = vpop.f32.mrb[0].mxu0
        %v2080 = vadd.f32 %v1919, %v2079
        %v2081 = vpop.f32.mrb[0].mxu0
        %v2082 = vpop.f32.mrb[0].mxu0
        %v2083 = vadd.f32 %v1922, %v2082
        %v2084 = vpop.f32.mrb[0].mxu0
        %2085 = vmatprep.mubr.bf16.mxu0 %v862
        %2086 = vmatmul.mubr.bf16.gmra.mrb[0].mxu0 %v861
        %v2087 = vpop.f32.mrb[0].mxu0
        %v2088 = vadd.f32 %v1927, %v2087
        %v2089 = vpop.f32.mrb[0].mxu0
        %v2090 = vpop.f32.mrb[0].mxu0
        %v2091 = vadd.f32 %v1930, %v2090
        %v2092 = vpop.f32.mrb[0].mxu0
        %2093 = vmatprep.mubr.bf16.mxu0 %v871
        %2094 = vmatmul.mubr.bf16.gmra.mrb[0].mxu0 %v870
        %v2095 = vpop.f32.mrb[0].mxu0
        %v2096 = vadd.f32 %v1935, %v2095
        %v2097 = vpop.f32.mrb[0].mxu0
        %v2098 = vpop.f32.mrb[0].mxu0
        %v2099 = vadd.f32 %v1938, %v2098
        %v2100 = vpop.f32.mrb[0].mxu0
        %2101 = vmatprep.mubr.bf16.mxu0 %v880
        %2102 = vmatmul.mubr.bf16.gmra.mrb[0].mxu0 %v879
        %v2103 = vpop.f32.mrb[0].mxu0
        %v2104 = vadd.f32 %v1943, %v2103
        %v2105 = vpop.f32.mrb[0].mxu0
        %v2106 = vpop.f32.mrb[0].mxu0
        %v2107 = vadd.f32 %v1946, %v2106
        %v2108 = vpop.f32.mrb[0].mxu0
        %2109 = vmatprep.mubr.bf16.mxu0 %v889
        %2110 = vmatmul.mubr.bf16.gmra.mrb[0].mxu0 %v888
        %v2111 = vpop.f32.mrb[0].mxu0
        %v2112 = vadd.f32 %v1951, %v2111
        %v2113 = vpop.f32.mrb[0].mxu0
        %v2114 = vpop.f32.mrb[0].mxu0
        %v2115 = vadd.f32 %v1954, %v2114
        %v2116 = vpop.f32.mrb[0].mxu0
        %2117 = vmatprep.mubr.bf16.mxu0 %v898
        %2118 = vmatmul.mubr.bf16.gmra.mrb[0].mxu0 %v897
        %v2119 = vpop.f32.mrb[0].mxu0
        %v2120 = vadd.f32 %v1959, %v2119
        %v2121 = vpop.f32.mrb[0].mxu0
        %v2122 = vpop.f32.mrb[0].mxu0
        %v2123 = vadd.f32 %v1962, %v2122
        %v2124 = vpop.f32.mrb[0].mxu0
        %2125 = vmatprep.mubr.bf16.mxu0 %v907
        %2126 = vmatmul.mubr.bf16.gmra.mrb[0].mxu0 %v906
        %v2127 = vpop.f32.mrb[0].mxu0
        %v2128 = vadd.f32 %v1967, %v2127
        %v2129 = vpop.f32.mrb[0].mxu0
        %v2130 = vpop.f32.mrb[0].mxu0
        %v2131 = vadd.f32 %v1970, %v2130
        %v2132 = vpop.f32.mrb[0].mxu0
        %2133 = vdwg.mxu0
        %2134 = vmatprep.subr.bf16.mxu0 0
        %2135 = vmatpush1.bf16.msra.mxu0 %v1410
        %2136 = vmatprep.subr.bf16.mxu0 0
        %2137 = vmatpush1.bf16.msra.mxu0 %v1411
        %2138 = vmatprep.subr.bf16.mxu0 0
        %2139 = vmatpush1.bf16.msra.mxu0 %v1412
        %2140 = vmatprep.subr.bf16.mxu0 0
        %2141 = vmatpush1.bf16.msra.mxu0 %v1413
        %2142 = vmatprep.subr.bf16.mxu0 0
        %2143 = vmatpush1.bf16.msra.mxu0 %v1414
        %2144 = vmatprep.subr.bf16.mxu0 0
        %2145 = vmatpush1.bf16.msra.mxu0 %v1415
        %2146 = vmatprep.subr.bf16.mxu0 0
        %2147 = vmatpush1.bf16.msra.mxu0 %v1416
        %2148 = vmatprep.subr.bf16.mxu0 0
        %2149 = vmatpush1.bf16.msra.mxu0 %v1417
        %2150 = vmatprep.subr.bf16.mxu0 0
        %2151 = vmatpush1.bf16.msra.mxu0 0
        %2152 = vmatprep.subr.bf16.mxu0 0
        %2153 = vmatpush1.bf16.msra.mxu0 0
        %2154 = vmatprep.subr.bf16.mxu0 0
        %2155 = vmatpush1.bf16.msra.mxu0 0
        %2156 = vmatprep.subr.bf16.mxu0 0
        %2157 = vmatpush1.bf16.msra.mxu0 0
        %2158 = vmatprep.subr.bf16.mxu0 0
        %2159 = vmatpush1.bf16.msra.mxu0 0
        %2160 = vmatprep.subr.bf16.mxu0 0
        %2161 = vmatpush1.bf16.msra.mxu0 0
        %2162 = vmatprep.subr.bf16.mxu0 0
        %2163 = vmatpush1.bf16.msra.mxu0 0
        %2164 = vmatprep.subr.bf16.mxu0 0
        %2165 = vmatpush1.bf16.msra.mxu0 0
        %2166 = vmatprep.mubr.bf16.mxu0 0
        %2167 = vmatmul.mubr.bf16.gmra.mrb[0].mxu0 %v773
        %v2168 = vpop.f32.mrb[0].mxu0
        %v2169 = vadd.f32 %v2008, %v2168
        %v2170 = vpop.f32.mrb[0].mxu0
        %v2171 = vpop.f32.mrb[0].mxu0
        %v2172 = vadd.f32 %v2011, %v2171
        %v2173 = vpop.f32.mrb[0].mxu0
        %2174 = vmatprep.mubr.bf16.mxu0 0
        %2175 = vmatmul.mubr.bf16.gmra.mrb[0].mxu0 %v782
        %v2176 = vpop.f32.mrb[0].mxu0
        %v2177 = vadd.f32 %v2016, %v2176
        %v2178 = vpop.f32.mrb[0].mxu0
        %v2179 = vpop.f32.mrb[0].mxu0
        %v2180 = vadd.f32 %v2019, %v2179
        %v2181 = vpop.f32.mrb[0].mxu0
        %2182 = vmatprep.mubr.bf16.mxu0 0
        %2183 = vmatmul.mubr.bf16.gmra.mrb[0].mxu0 %v791
        %v2184 = vpop.f32.mrb[0].mxu0
        %v2185 = vadd.f32 %v2024, %v2184
        %v2186 = vpop.f32.mrb[0].mxu0
        %v2187 = vpop.f32.mrb[0].mxu0
        %v2188 = vadd.f32 %v2027, %v2187
        %v2189 = vpop.f32.mrb[0].mxu0
        %2190 = vmatprep.mubr.bf16.mxu0 0
        %2191 = vmatmul.mubr.bf16.gmra.mrb[0].mxu0 %v800
        %v2192 = vpop.f32.mrb[0].mxu0
        %v2193 = vadd.f32 %v2032, %v2192
        %v2194 = vpop.f32.mrb[0].mxu0
        %v2195 = vpop.f32.mrb[0].mxu0
        %v2196 = vadd.f32 %v2035, %v2195
        %v2197 = vpop.f32.mrb[0].mxu0
        %2198 = vmatprep.mubr.bf16.mxu0 0
        %2199 = vmatmul.mubr.bf16.gmra.mrb[0].mxu0 %v809
        %v2200 = vpop.f32.mrb[0].mxu0
        %v2201 = vadd.f32 %v2040, %v2200
        %v2202 = vpop.f32.mrb[0].mxu0
        %v2203 = vpop.f32.mrb[0].mxu0
        %v2204 = vadd.f32 %v2043, %v2203
        %v2205 = vpop.f32.mrb[0].mxu0
        %2206 = vmatprep.mubr.bf16.mxu0 0
        %2207 = vmatmul.mubr.bf16.gmra.mrb[0].mxu0 %v818
        %v2208 = vpop.f32.mrb[0].mxu0
        %v2209 = vadd.f32 %v2048, %v2208
        %v2210 = vpop.f32.mrb[0].mxu0
        %v2211 = vpop.f32.mrb[0].mxu0
        %v2212 = vadd.f32 %v2051, %v2211
        %v2213 = vpop.f32.mrb[0].mxu0
        %2214 = vmatprep.mubr.bf16.mxu0 0
        %2215 = vmatmul.mubr.bf16.gmra.mrb[0].mxu0 %v827
        %v2216 = vpop.f32.mrb[0].mxu0
        %v2217 = vadd.f32 %v2056, %v2216
        %v2218 = vpop.f32.mrb[0].mxu0
        %v2219 = vpop.f32.mrb[0].mxu0
        %v2220 = vadd.f32 %v2059, %v2219
        %v2221 = vpop.f32.mrb[0].mxu0
        %2222 = vmatprep.mubr.bf16.mxu0 0
        %2223 = vmatmul.mubr.bf16.gmra.mrb[0].mxu0 %v836
        %v2224 = vpop.f32.mrb[0].mxu0
        %v2225 = vadd.f32 %v2064, %v2224
        %v2226 = vpop.f32.mrb[0].mxu0
        %v2227 = vpop.f32.mrb[0].mxu0
        %v2228 = vadd.f32 %v2067, %v2227
        %v2229 = vpop.f32.mrb[0].mxu0
        %2230 = vmatprep.mubr.bf16.mxu0 0
        %2231 = vmatmul.mubr.bf16.gmra.mrb[0].mxu0 %v845
        %v2232 = vpop.f32.mrb[0].mxu0
        %v2233 = vadd.f32 %v2072, %v2232
        %v2234 = vpop.f32.mrb[0].mxu0
        %v2235 = vpop.f32.mrb[0].mxu0
        %v2236 = vadd.f32 %v2075, %v2235
        %v2237 = vpop.f32.mrb[0].mxu0
        %2238 = vmatprep.mubr.bf16.mxu0 0
        %2239 = vmatmul.mubr.bf16.gmra.mrb[0].mxu0 %v854
        %v2240 = vpop.f32.mrb[0].mxu0
        %v2241 = vadd.f32 %v2080, %v2240
        %v2242 = vpop.f32.mrb[0].mxu0
        %v2243 = vpop.f32.mrb[0].mxu0
        %v2244 = vadd.f32 %v2083, %v2243
        %v2245 = vpop.f32.mrb[0].mxu0
        %2246 = vmatprep.mubr.bf16.mxu0 0
        %2247 = vmatmul.mubr.bf16.gmra.mrb[0].mxu0 %v863
        %v2248 = vpop.f32.mrb[0].mxu0
        %v2249 = vadd.f32 %v2088, %v2248
        %v2250 = vpop.f32.mrb[0].mxu0
        %v2251 = vpop.f32.mrb[0].mxu0
        %v2252 = vadd.f32 %v2091, %v2251
        %v2253 = vpop.f32.mrb[0].mxu0
        %2254 = vmatprep.mubr.bf16.mxu0 0
        %2255 = vmatmul.mubr.bf16.gmra.mrb[0].mxu0 %v872
        %v2256 = vpop.f32.mrb[0].mxu0
        %v2257 = vadd.f32 %v2096, %v2256
        %v2258 = vpop.f32.mrb[0].mxu0
        %v2259 = vpop.f32.mrb[0].mxu0
        %v2260 = vadd.f32 %v2099, %v2259
        %v2261 = vpop.f32.mrb[0].mxu0
        %2262 = vmatprep.mubr.bf16.mxu0 0
        %2263 = vmatmul.mubr.bf16.gmra.mrb[0].mxu0 %v881
        %v2264 = vpop.f32.mrb[0].mxu0
        %v2265 = vadd.f32 %v2104, %v2264
        %v2266 = vpop.f32.mrb[0].mxu0
        %v2267 = vpop.f32.mrb[0].mxu0
        %v2268 = vadd.f32 %v2107, %v2267
        %v2269 = vpop.f32.mrb[0].mxu0
        %2270 = vmatprep.mubr.bf16.mxu0 0
        %2271 = vmatmul.mubr.bf16.gmra.mrb[0].mxu0 %v890
        %v2272 = vpop.f32.mrb[0].mxu0
        %v2273 = vadd.f32 %v2112, %v2272
        %v2274 = vpop.f32.mrb[0].mxu0
        %v2275 = vpop.f32.mrb[0].mxu0
        %v2276 = vadd.f32 %v2115, %v2275
        %v2277 = vpop.f32.mrb[0].mxu0
        %2278 = vmatprep.mubr.bf16.mxu0 0
        %2279 = vmatmul.mubr.bf16.gmra.mrb[0].mxu0 %v899
        %v2280 = vpop.f32.mrb[0].mxu0
        %v2281 = vadd.f32 %v2120, %v2280
        %v2282 = vpop.f32.mrb[0].mxu0
        %v2283 = vpop.f32.mrb[0].mxu0
        %v2284 = vadd.f32 %v2123, %v2283
        %v2285 = vpop.f32.mrb[0].mxu0
        %2286 = vmatprep.mubr.bf16.mxu0 0
        %2287 = vmatmul.mubr.bf16.gmra.mrb[0].mxu0 %v908
        %v2288 = vpop.f32.mrb[0].mxu0
        %v2289 = vadd.f32 %v2128, %v2288
        %v2290 = vpop.f32.mrb[0].mxu0
        %v2291 = vpop.f32.mrb[0].mxu0
        %v2292 = vadd.f32 %v2131, %v2291
        %v2293 = vpop.f32.mrb[0].mxu0
        %2294 = vdwg.mxu0
        %v2295 = vadd.f32 %v2169, %v2172
        %v2296 = vadd.f32 %v2295, %v2177
        %v2297 = vadd.f32 %v2296, %v2180
        %v2298 = vadd.f32 %v2297, %v2185
        %v2299 = vadd.f32 %v2298, %v2188
        %v2300 = vadd.f32 %v2299, %v2193
        %v2301 = vadd.f32 %v2300, %v2196
        %v2302 = vadd.f32 %v2301, %v2201
        %v2303 = vadd.f32 %v2302, %v2204
        %v2304 = vadd.f32 %v2303, %v2209
        %v2305 = vadd.f32 %v2304, %v2212
        %v2306 = vadd.f32 %v2305, %v2217
        %v2307 = vadd.f32 %v2306, %v2220
        %v2308 = vadd.f32 %v2307, %v2225
        %v2309 = vadd.f32 %v2308, %v2228
        %v2310 = vadd.f32 %v2309, %v2233
        %v2311 = vadd.f32 %v2310, %v2236
        %v2312 = vadd.f32 %v2311, %v2241
        %v2313 = vadd.f32 %v2312, %v2244
        %v2314 = vadd.f32 %v2313, %v2249
        %v2315 = vadd.f32 %v2314, %v2252
        %v2316 = vadd.f32 %v2315, %v2257
        %v2317 = vadd.f32 %v2316, %v2260
        %v2318 = vadd.f32 %v2317, %v2265
        %v2319 = vadd.f32 %v2318, %v2268
        %v2320 = vadd.f32 %v2319, %v2273
        %v2321 = vadd.f32 %v2320, %v2276
        %v2322 = vadd.f32 %v2321, %v2281
        %v2323 = vadd.f32 %v2322, %v2284
        %v2324 = vadd.f32 %v2323, %v2289
        %v2325 = vadd.f32 %v2324, %v2292
        %v2326 = vrot.slane %v2325, 4
        %v2327 = vadd.f32 %v2325, %v2326
        %v2328 = vrot.slane %v2327, 2
        %v2329 = vadd.f32 %v2327, %v2328
        %v2330 = vrot.slane %v2329, 1
        %v2331 = vadd.f32 %v2329, %v2330
        %v2332 = vmul.f32 %v2169, %v2169
        %v2333 = vmul.f32 %v2172, %v2172
        %v2334 = vmul.f32 %v2177, %v2177
        %v2335 = vmul.f32 %v2180, %v2180
        %v2336 = vmul.f32 %v2185, %v2185
        %v2337 = vmul.f32 %v2188, %v2188
        %v2338 = vmul.f32 %v2193, %v2193
        %v2339 = vmul.f32 %v2196, %v2196
        %v2340 = vmul.f32 %v2201, %v2201
        %v2341 = vmul.f32 %v2204, %v2204
        %v2342 = vmul.f32 %v2209, %v2209
        %v2343 = vmul.f32 %v2212, %v2212
        %v2344 = vmul.f32 %v2217, %v2217
        %v2345 = vmul.f32 %v2220, %v2220
        %v2346 = vmul.f32 %v2225, %v2225
        %v2347 = vmul.f32 %v2228, %v2228
        %v2348 = vmul.f32 %v2233, %v2233
        %v2349 = vmul.f32 %v2236, %v2236
        %v2350 = vmul.f32 %v2241, %v2241
        %v2351 = vmul.f32 %v2244, %v2244
        %v2352 = vmul.f32 %v2249, %v2249
        %v2353 = vmul.f32 %v2252, %v2252
        %v2354 = vmul.f32 %v2257, %v2257
        %v2355 = vmul.f32 %v2260, %v2260
        %v2356 = vmul.f32 %v2265, %v2265
        %v2357 = vmul.f32 %v2268, %v2268
        %v2358 = vmul.f32 %v2273, %v2273
        %v2359 = vmul.f32 %v2276, %v2276
        %v2360 = vmul.f32 %v2281, %v2281
        %v2361 = vmul.f32 %v2284, %v2284
        %v2362 = vmul.f32 %v2289, %v2289
        %v2363 = vmul.f32 %v2292, %v2292
        %v2364 = vadd.f32 %v2332, %v2333
        %v2365 = vadd.f32 %v2364, %v2334
        %v2366 = vadd.f32 %v2365, %v2335
        %v2367 = vadd.f32 %v2366, %v2336
        %v2368 = vadd.f32 %v2367, %v2337
        %v2369 = vadd.f32 %v2368, %v2338
        %v2370 = vadd.f32 %v2369, %v2339
        %v2371 = vadd.f32 %v2370, %v2340
        %v2372 = vadd.f32 %v2371, %v2341
        %v2373 = vadd.f32 %v2372, %v2342
        %v2374 = vadd.f32 %v2373, %v2343
        %v2375 = vadd.f32 %v2374, %v2344
        %v2376 = vadd.f32 %v2375, %v2345
        %v2377 = vadd.f32 %v2376, %v2346
        %v2378 = vadd.f32 %v2377, %v2347
        %v2379 = vadd.f32 %v2378, %v2348
        %v2380 = vadd.f32 %v2379, %v2349
        %v2381 = vadd.f32 %v2380, %v2350
        %v2382 = vadd.f32 %v2381, %v2351
        %v2383 = vadd.f32 %v2382, %v2352
        %v2384 = vadd.f32 %v2383, %v2353
        %v2385 = vadd.f32 %v2384, %v2354
        %v2386 = vadd.f32 %v2385, %v2355
        %v2387 = vadd.f32 %v2386, %v2356
        %v2388 = vadd.f32 %v2387, %v2357
        %v2389 = vadd.f32 %v2388, %v2358
        %v2390 = vadd.f32 %v2389, %v2359
        %v2391 = vadd.f32 %v2390, %v2360
        %v2392 = vadd.f32 %v2391, %v2361
        %v2393 = vadd.f32 %v2392, %v2362
        %v2394 = vadd.f32 %v2393, %v2363
        %v2395 = vrot.slane %v2394, 4
        %v2396 = vadd.f32 %v2394, %v2395
        %v2397 = vrot.slane %v2396, 2
        %v2398 = vadd.f32 %v2396, %v2397
        %v2399 = vrot.slane %v2398, 1
        %v2400 = vadd.f32 %v2398, %v2399
        %vm2401 = vcmask 1040384
        %v2402 = vsel %vm2401, %v2331, %v2400
        %vm2403 = vcmask 1041408
        %v2404 = vsel %vm2403, %v2402, 0.0
        %2405 = vst [vmem:[%s352] sm:$0xff] %v2404
        %v2406 = vpack.c.bf16 %v2172, %v2169
        %v2407 = vpack.c.bf16 %v2180, %v2177
        %v2408 = vpack.c.bf16 %v2188, %v2185
        %v2409 = vpack.c.bf16 %v2196, %v2193
        %v2410 = vpack.c.bf16 %v2204, %v2201
        %v2411 = vpack.c.bf16 %v2212, %v2209
        %v2412 = vpack.c.bf16 %v2220, %v2217
        %v2413 = vpack.c.bf16 %v2228, %v2225
        %v2414 = vpack.c.bf16 %v2236, %v2233
        %v2415 = vpack.c.bf16 %v2244, %v2241
        %v2416 = vpack.c.bf16 %v2252, %v2249
        %v2417 = vpack.c.bf16 %v2260, %v2257
        %v2418 = vpack.c.bf16 %v2268, %v2265
        %v2419 = vpack.c.bf16 %v2276, %v2273
        %v2420 = vpack.c.bf16 %v2284, %v2281
        %v2421 = vpack.c.bf16 %v2292, %v2289
        %v2438 = vunpack.c.l.b16 %v2406
        %v2439 = vunpack.c.h.b16 %v2406
        %v2440 = vunpack.c.l.b16 %v2407
        %v2441 = vunpack.c.h.b16 %v2407
        %v2442 = vunpack.c.l.b16 %v2408
        %v2443 = vunpack.c.h.b16 %v2408
        %v2444 = vunpack.c.l.b16 %v2409
        %v2445 = vunpack.c.h.b16 %v2409
        %v2446 = vunpack.c.l.b16 %v2410
        %v2447 = vunpack.c.h.b16 %v2410
        %v2448 = vunpack.c.l.b16 %v2411
        %v2449 = vunpack.c.h.b16 %v2411
        %v2450 = vunpack.c.l.b16 %v2412
        %v2451 = vunpack.c.h.b16 %v2412
        %v2452 = vunpack.c.l.b16 %v2413
        %v2453 = vunpack.c.h.b16 %v2413
        %v2454 = vunpack.c.l.b16 %v2414
        %v2455 = vunpack.c.h.b16 %v2414
        %v2456 = vunpack.c.l.b16 %v2415
        %v2457 = vunpack.c.h.b16 %v2415
        %v2458 = vunpack.c.l.b16 %v2416
        %v2459 = vunpack.c.h.b16 %v2416
        %v2460 = vunpack.c.l.b16 %v2417
        %v2461 = vunpack.c.h.b16 %v2417
        %v2462 = vunpack.c.l.b16 %v2418
        %v2463 = vunpack.c.h.b16 %v2418
        %v2464 = vunpack.c.l.b16 %v2419
        %v2465 = vunpack.c.h.b16 %v2419
        %v2466 = vunpack.c.l.b16 %v2420
        %v2467 = vunpack.c.h.b16 %v2420
        %v2468 = vunpack.c.l.b16 %v2421
        %v2469 = vunpack.c.h.b16 %v2421
        %v2470 = vpack.c.b16 %v2438, %v2438
        %v2471 = vpack.c.b16 %v2439, %v2439
        %v2472 = vpack.c.b16 %v2440, %v2440
        %v2473 = vpack.c.b16 %v2441, %v2441
        %v2474 = vpack.c.b16 %v2442, %v2442
        %v2475 = vpack.c.b16 %v2443, %v2443
        %v2476 = vpack.c.b16 %v2444, %v2444
        %v2477 = vpack.c.b16 %v2445, %v2445
        %v2478 = vpack.c.b16 %v2446, %v2446
        %v2479 = vpack.c.b16 %v2447, %v2447
        %v2480 = vpack.c.b16 %v2448, %v2448
        %v2481 = vpack.c.b16 %v2449, %v2449
        %v2482 = vpack.c.b16 %v2450, %v2450
        %v2483 = vpack.c.b16 %v2451, %v2451
        %v2484 = vpack.c.b16 %v2452, %v2452
        %v2485 = vpack.c.b16 %v2453, %v2453
        %v2486 = vpack.c.b16 %v2454, %v2454
        %v2487 = vpack.c.b16 %v2455, %v2455
        %v2488 = vpack.c.b16 %v2456, %v2456
        %v2489 = vpack.c.b16 %v2457, %v2457
        %v2490 = vpack.c.b16 %v2458, %v2458
        %v2491 = vpack.c.b16 %v2459, %v2459
        %v2492 = vpack.c.b16 %v2460, %v2460
        %v2493 = vpack.c.b16 %v2461, %v2461
        %v2494 = vpack.c.b16 %v2462, %v2462
        %v2495 = vpack.c.b16 %v2463, %v2463
        %v2496 = vpack.c.b16 %v2464, %v2464
        %v2497 = vpack.c.b16 %v2465, %v2465
        %v2498 = vpack.c.b16 %v2466, %v2466
        %v2499 = vpack.c.b16 %v2467, %v2467
        %v2500 = vpack.c.b16 %v2468, %v2468
        %v2501 = vpack.c.b16 %v2469, %v2469
        %2534 = vst [vmem:[%s345] sm:$0xf] %v2470
        %2535 = vst [vmem:[%s345 + $0x4] sm:$0xf] %v2471
        %2536 = vst [vmem:[%s345 + $0x8] sm:$0xf] %v2472
        %2537 = vst [vmem:[%s345 + $0xc] sm:$0xf] %v2473
        %2538 = vst [vmem:[%s345 + $0x10] sm:$0xf] %v2474
        %2539 = vst [vmem:[%s345 + $0x14] sm:$0xf] %v2475
        %2540 = vst [vmem:[%s345 + $0x18] sm:$0xf] %v2476
        %2541 = vst [vmem:[%s345 + $0x1c] sm:$0xf] %v2477
        %2542 = vst [vmem:[%s345 + $0x20] sm:$0xf] %v2478
        %2543 = vst [vmem:[%s345 + $0x24] sm:$0xf] %v2479
        %2544 = vst [vmem:[%s345 + $0x28] sm:$0xf] %v2480
        %2545 = vst [vmem:[%s345 + $0x2c] sm:$0xf] %v2481
        %2546 = vst [vmem:[%s345 + $0x30] sm:$0xf] %v2482
        %2547 = vst [vmem:[%s345 + $0x34] sm:$0xf] %v2483
        %2548 = vst [vmem:[%s345 + $0x38] sm:$0xf] %v2484
        %2549 = vst [vmem:[%s345 + $0x3c] sm:$0xf] %v2485
        %2550 = vst [vmem:[%s345 + $0x40] sm:$0xf] %v2486
        %2551 = vst [vmem:[%s345 + $0x44] sm:$0xf] %v2487
        %2552 = vst [vmem:[%s345 + $0x48] sm:$0xf] %v2488
        %2553 = vst [vmem:[%s345 + $0x4c] sm:$0xf] %v2489
        %2554 = vst [vmem:[%s345 + $0x50] sm:$0xf] %v2490
        %2555 = vst [vmem:[%s345 + $0x54] sm:$0xf] %v2491
        %2556 = vst [vmem:[%s345 + $0x58] sm:$0xf] %v2492
        %2557 = vst [vmem:[%s345 + $0x5c] sm:$0xf] %v2493
        %2558 = vst [vmem:[%s345 + $0x60] sm:$0xf] %v2494
        %2559 = vst [vmem:[%s345 + $0x64] sm:$0xf] %v2495
        %2560 = vst [vmem:[%s345 + $0x68] sm:$0xf] %v2496
        %2561 = vst [vmem:[%s345 + $0x6c] sm:$0xf] %v2497
        %2562 = vst [vmem:[%s345 + $0x70] sm:$0xf] %v2498
        %2563 = vst [vmem:[%s345 + $0x74] sm:$0xf] %v2499
        %2564 = vst [vmem:[%s345 + $0x78] sm:$0xf] %v2500
        %2565 = vst [vmem:[%s345 + $0x7c] sm:$0xf] %v2501
        %v2566 = vld [vmem:[#allocation9] sm:$0xf]
        %v2567 = vld [vmem:[#allocation9 + $0x4] sm:$0xf]
        %v2568 = vld [vmem:[#allocation9 + $0x8] sm:$0xf]
        %v2569 = vld [vmem:[#allocation9 + $0xc] sm:$0xf]
        %v2570 = vld [vmem:[#allocation9 + $0x10] sm:$0xf]
        %v2571 = vld [vmem:[#allocation9 + $0x14] sm:$0xf]
        %v2572 = vld [vmem:[#allocation9 + $0x18] sm:$0xf]
        %v2573 = vld [vmem:[#allocation9 + $0x1c] sm:$0xf]
        %v2574 = vld [vmem:[#allocation9 + $0x20] sm:$0xf]
        %v2575 = vld [vmem:[#allocation9 + $0x24] sm:$0xf]
        %v2576 = vld [vmem:[#allocation9 + $0x28] sm:$0xf]
        %v2577 = vld [vmem:[#allocation9 + $0x2c] sm:$0xf]
        %v2578 = vld [vmem:[#allocation9 + $0x30] sm:$0xf]
        %v2579 = vld [vmem:[#allocation9 + $0x34] sm:$0xf]
        %v2580 = vld [vmem:[#allocation9 + $0x38] sm:$0xf]
        %v2581 = vld [vmem:[#allocation9 + $0x3c] sm:$0xf]
        %v2598 = vunpack.c.l.b16 %v2566
        %v2599 = vunpack.c.l.b16 %v2567
        %v2600 = vunpack.c.l.b16 %v2568
        %v2601 = vunpack.c.l.b16 %v2569
        %v2602 = vunpack.c.l.b16 %v2570
        %v2603 = vunpack.c.l.b16 %v2571
        %v2604 = vunpack.c.l.b16 %v2572
        %v2605 = vunpack.c.l.b16 %v2573
        %v2606 = vunpack.c.l.b16 %v2574
        %v2607 = vunpack.c.l.b16 %v2575
        %v2608 = vunpack.c.l.b16 %v2576
        %v2609 = vunpack.c.l.b16 %v2577
        %v2610 = vunpack.c.l.b16 %v2578
        %v2611 = vunpack.c.l.b16 %v2579
        %v2612 = vunpack.c.l.b16 %v2580
        %v2613 = vunpack.c.l.b16 %v2581
        %v2614 = vpack.c.b16 %v2599, %v2598
        %v2615 = vpack.c.b16 %v2601, %v2600
        %v2616 = vpack.c.b16 %v2603, %v2602
        %v2617 = vpack.c.b16 %v2605, %v2604
        %v2618 = vpack.c.b16 %v2607, %v2606
        %v2619 = vpack.c.b16 %v2609, %v2608
        %v2620 = vpack.c.b16 %v2611, %v2610
        %v2621 = vpack.c.b16 %v2613, %v2612
        %2630 = vmatprep.subr.bf16.mxu0 0
        %2631 = vmatpush1.bf16.msra.mxu0 %v2614
        %2632 = vmatprep.subr.bf16.mxu0 0
        %2633 = vmatpush1.bf16.msra.mxu0 %v2615
        %2634 = vmatprep.subr.bf16.mxu0 0
        %2635 = vmatpush1.bf16.msra.mxu0 %v2616
        %2636 = vmatprep.subr.bf16.mxu0 0
        %2637 = vmatpush1.bf16.msra.mxu0 %v2617
        %2638 = vmatprep.subr.bf16.mxu0 0
        %2639 = vmatpush1.bf16.msra.mxu0 %v2618
        %2640 = vmatprep.subr.bf16.mxu0 0
        %2641 = vmatpush1.bf16.msra.mxu0 %v2619
        %2642 = vmatprep.subr.bf16.mxu0 0
        %2643 = vmatpush1.bf16.msra.mxu0 %v2620
        %2644 = vmatprep.subr.bf16.mxu0 0
        %2645 = vmatpush1.bf16.msra.mxu0 %v2621
        %2646 = vmatprep.subr.bf16.mxu0 0
        %2647 = vmatpush1.bf16.msra.mxu0 0
        %2648 = vmatprep.subr.bf16.mxu0 0
        %2649 = vmatpush1.bf16.msra.mxu0 0
        %2650 = vmatprep.subr.bf16.mxu0 0
        %2651 = vmatpush1.bf16.msra.mxu0 0
        %2652 = vmatprep.subr.bf16.mxu0 0
        %2653 = vmatpush1.bf16.msra.mxu0 0
        %2654 = vmatprep.subr.bf16.mxu0 0
        %2655 = vmatpush1.bf16.msra.mxu0 0
        %2656 = vmatprep.subr.bf16.mxu0 0
        %2657 = vmatpush1.bf16.msra.mxu0 0
        %2658 = vmatprep.subr.bf16.mxu0 0
        %2659 = vmatpush1.bf16.msra.mxu0 0
        %2660 = vmatprep.subr.bf16.mxu0 0
        %2661 = vmatpush1.bf16.msra.mxu0 0
        %2662 = vmatprep.mubr.bf16.mxu0 0
        %2663 = vmatmul.mubr.bf16.gmra.mrb[0].mxu0 %v769
        %v2664 = vpop.f32.mrb[0].mxu0
        %v2665 = vadd.f32 0.0, %v2664
        %v2666 = vpop.f32.mrb[0].mxu0
        %v2667 = vpop.f32.mrb[0].mxu0
        %v2668 = vadd.f32 0.0, %v2667
        %v2669 = vpop.f32.mrb[0].mxu0
        %2670 = vmatprep.mubr.bf16.mxu0 0
        %2671 = vmatmul.mubr.bf16.gmra.mrb[0].mxu0 %v778
        %v2672 = vpop.f32.mrb[0].mxu0
        %v2673 = vadd.f32 0.0, %v2672
        %v2674 = vpop.f32.mrb[0].mxu0
        %v2675 = vpop.f32.mrb[0].mxu0
        %v2676 = vadd.f32 0.0, %v2675
        %v2677 = vpop.f32.mrb[0].mxu0
        %2678 = vmatprep.mubr.bf16.mxu0 0
        %2679 = vmatmul.mubr.bf16.gmra.mrb[0].mxu0 %v787
        %v2680 = vpop.f32.mrb[0].mxu0
        %v2681 = vadd.f32 0.0, %v2680
        %v2682 = vpop.f32.mrb[0].mxu0
        %v2683 = vpop.f32.mrb[0].mxu0
        %v2684 = vadd.f32 0.0, %v2683
        %v2685 = vpop.f32.mrb[0].mxu0
        %2686 = vmatprep.mubr.bf16.mxu0 0
        %2687 = vmatmul.mubr.bf16.gmra.mrb[0].mxu0 %v796
        %v2688 = vpop.f32.mrb[0].mxu0
        %v2689 = vadd.f32 0.0, %v2688
        %v2690 = vpop.f32.mrb[0].mxu0
        %v2691 = vpop.f32.mrb[0].mxu0
        %v2692 = vadd.f32 0.0, %v2691
        %v2693 = vpop.f32.mrb[0].mxu0
        %2694 = vmatprep.mubr.bf16.mxu0 0
        %2695 = vmatmul.mubr.bf16.gmra.mrb[0].mxu0 %v805
        %v2696 = vpop.f32.mrb[0].mxu0
        %v2697 = vadd.f32 0.0, %v2696
        %v2698 = vpop.f32.mrb[0].mxu0
        %v2699 = vpop.f32.mrb[0].mxu0
        %v2700 = vadd.f32 0.0, %v2699
        %v2701 = vpop.f32.mrb[0].mxu0
        %2702 = vmatprep.mubr.bf16.mxu0 0
        %2703 = vmatmul.mubr.bf16.gmra.mrb[0].mxu0 %v814
        %v2704 = vpop.f32.mrb[0].mxu0
        %v2705 = vadd.f32 0.0, %v2704
        %v2706 = vpop.f32.mrb[0].mxu0
        %v2707 = vpop.f32.mrb[0].mxu0
        %v2708 = vadd.f32 0.0, %v2707
        %v2709 = vpop.f32.mrb[0].mxu0
        %2710 = vmatprep.mubr.bf16.mxu0 0
        %2711 = vmatmul.mubr.bf16.gmra.mrb[0].mxu0 %v823
        %v2712 = vpop.f32.mrb[0].mxu0
        %v2713 = vadd.f32 0.0, %v2712
        %v2714 = vpop.f32.mrb[0].mxu0
        %v2715 = vpop.f32.mrb[0].mxu0
        %v2716 = vadd.f32 0.0, %v2715
        %v2717 = vpop.f32.mrb[0].mxu0
        %2718 = vmatprep.mubr.bf16.mxu0 0
        %2719 = vmatmul.mubr.bf16.gmra.mrb[0].mxu0 %v832
        %v2720 = vpop.f32.mrb[0].mxu0
        %v2721 = vadd.f32 0.0, %v2720
        %v2722 = vpop.f32.mrb[0].mxu0
        %v2723 = vpop.f32.mrb[0].mxu0
        %v2724 = vadd.f32 0.0, %v2723
        %v2725 = vpop.f32.mrb[0].mxu0
        %2726 = vmatprep.mubr.bf16.mxu0 0
        %2727 = vmatmul.mubr.bf16.gmra.mrb[0].mxu0 %v841
        %v2728 = vpop.f32.mrb[0].mxu0
        %v2729 = vadd.f32 0.0, %v2728
        %v2730 = vpop.f32.mrb[0].mxu0
        %v2731 = vpop.f32.mrb[0].mxu0
        %v2732 = vadd.f32 0.0, %v2731
        %v2733 = vpop.f32.mrb[0].mxu0
        %2734 = vmatprep.mubr.bf16.mxu0 0
        %2735 = vmatmul.mubr.bf16.gmra.mrb[0].mxu0 %v850
        %v2736 = vpop.f32.mrb[0].mxu0
        %v2737 = vadd.f32 0.0, %v2736
        %v2738 = vpop.f32.mrb[0].mxu0
        %v2739 = vpop.f32.mrb[0].mxu0
        %v2740 = vadd.f32 0.0, %v2739
        %v2741 = vpop.f32.mrb[0].mxu0
        %2742 = vmatprep.mubr.bf16.mxu0 0
        %2743 = vmatmul.mubr.bf16.gmra.mrb[0].mxu0 %v859
        %v2744 = vpop.f32.mrb[0].mxu0
        %v2745 = vadd.f32 0.0, %v2744
        %v2746 = vpop.f32.mrb[0].mxu0
        %v2747 = vpop.f32.mrb[0].mxu0
        %v2748 = vadd.f32 0.0, %v2747
        %v2749 = vpop.f32.mrb[0].mxu0
        %2750 = vmatprep.mubr.bf16.mxu0 0
        %2751 = vmatmul.mubr.bf16.gmra.mrb[0].mxu0 %v868
        %v2752 = vpop.f32.mrb[0].mxu0
        %v2753 = vadd.f32 0.0, %v2752
        %v2754 = vpop.f32.mrb[0].mxu0
        %v2755 = vpop.f32.mrb[0].mxu0
        %v2756 = vadd.f32 0.0, %v2755
        %v2757 = vpop.f32.mrb[0].mxu0
        %2758 = vmatprep.mubr.bf16.mxu0 0
        %2759 = vmatmul.mubr.bf16.gmra.mrb[0].mxu0 %v877
        %v2760 = vpop.f32.mrb[0].mxu0
        %v2761 = vadd.f32 0.0, %v2760
        %v2762 = vpop.f32.mrb[0].mxu0
        %v2763 = vpop.f32.mrb[0].mxu0
        %v2764 = vadd.f32 0.0, %v2763
        %v2765 = vpop.f32.mrb[0].mxu0
        %2766 = vmatprep.mubr.bf16.mxu0 0
        %2767 = vmatmul.mubr.bf16.gmra.mrb[0].mxu0 %v886
        %v2768 = vpop.f32.mrb[0].mxu0
        %v2769 = vadd.f32 0.0, %v2768
        %v2770 = vpop.f32.mrb[0].mxu0
        %v2771 = vpop.f32.mrb[0].mxu0
        %v2772 = vadd.f32 0.0, %v2771
        %v2773 = vpop.f32.mrb[0].mxu0
        %2774 = vmatprep.mubr.bf16.mxu0 0
        %2775 = vmatmul.mubr.bf16.gmra.mrb[0].mxu0 %v895
        %v2776 = vpop.f32.mrb[0].mxu0
        %v2777 = vadd.f32 0.0, %v2776
        %v2778 = vpop.f32.mrb[0].mxu0
        %v2779 = vpop.f32.mrb[0].mxu0
        %v2780 = vadd.f32 0.0, %v2779
        %v2781 = vpop.f32.mrb[0].mxu0
        %2782 = vmatprep.mubr.bf16.mxu0 0
        %2783 = vmatmul.mubr.bf16.gmra.mrb[0].mxu0 %v904
        %v2784 = vpop.f32.mrb[0].mxu0
        %v2785 = vadd.f32 0.0, %v2784
        %v2786 = vpop.f32.mrb[0].mxu0
        %v2787 = vpop.f32.mrb[0].mxu0
        %v2788 = vadd.f32 0.0, %v2787
        %v2789 = vpop.f32.mrb[0].mxu0
        %2790 = vdwg.mxu0
        %v2791 = vadd.f32 %v2665, %v2668
        %v2792 = vadd.f32 %v2791, %v2673
        %v2793 = vadd.f32 %v2792, %v2676
        %v2794 = vadd.f32 %v2793, %v2681
        %v2795 = vadd.f32 %v2794, %v2684
        %v2796 = vadd.f32 %v2795, %v2689
        %v2797 = vadd.f32 %v2796, %v2692
        %v2798 = vadd.f32 %v2797, %v2697
        %v2799 = vadd.f32 %v2798, %v2700
        %v2800 = vadd.f32 %v2799, %v2705
        %v2801 = vadd.f32 %v2800, %v2708
        %v2802 = vadd.f32 %v2801, %v2713
        %v2803 = vadd.f32 %v2802, %v2716
        %v2804 = vadd.f32 %v2803, %v2721
        %v2805 = vadd.f32 %v2804, %v2724
        %v2806 = vadd.f32 %v2805, %v2729
        %v2807 = vadd.f32 %v2806, %v2732
        %v2808 = vadd.f32 %v2807, %v2737
        %v2809 = vadd.f32 %v2808, %v2740
        %v2810 = vadd.f32 %v2809, %v2745
        %v2811 = vadd.f32 %v2810, %v2748
        %v2812 = vadd.f32 %v2811, %v2753
        %v2813 = vadd.f32 %v2812, %v2756
        %v2814 = vadd.f32 %v2813, %v2761
        %v2815 = vadd.f32 %v2814, %v2764
        %v2816 = vadd.f32 %v2815, %v2769
        %v2817 = vadd.f32 %v2816, %v2772
        %v2818 = vadd.f32 %v2817, %v2777
        %v2819 = vadd.f32 %v2818, %v2780
        %v2820 = vadd.f32 %v2819, %v2785
        %v2821 = vadd.f32 %v2820, %v2788
        %v2822 = vrot.slane %v2821, 4
        %v2823 = vadd.f32 %v2821, %v2822
        %v2824 = vrot.slane %v2823, 2
        %v2825 = vadd.f32 %v2823, %v2824
        %v2826 = vrot.slane %v2825, 1
        %v2827 = vadd.f32 %v2825, %v2826
        %v2828 = vmul.f32 %v2665, %v2665
        %v2829 = vmul.f32 %v2668, %v2668
        %v2830 = vmul.f32 %v2673, %v2673
        %v2831 = vmul.f32 %v2676, %v2676
        %v2832 = vmul.f32 %v2681, %v2681
        %v2833 = vmul.f32 %v2684, %v2684
        %v2834 = vmul.f32 %v2689, %v2689
        %v2835 = vmul.f32 %v2692, %v2692
        %v2836 = vmul.f32 %v2697, %v2697
        %v2837 = vmul.f32 %v2700, %v2700
        %v2838 = vmul.f32 %v2705, %v2705
        %v2839 = vmul.f32 %v2708, %v2708
        %v2840 = vmul.f32 %v2713, %v2713
        %v2841 = vmul.f32 %v2716, %v2716
        %v2842 = vmul.f32 %v2721, %v2721
        %v2843 = vmul.f32 %v2724, %v2724
        %v2844 = vmul.f32 %v2729, %v2729
        %v2845 = vmul.f32 %v2732, %v2732
        %v2846 = vmul.f32 %v2737, %v2737
        %v2847 = vmul.f32 %v2740, %v2740
        %v2848 = vmul.f32 %v2745, %v2745
        %v2849 = vmul.f32 %v2748, %v2748
        %v2850 = vmul.f32 %v2753, %v2753
        %v2851 = vmul.f32 %v2756, %v2756
        %v2852 = vmul.f32 %v2761, %v2761
        %v2853 = vmul.f32 %v2764, %v2764
        %v2854 = vmul.f32 %v2769, %v2769
        %v2855 = vmul.f32 %v2772, %v2772
        %v2856 = vmul.f32 %v2777, %v2777
        %v2857 = vmul.f32 %v2780, %v2780
        %v2858 = vmul.f32 %v2785, %v2785
        %v2859 = vmul.f32 %v2788, %v2788
        %v2860 = vadd.f32 %v2828, %v2829
        %v2861 = vadd.f32 %v2860, %v2830
        %v2862 = vadd.f32 %v2861, %v2831
        %v2863 = vadd.f32 %v2862, %v2832
        %v2864 = vadd.f32 %v2863, %v2833
        %v2865 = vadd.f32 %v2864, %v2834
        %v2866 = vadd.f32 %v2865, %v2835
        %v2867 = vadd.f32 %v2866, %v2836
        %v2868 = vadd.f32 %v2867, %v2837
        %v2869 = vadd.f32 %v2868, %v2838
        %v2870 = vadd.f32 %v2869, %v2839
        %v2871 = vadd.f32 %v2870, %v2840
        %v2872 = vadd.f32 %v2871, %v2841
        %v2873 = vadd.f32 %v2872, %v2842
        %v2874 = vadd.f32 %v2873, %v2843
        %v2875 = vadd.f32 %v2874, %v2844
        %v2876 = vadd.f32 %v2875, %v2845
        %v2877 = vadd.f32 %v2876, %v2846
        %v2878 = vadd.f32 %v2877, %v2847
        %v2879 = vadd.f32 %v2878, %v2848
        %v2880 = vadd.f32 %v2879, %v2849
        %v2881 = vadd.f32 %v2880, %v2850
        %v2882 = vadd.f32 %v2881, %v2851
        %v2883 = vadd.f32 %v2882, %v2852
        %v2884 = vadd.f32 %v2883, %v2853
        %v2885 = vadd.f32 %v2884, %v2854
        %v2886 = vadd.f32 %v2885, %v2855
        %v2887 = vadd.f32 %v2886, %v2856
        %v2888 = vadd.f32 %v2887, %v2857
        %v2889 = vadd.f32 %v2888, %v2858
        %v2890 = vadd.f32 %v2889, %v2859
        %v2891 = vrot.slane %v2890, 4
        %v2892 = vadd.f32 %v2890, %v2891
        %v2893 = vrot.slane %v2892, 2
        %v2894 = vadd.f32 %v2892, %v2893
        %v2895 = vrot.slane %v2894, 1
        %v2896 = vadd.f32 %v2894, %v2895
        %v2897 = vsel %vm2401, %v2827, %v2896
        %v2898 = vsel %vm2403, %v2897, 0.0
        %2899 = vst [vmem:[%s366] sm:$0xff] %v2898
        %2900 = vst [vmem:[%s359] sm:$0xff] %v2665
        %2901 = vst [vmem:[%s359 + $0x8] sm:$0xff] %v2668
        %2902 = vst [vmem:[%s359 + $0x10] sm:$0xff] %v2673
        %2903 = vst [vmem:[%s359 + $0x18] sm:$0xff] %v2676
        %2904 = vst [vmem:[%s359 + $0x20] sm:$0xff] %v2681
        %2905 = vst [vmem:[%s359 + $0x28] sm:$0xff] %v2684
        %2906 = vst [vmem:[%s359 + $0x30] sm:$0xff] %v2689
        %2907 = vst [vmem:[%s359 + $0x38] sm:$0xff] %v2692
        %2908 = vst [vmem:[%s359 + $0x40] sm:$0xff] %v2697
        %2909 = vst [vmem:[%s359 + $0x48] sm:$0xff] %v2700
        %2910 = vst [vmem:[%s359 + $0x50] sm:$0xff] %v2705
        %2911 = vst [vmem:[%s359 + $0x58] sm:$0xff] %v2708
        %2912 = vst [vmem:[%s359 + $0x60] sm:$0xff] %v2713
        %2913 = vst [vmem:[%s359 + $0x68] sm:$0xff] %v2716
        %2914 = vst [vmem:[%s359 + $0x70] sm:$0xff] %v2721
        %2915 = vst [vmem:[%s359 + $0x78] sm:$0xff] %v2724
        %2916 = vst [vmem:[%s359 + $0x80] sm:$0xff] %v2729
        %2917 = vst [vmem:[%s359 + $0x88] sm:$0xff] %v2732
        %2918 = vst [vmem:[%s359 + $0x90] sm:$0xff] %v2737
        %2919 = vst [vmem:[%s359 + $0x98] sm:$0xff] %v2740
        %2920 = vst [vmem:[%s359 + $0xa0] sm:$0xff] %v2745
        %2921 = vst [vmem:[%s359 + $0xa8] sm:$0xff] %v2748
        %2922 = vst [vmem:[%s359 + $0xb0] sm:$0xff] %v2753
        %2923 = vst [vmem:[%s359 + $0xb8] sm:$0xff] %v2756
        %2924 = vst [vmem:[%s359 + $0xc0] sm:$0xff] %v2761
        %2925 = vst [vmem:[%s359 + $0xc8] sm:$0xff] %v2764
        %2926 = vst [vmem:[%s359 + $0xd0] sm:$0xff] %v2769
        %2927 = vst [vmem:[%s359 + $0xd8] sm:$0xff] %v2772
        %2928 = vst [vmem:[%s359 + $0xe0] sm:$0xff] %v2777
        %2929 = vst [vmem:[%s359 + $0xe8] sm:$0xff] %v2780
        %2930 = vst [vmem:[%s359 + $0xf0] sm:$0xff] %v2785
        %2931 = vst [vmem:[%s359 + $0xf8] sm:$0xff] %v2788
        %s2932 = sand.u32 %s130, 1
        %s2933 = scalar_lea.sflag [#allocation5], %s2932
        %s2934 = sand.u32 %s130, 1
        %s2935 = smul.addr %s2934, 128
        %s2936 = scalar_lea.vmem [#allocation11], %s2935
        %s2937 = sand.u32 %s33, 1
        %s2938 = scalar_lea.sflag [#allocation13], %s2937
        %s2939 = sand.u32 %s156, 1
        %s2940 = smul.addr %s2939, 8
        %s2941 = scalar_lea.vmem [#allocation12], %s2940
        %s2942 = sand.u32 %s33, 1
        %s2943 = scalar_lea.sflag [#allocation13], %s2942
        %s2944 = sand.u32 %s182, 1
        %s2945 = smul.addr %s2944, 256
        %s2946 = scalar_lea.vmem [#allocation14], %s2945
        %s2947 = sand.u32 %s208, 1
        %s2948 = scalar_lea.sflag [#allocation16], %s2947
        %s2949 = sand.u32 %s208, 1
        %s2950 = smul.addr %s2949, 8
        %s2951 = scalar_lea.vmem [#allocation15], %s2950
        // Predicated region
        $region53: #{tpu_custom_call.1} parent=35 // pred_check
          %p2952 = pneg %p140
        $region54: #{tpu_custom_call.1} parent=35 // pred_check_branch
          %2954 = sbr.rel (%p2952) target = $region56
        $region55: #{tpu_custom_call.1} parent=35 // pred_region
          %s2956 = ssub.s32 2048, 2048
          %2957 = vsyncadd %s2933, %s2956
          %s2958 = smul.addr %s33, 32
          %s2959 = smul.addr %s2958, 64
          %s2960 = scalar_lea.hbm %s4, %s2959
          %s2961 = sshll.u32 %s2936, 4
          %s2962 = int_to_ptr.vmem [resolvable:$true] %s2961
          %2967 = dma.vmem_to_hbm [thread:$0]  %s2962, 2048, %s2960, %s2933, 64, 64, 4
        $region56: #{tpu_custom_call.1} parent=35 // pred_fallthru
          _
        // Predicated region
        $region57: #{tpu_custom_call.1} parent=35 // pred_check
          %p2968 = pneg %p166
        $region58: #{tpu_custom_call.1} parent=35 // pred_check_branch
          %2970 = sbr.rel (%p2968) target = $region60
        $region59: #{tpu_custom_call.1} parent=35 // pred_region
          %s2972 = ssub.s32 128, 128
          %2973 = vsyncadd %s2938, %s2972
          %s2974 = smul.addr %s33, 128
          %s2975 = scalar_lea.hbm %s5, %s2974
          %s2977 = sshll.u32 %s2941, 4
          %s2978 = int_to_ptr.vmem [resolvable:$true] %s2977
          %2980 = dma.vmem_to_hbm [thread:$0]  %s2978, 128, %s2975, %s2938
        $region60: #{tpu_custom_call.1} parent=35 // pred_fallthru
          _
        // Predicated region
        $region61: #{tpu_custom_call.1} parent=35 // pred_check
          %p2981 = pneg %p192
        $region62: #{tpu_custom_call.1} parent=35 // pred_check_branch
          %2983 = sbr.rel (%p2981) target = $region64
        $region63: #{tpu_custom_call.1} parent=35 // pred_region
          %s2985 = ssub.s32 4096, 4096
          %2986 = vsyncadd %s2943, %s2985
          %s2987 = smul.addr %s33, 32
          %s2988 = smul.addr %s2987, 128
          %s2989 = scalar_lea.hbm %s6, %s2988
          %s2990 = sshll.u32 %s2946, 4
          %s2991 = int_to_ptr.vmem [resolvable:$true] %s2990
          %2996 = dma.vmem_to_hbm [thread:$0]  %s2991, 4096, %s2989, %s2943, 128, 128, 8
        $region64: #{tpu_custom_call.1} parent=35 // pred_fallthru
          _
        // Predicated region
        $region65: #{tpu_custom_call.1} parent=35 // pred_check
          %p2997 = pneg %p218
        $region66: #{tpu_custom_call.1} parent=35 // pred_check_branch
          %2999 = sbr.rel (%p2997) target = $region68
        $region67: #{tpu_custom_call.1} parent=35 // pred_region
          %s3001 = ssub.s32 128, 128
          %3002 = vsyncadd %s2948, %s3001
          %s3003 = smul.addr %s33, 128
          %s3004 = scalar_lea.hbm %s7, %s3003
          %s3006 = sshll.u32 %s2951, 4
          %s3007 = int_to_ptr.vmem [resolvable:$true] %s3006
          %3009 = dma.vmem_to_hbm [thread:$0]  %s3007, 128, %s3004, %s2948
        $region68: #{tpu_custom_call.1} parent=35 // pred_fallthru
          _
      $region36: #{tpu_custom_call.1} parent=5 // pred_fallthru
        _
      %p3010 = scmp.le.s32.totalorder 2, %s28
      // Predicated region
      $region69: #{tpu_custom_call.1} parent=5 // pred_check
        %p3011 = pneg %p3010
      $region70: #{tpu_custom_call.1} parent=5 // pred_check_branch
        %3013 = sbr.rel (%p3011) target = $region72
      $region71: #{tpu_custom_call.1} parent=5 // pred_region
        %s3014 = ssub.s32 %s28, 2
        // Predicated region
        $region73: #{tpu_custom_call.1} parent=71 // pred_check
          %p3015 = pneg %p146
        $region74: #{tpu_custom_call.1} parent=71 // pred_check_branch
          %3017 = sbr.rel (%p3015) target = $region76
        $region75: #{tpu_custom_call.1} parent=71 // pred_region
          %s3018 = sand.u32 %s131, 1
          %s3019 = scalar_lea.sflag [#allocation5], %s3018
          %s3020 = sand.u32 %s131, 1
          %s3021 = smul.addr %s3020, 128
          %s3022 = scalar_lea.vmem [#allocation11], %s3021
          %3023 = dma.done %s3019, 2048
        $region76: #{tpu_custom_call.1} parent=71 // pred_fallthru
          _
        // Predicated region
        $region77: #{tpu_custom_call.1} parent=71 // pred_check
          %p3024 = pneg %p172
        $region78: #{tpu_custom_call.1} parent=71 // pred_check_branch
          %3026 = sbr.rel (%p3024) target = $region80
        $region79: #{tpu_custom_call.1} parent=71 // pred_region
          %s3027 = sand.u32 %s34, 1
          %s3028 = scalar_lea.sflag [#allocation13], %s3027
          %s3029 = sand.u32 %s157, 1
          %s3030 = smul.addr %s3029, 8
          %s3031 = scalar_lea.vmem [#allocation12], %s3030
          %3032 = dma.done %s3028, 128
        $region80: #{tpu_custom_call.1} parent=71 // pred_fallthru
          _
        // Predicated region
        $region81: #{tpu_custom_call.1} parent=71 // pred_check
          %p3033 = pneg %p198
        $region82: #{tpu_custom_call.1} parent=71 // pred_check_branch
          %3035 = sbr.rel (%p3033) target = $region84
        $region83: #{tpu_custom_call.1} parent=71 // pred_region
          %s3036 = sand.u32 %s34, 1
          %s3037 = scalar_lea.sflag [#allocation13], %s3036
          %s3038 = sand.u32 %s183, 1
          %s3039 = smul.addr %s3038, 256
          %s3040 = scalar_lea.vmem [#allocation14], %s3039
          %3041 = dma.done %s3037, 4096
        $region84: #{tpu_custom_call.1} parent=71 // pred_fallthru
          _
        // Predicated region
        $region85: #{tpu_custom_call.1} parent=71 // pred_check
          %p3042 = pneg %p224
        $region86: #{tpu_custom_call.1} parent=71 // pred_check_branch
          %3044 = sbr.rel (%p3042) target = $region88
        $region87: #{tpu_custom_call.1} parent=71 // pred_region
          %s3045 = sand.u32 %s209, 1
          %s3046 = scalar_lea.sflag [#allocation16], %s3045
          %s3047 = sand.u32 %s209, 1
          %s3048 = smul.addr %s3047, 8
          %s3049 = scalar_lea.vmem [#allocation15], %s3048
          %3050 = dma.done %s3046, 128
        $region88: #{tpu_custom_call.1} parent=71 // pred_fallthru
          _
      $region72: #{tpu_custom_call.1} parent=5 // pred_fallthru
        _
    $region6: #{tpu_custom_call.1} parent=1 // loop_footer
      %s32 = sadd.s32 1, %s28
    $region7: #{tpu_custom_call.1} parent=1 // loop_footer_branch
      %27 = sbr.rel target = $region3
    $region8: #{tpu_custom_call.1} parent=1 // loop_exit
      _
    %3051 = vsyncpa [#allocation4], 1
    %s3052 = scalar_lea.sflag [#allocation4], 1
    %3053 = vsyncpa %s3052, 1
    %3054 = vsyncpa [#allocation7], 1
    %3055 = vsyncpa [#allocation10], 1
    %3056 = vsyncpa [#allocation5], 1
    %s3057 = scalar_lea.sflag [#allocation5], 1
    %3058 = vsyncpa %s3057, 1
    %3059 = vsyncpa [#allocation13], 1
    %s3060 = scalar_lea.sflag [#allocation13], 1
    %3061 = vsyncpa %s3060, 1
    %3062 = vsyncpa [#allocation16], 1
    %s3063 = scalar_lea.sflag [#allocation16], 1
    %3064 = vsyncpa %s3063, 1

</llo_original>
